<compile_context>
chip_gen: v7x
topology: tpu7x:2x2x1
jax: 0.10.0
libtpu: 0.0.40
codegen_flags: <defaults>
</compile_context>

<pallas_src>
import jax
import jax.numpy as jnp
from jax.experimental import pallas as pl
from jax.experimental.pallas import tpu as pltpu

# ----------------- configuration (small synthetic ViT) -----------------
BATCH = 2
IN_CHANS = 3
IMG = 16
PATCH = 8
EMBED_DIM = 48
NUM_HEADS = 12                    # module hardcodes num_heads = 12
HEAD_DIM = EMBED_DIM // NUM_HEADS
DEPTH = 2
MLP_HIDDEN = 4 * EMBED_DIM
NUM_PATCHES = (IMG // PATCH) ** 2
SEQ = NUM_PATCHES + 1             # +1 cls token
PATCH_DIM = IN_CHANS * PATCH * PATCH
HS = NUM_HEADS * SEQ              # packed head*seq lane width for attn maps
LN_EPS = 1e-6
SCALE = HEAD_DIM ** -0.5
_SQRT1_2 = 0.7071067811865476


# --------------------------- in-kernel helpers ---------------------------
def _ln(x, g, b):
    """LayerNorm over the last axis. x:(R,D) f32, g/b:(1,D)."""
    mean = jnp.mean(x, axis=-1, keepdims=True)
    c = x - mean
    var = jnp.mean(c * c, axis=-1, keepdims=True)
    return c * jax.lax.rsqrt(var + LN_EPS) * g + b


def _erf(x):
    # Abramowitz & Stegun 7.1.26 polynomial approximation, |error| < 1.5e-7.
    sgn = jnp.where(x >= 0.0, 1.0, -1.0)
    ax = x * sgn
    t = 1.0 / (1.0 + 0.3275911 * ax)
    poly = t * (0.254829592 + t * (-0.284496736 + t * (1.421413741
             + t * (-1.453152027 + t * 1.061405429))))
    return sgn * (1.0 - poly * jnp.exp(-ax * ax))


def _gelu_exact(x):
    # Exact (erf-based) GELU, matching torch.nn.GELU / timm's ViT default.
    return 0.5 * x * (1.0 + _erf(x * _SQRT1_2))


# ------------------------------- kernel ----------------------------------
def _vit_kernel(patches_ref, pw_ref, pb_ref, cls_ref, pos_ref, npg_ref, npb_ref,
                rep_ref, maskvd_ref, blocksum_ref,
                ln1_g_ref, ln1_b_ref,
                q_w_ref, q_b_ref, k_w_ref, k_b_ref, v_w_ref, v_b_ref,
                proj_w_ref, proj_b_ref,
                ln2_g_ref, ln2_b_ref,
                fc1_w_ref, fc1_b_ref, fc2_w_ref, fc2_b_ref,
                x0_ref, hs_ref, attn_ref,
                x_scr):
    """grid = (batch, depth).  One invocation = one transformer block for one
    batch element; running activations stay in the f32 VMEM scratch.  The
    embed stage runs fused inside the d == 0 branch."""
    d = pl.program_id(1)

    # ---------------- fused embed (only at the first depth step) ----------------
    @pl.when(d == 0)
    def _():
        pe = jnp.dot(patches_ref[...], pw_ref[...],
                     preferred_element_type=jnp.float32) + pb_ref[...]   # (NP, D)
        x_scr[0:1, :] = cls_ref[...]
        x_scr[1:SEQ, :] = pe
        x0 = _ln(x_scr[...] + pos_ref[...], npg_ref[...], npb_ref[...])  # (SEQ, D)
        x_scr[...] = x0
        x0_ref[...] = x0.astype(x0_ref.dtype)

    x = x_scr[...]                                                       # (SEQ, D)

    # ---------------- attention branch (block-diagonal packed heads) ----------------
    h = _ln(x, ln1_g_ref[d], ln1_b_ref[d])
    q = (jnp.dot(h, q_w_ref[d], preferred_element_type=jnp.float32)
         + q_b_ref[d]) * SCALE                                           # (SEQ, D)
    k = jnp.dot(h, k_w_ref[d], preferred_element_type=jnp.float32) + k_b_ref[d]
    v = jnp.dot(h, v_w_ref[d], preferred_element_type=jnp.float32) + v_b_ref[d]

    rep = rep_ref[...]            # (HS, SEQ): row h*SEQ+j selects seq position j
    mask = maskvd_ref[...]        # (HS, D):   row h*SEQ+j keeps only head-h lanes
    k_blk = jnp.dot(rep, k, preferred_element_type=jnp.float32) * mask   # (HS, D)
    v_blk = jnp.dot(rep, v, preferred_element_type=jnp.float32) * mask   # (HS, D)

    # Packed per-head scores: s[i, h*SEQ+j] = (q_h[i] . k_h[j]) * scale
    s = jax.lax.dot_general(q, k_blk, (((1,), (1,)), ((), ())),
                            preferred_element_type=jnp.float32)          # (SEQ, HS)
    s = s - jnp.max(s, axis=-1, keepdims=True)   # per-row shift (softmax-invariant)
    p = jnp.exp(s)
    denom = jnp.dot(p, blocksum_ref[...],
                    preferred_element_type=jnp.float32)                  # per-head sums
    attn = p / denom                              # exact divide (maps sum to 1)
    attn_ref[...] = attn.astype(attn_ref.dtype)   # single lane-dense (SEQ, HS) store

    attn_out = jnp.dot(attn, v_blk, preferred_element_type=jnp.float32)  # (SEQ, D)
    x = x + jnp.dot(attn_out, proj_w_ref[d],
                    preferred_element_type=jnp.float32) + proj_b_ref[d]

    # ------------------- MLP branch --------------------
    h2 = _ln(x, ln2_g_ref[d], ln2_b_ref[d])
    h2 = jnp.dot(h2, fc1_w_ref[d], preferred_element_type=jnp.float32) + fc1_b_ref[d]
    h2 = _gelu_exact(h2)
    h2 = jnp.dot(h2, fc2_w_ref[d], preferred_element_type=jnp.float32) + fc2_b_ref[d]
    x = x + h2

    x_scr[...] = x
    hs_ref[...] = x.astype(hs_ref.dtype)


# ------------------------------ forward ----------------------------------
def vision_tower_forward(params, images, output_hidden_states=True):
    """Mirrors VisionTower.forward: patch_embed -> _pos_embed -> norm_pre -> blocks."""
    b = images.shape[0]
    D = EMBED_DIM

    # PatchEmbed conv(kernel=stride=PATCH) == unfold (cheap XLA reshape/transpose)
    # feeding the in-kernel matmul.
    patches = images.reshape(b, IN_CHANS, IMG // PATCH, PATCH, IMG // PATCH, PATCH)
    patches = patches.transpose(0, 2, 4, 1, 3, 5).reshape(b, NUM_PATCHES, PATCH_DIM)

    # Small constant matrices for the block-diagonal attention packing.
    row = jnp.arange(HS)
    head_of_row = row // SEQ                                   # (HS,)
    rep = (jnp.mod(row, SEQ)[:, None] == jnp.arange(SEQ)[None, :]).astype(jnp.float32)
    mask_vd = (head_of_row[:, None] ==
               (jnp.arange(D) // HEAD_DIM)[None, :]).astype(jnp.float32)   # (HS, D)
    block_sum = (head_of_row[:, None] == head_of_row[None, :]).astype(jnp.float32)

    def _full(shape):
        nz = (0,) * len(shape)
        return pl.BlockSpec(shape, lambda i, dd: nz)

    bw = params["blocks"]

    x0, hs, attn_packed = pl.pallas_call(
        _vit_kernel,
        grid=(b, DEPTH),
        out_shape=(
            jax.ShapeDtypeStruct((b, SEQ, D), jnp.float32),             # embedded x0
            jax.ShapeDtypeStruct((DEPTH, b, SEQ, D), jnp.float32),      # per-block hidden
            jax.ShapeDtypeStruct((DEPTH, b, SEQ, HS), jnp.float32),     # packed attn maps
        ),
        in_specs=[
            pl.BlockSpec((None, NUM_PATCHES, PATCH_DIM), lambda i, dd: (i, 0, 0)),
            _full((PATCH_DIM, D)),            # patch_w
            _full((1, D)),                    # patch_b
            _full((1, D)),                    # cls_token
            _full((SEQ, D)),                  # pos_embed
            _full((1, D)),                    # norm_pre gamma
            _full((1, D)),                    # norm_pre beta
            _full((HS, SEQ)),                 # rep
            _full((HS, D)),                   # head mask
            _full((HS, HS)),                  # per-head block-sum
            # whole-stack VMEM-resident block weights (indexed in-kernel by d)
            _full((DEPTH, 1, D)), _full((DEPTH, 1, D)),                  # ln1
            _full((DEPTH, D, D)), _full((DEPTH, 1, D)),                  # q
            _full((DEPTH, D, D)), _full((DEPTH, 1, D)),                  # k
            _full((DEPTH, D, D)), _full((DEPTH, 1, D)),                  # v
            _full((DEPTH, D, D)), _full((DEPTH, 1, D)),                  # proj
            _full((DEPTH, 1, D)), _full((DEPTH, 1, D)),                  # ln2
            _full((DEPTH, D, MLP_HIDDEN)), _full((DEPTH, 1, MLP_HIDDEN)),  # fc1
            _full((DEPTH, MLP_HIDDEN, D)), _full((DEPTH, 1, D)),         # fc2
        ],
        out_specs=(
            pl.BlockSpec((None, SEQ, D), lambda i, dd: (i, 0, 0)),
            pl.BlockSpec((None, None, SEQ, D), lambda i, dd: (dd, i, 0, 0)),
            pl.BlockSpec((None, None, SEQ, HS), lambda i, dd: (dd, i, 0, 0)),
        ),
        scratch_shapes=[pltpu.VMEM((SEQ, D), jnp.float32)],
        compiler_params=pltpu.CompilerParams(
            dimension_semantics=("parallel", "arbitrary")),
    )(patches, params["patch_w"], params["patch_b"], params["cls_token"],
      params["pos_embed"], params["norm_pre_g"], params["norm_pre_b"],
      rep, mask_vd, block_sum,
      bw["ln1_g"], bw["ln1_b"],
      bw["q_w"], bw["q_b"], bw["k_w"], bw["k_b"], bw["v_w"], bw["v_b"],
      bw["proj_w"], bw["proj_b"],
      bw["ln2_g"], bw["ln2_b"],
      bw["fc1_w"], bw["fc1_b"], bw["fc2_w"], bw["fc2_b"])

    # Unpack lane-dense attention slabs to the hook's (B, H, SEQ, SEQ) layout
    # (free layout plumbing in the wrapper).
    attention_maps = [
        attn_packed[i].reshape(b, SEQ, NUM_HEADS, SEQ).transpose(0, 2, 1, 3)
        for i in range(DEPTH)
    ]
    hidden_states = [x0] + [hs[i] for i in range(DEPTH)]

    result = {"last_hidden_state": hidden_states[-1],
              "attention_maps": attention_maps}
    if output_hidden_states:
        result["hidden_states"] = hidden_states
    return result


# -------------------------- parameter init --------------------------------
def init_params(key):
    def nrm(k, shape, scale=0.02):
        return scale * jax.random.normal(k, shape, jnp.float32)

    keys = jax.random.split(key, 16)
    D = EMBED_DIM
    return {
        # PyTorch conv weight (E, C, p, p) flattened to (C*p*p, E)
        "patch_w": nrm(keys[0], (PATCH_DIM, D)),
        "patch_b": nrm(keys[1], (1, D)),
        "cls_token": nrm(keys[2], (1, D)),
        "pos_embed": nrm(keys[3], (SEQ, D)),
        "norm_pre_g": jnp.ones((1, D), jnp.float32),
        "norm_pre_b": jnp.zeros((1, D), jnp.float32),
        # Stacked per-block weights (DEPTH, ...); q/k/v are the fused qkv
        # weight split along its output dim (mathematically identical).
        "blocks": {
            "ln1_g": jnp.ones((DEPTH, 1, D), jnp.float32),
            "ln1_b": jnp.zeros((DEPTH, 1, D), jnp.float32),
            "q_w": nrm(keys[4], (DEPTH, D, D)),
            "q_b": nrm(keys[5], (DEPTH, 1, D)),
            "k_w": nrm(keys[6], (DEPTH, D, D)),
            "k_b": nrm(keys[7], (DEPTH, 1, D)),
            "v_w": nrm(keys[8], (DEPTH, D, D)),
            "v_b": nrm(keys[9], (DEPTH, 1, D)),
            "proj_w": nrm(keys[10], (DEPTH, D, D)),
            "proj_b": nrm(keys[11], (DEPTH, 1, D)),
            "ln2_g": jnp.ones((DEPTH, 1, D), jnp.float32),
            "ln2_b": jnp.zeros((DEPTH, 1, D), jnp.float32),
            "fc1_w": nrm(keys[12], (DEPTH, D, MLP_HIDDEN)),
            "fc1_b": nrm(keys[13], (DEPTH, 1, MLP_HIDDEN)),
            "fc2_w": nrm(keys[14], (DEPTH, MLP_HIDDEN, D)),
            "fc2_b": nrm(keys[15], (DEPTH, 1, D)),
        },
    }


# ------------------------------- main --------------------------------------
if __name__ == "__main__":
    key = jax.random.PRNGKey(0)
    pkey, ikey = jax.random.split(key)
    params = init_params(pkey)
    images = jax.random.normal(ikey, (BATCH, IN_CHANS, IMG, IMG), jnp.float32)

    fwd = jax.jit(vision_tower_forward)
    out = fwd(params, images)
    jax.block_until_ready(out)

    assert out["last_hidden_state"].shape == (BATCH, SEQ, EMBED_DIM)
    assert len(out["hidden_states"]) == DEPTH + 1
    assert out["hidden_states"][0].shape == (BATCH, SEQ, EMBED_DIM)
    assert out["attention_maps"][0].shape == (BATCH, NUM_HEADS, SEQ, SEQ)
    assert bool(jnp.isfinite(out["last_hidden_state"]).all())
    assert bool(jnp.isfinite(out["attention_maps"][-1]).all())
    # attention rows must sum to 1 (exact-divide softmax)
    row_sums = out["attention_maps"][-1].sum(-1)
    assert bool(jnp.allclose(row_sums, 1.0, atol=1e-5))
    print("KERNEL_OK")
</pallas_src>

<mosaic_0001>
module attributes {stable_mosaic.version = 11 : i64} {
  func.func @_vit_kernel(%arg0: i32, %arg1: i32, %arg2: memref<1x4x192xf32, #tpu.memory_space<vmem>>, %arg3: memref<192x48xf32, #tpu.memory_space<vmem>>, %arg4: memref<1x48xf32, #tpu.memory_space<vmem>>, %arg5: memref<1x48xf32, #tpu.memory_space<vmem>>, %arg6: memref<5x48xf32, #tpu.memory_space<vmem>>, %arg7: memref<1x48xf32, #tpu.memory_space<vmem>>, %arg8: memref<1x48xf32, #tpu.memory_space<vmem>>, %arg9: memref<60x5xf32, #tpu.memory_space<vmem>>, %arg10: memref<60x48xf32, #tpu.memory_space<vmem>>, %arg11: memref<60x60xf32, #tpu.memory_space<vmem>>, %arg12: memref<2x1x48xf32, #tpu.memory_space<vmem>>, %arg13: memref<2x1x48xf32, #tpu.memory_space<vmem>>, %arg14: memref<2x48x48xf32, #tpu.memory_space<vmem>>, %arg15: memref<2x1x48xf32, #tpu.memory_space<vmem>>, %arg16: memref<2x48x48xf32, #tpu.memory_space<vmem>>, %arg17: memref<2x1x48xf32, #tpu.memory_space<vmem>>, %arg18: memref<2x48x48xf32, #tpu.memory_space<vmem>>, %arg19: memref<2x1x48xf32, #tpu.memory_space<vmem>>, %arg20: memref<2x48x48xf32, #tpu.memory_space<vmem>>, %arg21: memref<2x1x48xf32, #tpu.memory_space<vmem>>, %arg22: memref<2x1x48xf32, #tpu.memory_space<vmem>>, %arg23: memref<2x1x48xf32, #tpu.memory_space<vmem>>, %arg24: memref<2x48x192xf32, #tpu.memory_space<vmem>>, %arg25: memref<2x1x192xf32, #tpu.memory_space<vmem>>, %arg26: memref<2x192x48xf32, #tpu.memory_space<vmem>>, %arg27: memref<2x1x48xf32, #tpu.memory_space<vmem>>, %arg28: memref<1x5x48xf32, #tpu.memory_space<vmem>>, %arg29: memref<1x1x5x48xf32, #tpu.memory_space<vmem>>, %arg30: memref<1x1x5x60xf32, #tpu.memory_space<vmem>>, %arg31: memref<5x48xf32, #tpu.memory_space<vmem>>) attributes {dimension_semantics = [#tpu.dimension_semantics<parallel>, #tpu.dimension_semantics<arbitrary>], iteration_bounds = array<i64: 2, 2>, scalar_prefetch = 0 : i64, scratch_operands = 1 : i64, tpu.core_type = #tpu.core_type<tc>, window_params = [{transform_indices = @transform_0, window_bounds = array<i64: 1, 4, 192>}, {pipeline_mode = #tpu.pipeline_mode<synchronous>, transform_indices = @transform_1, window_bounds = array<i64: 192, 48>}, {pipeline_mode = #tpu.pipeline_mode<synchronous>, transform_indices = @transform_2, window_bounds = array<i64: 1, 48>}, {pipeline_mode = #tpu.pipeline_mode<synchronous>, transform_indices = @transform_3, window_bounds = array<i64: 1, 48>}, {pipeline_mode = #tpu.pipeline_mode<synchronous>, transform_indices = @transform_4, window_bounds = array<i64: 5, 48>}, {pipeline_mode = #tpu.pipeline_mode<synchronous>, transform_indices = @transform_5, window_bounds = array<i64: 1, 48>}, {pipeline_mode = #tpu.pipeline_mode<synchronous>, transform_indices = @transform_6, window_bounds = array<i64: 1, 48>}, {pipeline_mode = #tpu.pipeline_mode<synchronous>, transform_indices = @transform_7, window_bounds = array<i64: 60, 5>}, {pipeline_mode = #tpu.pipeline_mode<synchronous>, transform_indices = @transform_8, window_bounds = array<i64: 60, 48>}, {pipeline_mode = #tpu.pipeline_mode<synchronous>, transform_indices = @transform_9, window_bounds = array<i64: 60, 60>}, {pipeline_mode = #tpu.pipeline_mode<synchronous>, transform_indices = @transform_10, window_bounds = array<i64: 2, 1, 48>}, {pipeline_mode = #tpu.pipeline_mode<synchronous>, transform_indices = @transform_11, window_bounds = array<i64: 2, 1, 48>}, {pipeline_mode = #tpu.pipeline_mode<synchronous>, transform_indices = @transform_12, window_bounds = array<i64: 2, 48, 48>}, {pipeline_mode = #tpu.pipeline_mode<synchronous>, transform_indices = @transform_13, window_bounds = array<i64: 2, 1, 48>}, {pipeline_mode = #tpu.pipeline_mode<synchronous>, transform_indices = @transform_14, window_bounds = array<i64: 2, 48, 48>}, {pipeline_mode = #tpu.pipeline_mode<synchronous>, transform_indices = @transform_15, window_bounds = array<i64: 2, 1, 48>}, {pipeline_mode = #tpu.pipeline_mode<synchronous>, transform_indices = @transform_16, window_bounds = array<i64: 2, 48, 48>}, {pipeline_mode = #tpu.pipeline_mode<synchronous>, transform_indices = @transform_17, window_bounds = array<i64: 2, 1, 48>}, {pipeline_mode = #tpu.pipeline_mode<synchronous>, transform_indices = @transform_18, window_bounds = array<i64: 2, 48, 48>}, {pipeline_mode = #tpu.pipeline_mode<synchronous>, transform_indices = @transform_19, window_bounds = array<i64: 2, 1, 48>}, {pipeline_mode = #tpu.pipeline_mode<synchronous>, transform_indices = @transform_20, window_bounds = array<i64: 2, 1, 48>}, {pipeline_mode = #tpu.pipeline_mode<synchronous>, transform_indices = @transform_21, window_bounds = array<i64: 2, 1, 48>}, {pipeline_mode = #tpu.pipeline_mode<synchronous>, transform_indices = @transform_22, window_bounds = array<i64: 2, 48, 192>}, {pipeline_mode = #tpu.pipeline_mode<synchronous>, transform_indices = @transform_23, window_bounds = array<i64: 2, 1, 192>}, {pipeline_mode = #tpu.pipeline_mode<synchronous>, transform_indices = @transform_24, window_bounds = array<i64: 2, 192, 48>}, {pipeline_mode = #tpu.pipeline_mode<synchronous>, transform_indices = @transform_25, window_bounds = array<i64: 2, 1, 48>}, {transform_indices = @transform_26, window_bounds = array<i64: 1, 5, 48>}, {transform_indices = @transform_27, window_bounds = array<i64: 1, 1, 5, 48>}, {transform_indices = @transform_28, window_bounds = array<i64: 1, 1, 5, 60>}]} {
    %c0_i32 = arith.constant 0 : i32
    %0 = arith.cmpi eq, %arg1, %c0_i32 : i32
    %1 = arith.extui %0 : i1 to i32
    %c0_i32_0 = arith.constant 0 : i32
    %2 = arith.cmpi ne, %1, %c0_i32_0 : i32
    scf.if %2 {
      %c0_88 = arith.constant 0 : index
      %c0_89 = arith.constant 0 : index
      %c0_90 = arith.constant 0 : index
      %178 = vector.load %arg2[%c0_88, %c0_89, %c0_90] : memref<1x4x192xf32, #tpu.memory_space<vmem>>, vector<1x4x192xf32>
      %179 = vector.shape_cast %178 : vector<1x4x192xf32> to vector<4x192xf32>
      %c0_91 = arith.constant 0 : index
      %c0_92 = arith.constant 0 : index
      %180 = vector.load %arg3[%c0_91, %c0_92] : memref<192x48xf32, #tpu.memory_space<vmem>>, vector<192x48xf32>
      %cst_93 = arith.constant dense<0.000000e+00> : vector<4x48xf32>
      %181 = tpu.matmul %179, %180, %cst_93 {dimension_numbers = #tpu.dot_dimension_numbers<[1], [0], [0], [1], [0, 0, 1, 1], [], []>} : vector<4x192xf32>, vector<192x48xf32>, vector<4x48xf32> -> vector<4x48xf32>
      %c0_94 = arith.constant 0 : index
      %c0_95 = arith.constant 0 : index
      %182 = vector.load %arg4[%c0_94, %c0_95] : memref<1x48xf32, #tpu.memory_space<vmem>>, vector<1x48xf32>
      %183 = vector.broadcast %182 : vector<1x48xf32> to vector<4x48xf32>
      %184 = arith.addf %181, %183 : vector<4x48xf32>
      %c0_96 = arith.constant 0 : index
      %c0_97 = arith.constant 0 : index
      %185 = vector.load %arg5[%c0_96, %c0_97] : memref<1x48xf32, #tpu.memory_space<vmem>>, vector<1x48xf32>
      %c0_98 = arith.constant 0 : index
      %c0_99 = arith.constant 0 : index
      %186 = vector.load %arg31[%c0_98, %c0_99] : memref<5x48xf32, #tpu.memory_space<vmem>>, vector<1x48xf32>
      tpu.vector_store %arg31[%c0_98, %c0_99], %185 {strides = array<i32>} : memref<5x48xf32, #tpu.memory_space<vmem>>, vector<1x48xf32>,
      %c1 = arith.constant 1 : index
      %c0_100 = arith.constant 0 : index
      %187 = vector.load %arg31[%c1, %c0_100] : memref<5x48xf32, #tpu.memory_space<vmem>>, vector<4x48xf32>
      tpu.vector_store %arg31[%c1, %c0_100], %184 {strides = array<i32>} : memref<5x48xf32, #tpu.memory_space<vmem>>, vector<4x48xf32>,
      %c0_101 = arith.constant 0 : index
      %c0_102 = arith.constant 0 : index
      %188 = vector.load %arg31[%c0_101, %c0_102] : memref<5x48xf32, #tpu.memory_space<vmem>>, vector<5x48xf32>
      %c0_103 = arith.constant 0 : index
      %c0_104 = arith.constant 0 : index
      %189 = vector.load %arg6[%c0_103, %c0_104] : memref<5x48xf32, #tpu.memory_space<vmem>>, vector<5x48xf32>
      %190 = arith.addf %188, %189 : vector<5x48xf32>
      %c0_105 = arith.constant 0 : index
      %c0_106 = arith.constant 0 : index
      %191 = vector.load %arg7[%c0_105, %c0_106] : memref<1x48xf32, #tpu.memory_space<vmem>>, vector<1x48xf32>
      %c0_107 = arith.constant 0 : index
      %c0_108 = arith.constant 0 : index
      %192 = vector.load %arg8[%c0_107, %c0_108] : memref<1x48xf32, #tpu.memory_space<vmem>>, vector<1x48xf32>
      %cst_109 = arith.constant dense<0.000000e+00> : vector<5xf32>
      %193 = vector.multi_reduction <add>, %190, %cst_109 [1] : vector<5x48xf32> to vector<5xf32>
      %194 = vector.shape_cast %193 : vector<5xf32> to vector<5x1xf32>
      %cst_110 = arith.constant 4.800000e+01 : f32
      %195 = vector.broadcast %cst_110 : f32 to vector<5x1xf32>
      %196 = arith.divf %194, %195 : vector<5x1xf32>
      %197 = vector.broadcast %196 : vector<5x1xf32> to vector<5x48xf32>
      %198 = arith.subf %190, %197 : vector<5x48xf32>
      %199 = arith.mulf %198, %198 : vector<5x48xf32>
      %cst_111 = arith.constant dense<0.000000e+00> : vector<5xf32>
      %200 = vector.multi_reduction <add>, %199, %cst_111 [1] : vector<5x48xf32> to vector<5xf32>
      %201 = vector.shape_cast %200 : vector<5xf32> to vector<5x1xf32>
      %cst_112 = arith.constant 4.800000e+01 : f32
      %202 = vector.broadcast %cst_112 : f32 to vector<5x1xf32>
      %203 = arith.divf %201, %202 : vector<5x1xf32>
      %cst_113 = arith.constant 9.99999997E-7 : f32
      %204 = vector.broadcast %cst_113 : f32 to vector<5x1xf32>
      %205 = arith.addf %203, %204 : vector<5x1xf32>
      %206 = math.rsqrt %205 : vector<5x1xf32>
      %207 = vector.broadcast %206 : vector<5x1xf32> to vector<5x48xf32>
      %208 = arith.mulf %198, %207 : vector<5x48xf32>
      %209 = vector.broadcast %191 : vector<1x48xf32> to vector<5x48xf32>
      %210 = arith.mulf %208, %209 : vector<5x48xf32>
      %211 = vector.broadcast %192 : vector<1x48xf32> to vector<5x48xf32>
      %212 = arith.addf %210, %211 : vector<5x48xf32>
      %c0_114 = arith.constant 0 : index
      %c0_115 = arith.constant 0 : index
      %213 = vector.load %arg31[%c0_114, %c0_115] : memref<5x48xf32, #tpu.memory_space<vmem>>, vector<5x48xf32>
      tpu.vector_store %arg31[%c0_114, %c0_115], %212 {strides = array<i32>} : memref<5x48xf32, #tpu.memory_space<vmem>>, vector<5x48xf32>,
      %c0_116 = arith.constant 0 : index
      %c0_117 = arith.constant 0 : index
      %c0_118 = arith.constant 0 : index
      %214 = vector.load %arg28[%c0_116, %c0_117, %c0_118] : memref<1x5x48xf32, #tpu.memory_space<vmem>>, vector<1x5x48xf32>
      %215 = vector.shape_cast %214 : vector<1x5x48xf32> to vector<5x48xf32>
      %216 = vector.shape_cast %212 : vector<5x48xf32> to vector<1x5x48xf32>
      tpu.vector_store %arg28[%c0_116, %c0_117, %c0_118], %216 {strides = array<i32>} : memref<1x5x48xf32, #tpu.memory_space<vmem>>, vector<1x5x48xf32>,
    } else {
    }
    %c0 = arith.constant 0 : index
    %c0_1 = arith.constant 0 : index
    %3 = vector.load %arg31[%c0, %c0_1] : memref<5x48xf32, #tpu.memory_space<vmem>>, vector<5x48xf32>
    %4 = arith.index_cast %arg1 : i32 to index
    %c0_2 = arith.constant 0 : index
    %c0_3 = arith.constant 0 : index
    %5 = vector.load %arg12[%4, %c0_2, %c0_3] : memref<2x1x48xf32, #tpu.memory_space<vmem>>, vector<1x1x48xf32>
    %6 = vector.shape_cast %5 : vector<1x1x48xf32> to vector<1x48xf32>
    %7 = arith.index_cast %arg1 : i32 to index
    %c0_4 = arith.constant 0 : index
    %c0_5 = arith.constant 0 : index
    %8 = vector.load %arg13[%7, %c0_4, %c0_5] : memref<2x1x48xf32, #tpu.memory_space<vmem>>, vector<1x1x48xf32>
    %9 = vector.shape_cast %8 : vector<1x1x48xf32> to vector<1x48xf32>
    %cst = arith.constant dense<0.000000e+00> : vector<5xf32>
    %10 = vector.multi_reduction <add>, %3, %cst [1] : vector<5x48xf32> to vector<5xf32>
    %11 = vector.shape_cast %10 : vector<5xf32> to vector<5x1xf32>
    %cst_6 = arith.constant 4.800000e+01 : f32
    %12 = vector.broadcast %cst_6 : f32 to vector<5x1xf32>
    %13 = arith.divf %11, %12 : vector<5x1xf32>
    %14 = vector.broadcast %13 : vector<5x1xf32> to vector<5x48xf32>
    %15 = arith.subf %3, %14 : vector<5x48xf32>
    %16 = arith.mulf %15, %15 : vector<5x48xf32>
    %cst_7 = arith.constant dense<0.000000e+00> : vector<5xf32>
    %17 = vector.multi_reduction <add>, %16, %cst_7 [1] : vector<5x48xf32> to vector<5xf32>
    %18 = vector.shape_cast %17 : vector<5xf32> to vector<5x1xf32>
    %cst_8 = arith.constant 4.800000e+01 : f32
    %19 = vector.broadcast %cst_8 : f32 to vector<5x1xf32>
    %20 = arith.divf %18, %19 : vector<5x1xf32>
    %cst_9 = arith.constant 9.99999997E-7 : f32
    %21 = vector.broadcast %cst_9 : f32 to vector<5x1xf32>
    %22 = arith.addf %20, %21 : vector<5x1xf32>
    %23 = math.rsqrt %22 : vector<5x1xf32>
    %24 = vector.broadcast %23 : vector<5x1xf32> to vector<5x48xf32>
    %25 = arith.mulf %15, %24 : vector<5x48xf32>
    %26 = vector.broadcast %6 : vector<1x48xf32> to vector<5x48xf32>
    %27 = arith.mulf %25, %26 : vector<5x48xf32>
    %28 = vector.broadcast %9 : vector<1x48xf32> to vector<5x48xf32>
    %29 = arith.addf %27, %28 : vector<5x48xf32>
    %30 = arith.index_cast %arg1 : i32 to index
    %c0_10 = arith.constant 0 : index
    %c0_11 = arith.constant 0 : index
    %31 = vector.load %arg14[%30, %c0_10, %c0_11] : memref<2x48x48xf32, #tpu.memory_space<vmem>>, vector<1x48x48xf32>
    %32 = vector.shape_cast %31 : vector<1x48x48xf32> to vector<48x48xf32>
    %cst_12 = arith.constant dense<0.000000e+00> : vector<5x48xf32>
    %33 = tpu.matmul %29, %32, %cst_12 {dimension_numbers = #tpu.dot_dimension_numbers<[1], [0], [0], [1], [0, 0, 1, 1], [], []>} : vector<5x48xf32>, vector<48x48xf32>, vector<5x48xf32> -> vector<5x48xf32>
    %34 = arith.index_cast %arg1 : i32 to index
    %c0_13 = arith.constant 0 : index
    %c0_14 = arith.constant 0 : index
    %35 = vector.load %arg15[%34, %c0_13, %c0_14] : memref<2x1x48xf32, #tpu.memory_space<vmem>>, vector<1x1x48xf32>
    %36 = vector.shape_cast %35 : vector<1x1x48xf32> to vector<1x48xf32>
    %37 = vector.broadcast %36 : vector<1x48xf32> to vector<5x48xf32>
    %38 = arith.addf %33, %37 : vector<5x48xf32>
    %cst_15 = arith.constant 5.000000e-01 : f32
    %39 = vector.broadcast %cst_15 : f32 to vector<5x48xf32>
    %40 = arith.mulf %38, %39 : vector<5x48xf32>
    %41 = arith.index_cast %arg1 : i32 to index
    %c0_16 = arith.constant 0 : index
    %c0_17 = arith.constant 0 : index
    %42 = vector.load %arg16[%41, %c0_16, %c0_17] : memref<2x48x48xf32, #tpu.memory_space<vmem>>, vector<1x48x48xf32>
    %43 = vector.shape_cast %42 : vector<1x48x48xf32> to vector<48x48xf32>
    %cst_18 = arith.constant dense<0.000000e+00> : vector<5x48xf32>
    %44 = tpu.matmul %29, %43, %cst_18 {dimension_numbers = #tpu.dot_dimension_numbers<[1], [0], [0], [1], [0, 0, 1, 1], [], []>} : vector<5x48xf32>, vector<48x48xf32>, vector<5x48xf32> -> vector<5x48xf32>
    %45 = arith.index_cast %arg1 : i32 to index
    %c0_19 = arith.constant 0 : index
    %c0_20 = arith.constant 0 : index
    %46 = vector.load %arg17[%45, %c0_19, %c0_20] : memref<2x1x48xf32, #tpu.memory_space<vmem>>, vector<1x1x48xf32>
    %47 = vector.shape_cast %46 : vector<1x1x48xf32> to vector<1x48xf32>
    %48 = vector.broadcast %47 : vector<1x48xf32> to vector<5x48xf32>
    %49 = arith.addf %44, %48 : vector<5x48xf32>
    %50 = arith.index_cast %arg1 : i32 to index
    %c0_21 = arith.constant 0 : index
    %c0_22 = arith.constant 0 : index
    %51 = vector.load %arg18[%50, %c0_21, %c0_22] : memref<2x48x48xf32, #tpu.memory_space<vmem>>, vector<1x48x48xf32>
    %52 = vector.shape_cast %51 : vector<1x48x48xf32> to vector<48x48xf32>
    %cst_23 = arith.constant dense<0.000000e+00> : vector<5x48xf32>
    %53 = tpu.matmul %29, %52, %cst_23 {dimension_numbers = #tpu.dot_dimension_numbers<[1], [0], [0], [1], [0, 0, 1, 1], [], []>} : vector<5x48xf32>, vector<48x48xf32>, vector<5x48xf32> -> vector<5x48xf32>
    %54 = arith.index_cast %arg1 : i32 to index
    %c0_24 = arith.constant 0 : index
    %c0_25 = arith.constant 0 : index
    %55 = vector.load %arg19[%54, %c0_24, %c0_25] : memref<2x1x48xf32, #tpu.memory_space<vmem>>, vector<1x1x48xf32>
    %56 = vector.shape_cast %55 : vector<1x1x48xf32> to vector<1x48xf32>
    %57 = vector.broadcast %56 : vector<1x48xf32> to vector<5x48xf32>
    %58 = arith.addf %53, %57 : vector<5x48xf32>
    %c0_26 = arith.constant 0 : index
    %c0_27 = arith.constant 0 : index
    %59 = vector.load %arg9[%c0_26, %c0_27] : memref<60x5xf32, #tpu.memory_space<vmem>>, vector<60x5xf32>
    %c0_28 = arith.constant 0 : index
    %c0_29 = arith.constant 0 : index
    %60 = vector.load %arg10[%c0_28, %c0_29] : memref<60x48xf32, #tpu.memory_space<vmem>>, vector<60x48xf32>
    %cst_30 = arith.constant dense<0.000000e+00> : vector<60x48xf32>
    %61 = tpu.matmul %59, %49, %cst_30 {dimension_numbers = #tpu.dot_dimension_numbers<[1], [0], [0], [1], [0, 0, 1, 1], [], []>} : vector<60x5xf32>, vector<5x48xf32>, vector<60x48xf32> -> vector<60x48xf32>
    %62 = arith.mulf %61, %60 : vector<60x48xf32>
    %cst_31 = arith.constant dense<0.000000e+00> : vector<60x48xf32>
    %63 = tpu.matmul %59, %58, %cst_31 {dimension_numbers = #tpu.dot_dimension_numbers<[1], [0], [0], [1], [0, 0, 1, 1], [], []>} : vector<60x5xf32>, vector<5x48xf32>, vector<60x48xf32> -> vector<60x48xf32>
    %64 = arith.mulf %63, %60 : vector<60x48xf32>
    %cst_32 = arith.constant dense<0.000000e+00> : vector<5x60xf32>
    %65 = tpu.matmul %40, %62, %cst_32 {dimension_numbers = #tpu.dot_dimension_numbers<[1], [1], [0], [0], [0, 0, 1, 0], [], []>} : vector<5x48xf32>, vector<60x48xf32>, vector<5x60xf32> -> vector<5x60xf32>
    %cst_33 = arith.constant dense<0xFF800000> : vector<5xf32>
    %66 = vector.multi_reduction <maximumf>, %65, %cst_33 [1] : vector<5x60xf32> to vector<5xf32>
    %67 = vector.shape_cast %66 : vector<5xf32> to vector<5x1xf32>
    %68 = vector.broadcast %67 : vector<5x1xf32> to vector<5x60xf32>
    %69 = arith.subf %65, %68 : vector<5x60xf32>
    %70 = math.exp %69 : vector<5x60xf32>
    %c0_34 = arith.constant 0 : index
    %c0_35 = arith.constant 0 : index
    %71 = vector.load %arg11[%c0_34, %c0_35] : memref<60x60xf32, #tpu.memory_space<vmem>>, vector<60x60xf32>
    %cst_36 = arith.constant dense<0.000000e+00> : vector<5x60xf32>
    %72 = tpu.matmul %70, %71, %cst_36 {dimension_numbers = #tpu.dot_dimension_numbers<[1], [0], [0], [1], [0, 0, 1, 1], [], []>} : vector<5x60xf32>, vector<60x60xf32>, vector<5x60xf32> -> vector<5x60xf32>
    %73 = arith.divf %70, %72 : vector<5x60xf32>
    %c0_37 = arith.constant 0 : index
    %c0_38 = arith.constant 0 : index
    %c0_39 = arith.constant 0 : index
    %c0_40 = arith.constant 0 : index
    %74 = vector.load %arg30[%c0_37, %c0_38, %c0_39, %c0_40] : memref<1x1x5x60xf32, #tpu.memory_space<vmem>>, vector<1x1x5x60xf32>
    %75 = vector.shape_cast %74 : vector<1x1x5x60xf32> to vector<5x60xf32>
    %76 = vector.shape_cast %73 : vector<5x60xf32> to vector<1x1x5x60xf32>
    tpu.vector_store %arg30[%c0_37, %c0_38, %c0_39, %c0_40], %76 {strides = array<i32>} : memref<1x1x5x60xf32, #tpu.memory_space<vmem>>, vector<1x1x5x60xf32>,
    %cst_41 = arith.constant dense<0.000000e+00> : vector<5x48xf32>
    %77 = tpu.matmul %73, %64, %cst_41 {dimension_numbers = #tpu.dot_dimension_numbers<[1], [0], [0], [1], [0, 0, 1, 1], [], []>} : vector<5x60xf32>, vector<60x48xf32>, vector<5x48xf32> -> vector<5x48xf32>
    %78 = arith.index_cast %arg1 : i32 to index
    %c0_42 = arith.constant 0 : index
    %c0_43 = arith.constant 0 : index
    %79 = vector.load %arg20[%78, %c0_42, %c0_43] : memref<2x48x48xf32, #tpu.memory_space<vmem>>, vector<1x48x48xf32>
    %80 = vector.shape_cast %79 : vector<1x48x48xf32> to vector<48x48xf32>
    %cst_44 = arith.constant dense<0.000000e+00> : vector<5x48xf32>
    %81 = tpu.matmul %77, %80, %cst_44 {dimension_numbers = #tpu.dot_dimension_numbers<[1], [0], [0], [1], [0, 0, 1, 1], [], []>} : vector<5x48xf32>, vector<48x48xf32>, vector<5x48xf32> -> vector<5x48xf32>
    %82 = arith.addf %3, %81 : vector<5x48xf32>
    %83 = arith.index_cast %arg1 : i32 to index
    %c0_45 = arith.constant 0 : index
    %c0_46 = arith.constant 0 : index
    %84 = vector.load %arg21[%83, %c0_45, %c0_46] : memref<2x1x48xf32, #tpu.memory_space<vmem>>, vector<1x1x48xf32>
    %85 = vector.shape_cast %84 : vector<1x1x48xf32> to vector<1x48xf32>
    %86 = vector.broadcast %85 : vector<1x48xf32> to vector<5x48xf32>
    %87 = arith.addf %82, %86 : vector<5x48xf32>
    %88 = arith.index_cast %arg1 : i32 to index
    %c0_47 = arith.constant 0 : index
    %c0_48 = arith.constant 0 : index
    %89 = vector.load %arg22[%88, %c0_47, %c0_48] : memref<2x1x48xf32, #tpu.memory_space<vmem>>, vector<1x1x48xf32>
    %90 = vector.shape_cast %89 : vector<1x1x48xf32> to vector<1x48xf32>
    %91 = arith.index_cast %arg1 : i32 to index
    %c0_49 = arith.constant 0 : index
    %c0_50 = arith.constant 0 : index
    %92 = vector.load %arg23[%91, %c0_49, %c0_50] : memref<2x1x48xf32, #tpu.memory_space<vmem>>, vector<1x1x48xf32>
    %93 = vector.shape_cast %92 : vector<1x1x48xf32> to vector<1x48xf32>
    %cst_51 = arith.constant dense<0.000000e+00> : vector<5xf32>
    %94 = vector.multi_reduction <add>, %87, %cst_51 [1] : vector<5x48xf32> to vector<5xf32>
    %95 = vector.shape_cast %94 : vector<5xf32> to vector<5x1xf32>
    %cst_52 = arith.constant 4.800000e+01 : f32
    %96 = vector.broadcast %cst_52 : f32 to vector<5x1xf32>
    %97 = arith.divf %95, %96 : vector<5x1xf32>
    %98 = vector.broadcast %97 : vector<5x1xf32> to vector<5x48xf32>
    %99 = arith.subf %87, %98 : vector<5x48xf32>
    %100 = arith.mulf %99, %99 : vector<5x48xf32>
    %cst_53 = arith.constant dense<0.000000e+00> : vector<5xf32>
    %101 = vector.multi_reduction <add>, %100, %cst_53 [1] : vector<5x48xf32> to vector<5xf32>
    %102 = vector.shape_cast %101 : vector<5xf32> to vector<5x1xf32>
    %cst_54 = arith.constant 4.800000e+01 : f32
    %103 = vector.broadcast %cst_54 : f32 to vector<5x1xf32>
    %104 = arith.divf %102, %103 : vector<5x1xf32>
    %cst_55 = arith.constant 9.99999997E-7 : f32
    %105 = vector.broadcast %cst_55 : f32 to vector<5x1xf32>
    %106 = arith.addf %104, %105 : vector<5x1xf32>
    %107 = math.rsqrt %106 : vector<5x1xf32>
    %108 = vector.broadcast %107 : vector<5x1xf32> to vector<5x48xf32>
    %109 = arith.mulf %99, %108 : vector<5x48xf32>
    %110 = vector.broadcast %90 : vector<1x48xf32> to vector<5x48xf32>
    %111 = arith.mulf %109, %110 : vector<5x48xf32>
    %112 = vector.broadcast %93 : vector<1x48xf32> to vector<5x48xf32>
    %113 = arith.addf %111, %112 : vector<5x48xf32>
    %114 = arith.index_cast %arg1 : i32 to index
    %c0_56 = arith.constant 0 : index
    %c0_57 = arith.constant 0 : index
    %115 = vector.load %arg24[%114, %c0_56, %c0_57] : memref<2x48x192xf32, #tpu.memory_space<vmem>>, vector<1x48x192xf32>
    %116 = vector.shape_cast %115 : vector<1x48x192xf32> to vector<48x192xf32>
    %cst_58 = arith.constant dense<0.000000e+00> : vector<5x192xf32>
    %117 = tpu.matmul %113, %116, %cst_58 {dimension_numbers = #tpu.dot_dimension_numbers<[1], [0], [0], [1], [0, 0, 1, 1], [], []>} : vector<5x48xf32>, vector<48x192xf32>, vector<5x192xf32> -> vector<5x192xf32>
    %118 = arith.index_cast %arg1 : i32 to index
    %c0_59 = arith.constant 0 : index
    %c0_60 = arith.constant 0 : index
    %119 = vector.load %arg25[%118, %c0_59, %c0_60] : memref<2x1x192xf32, #tpu.memory_space<vmem>>, vector<1x1x192xf32>
    %120 = vector.shape_cast %119 : vector<1x1x192xf32> to vector<1x192xf32>
    %121 = vector.broadcast %120 : vector<1x192xf32> to vector<5x192xf32>
    %122 = arith.addf %117, %121 : vector<5x192xf32>
    %cst_61 = arith.constant 5.000000e-01 : f32
    %123 = vector.broadcast %cst_61 : f32 to vector<5x192xf32>
    %124 = arith.mulf %123, %122 : vector<5x192xf32>
    %cst_62 = arith.constant 0.707106769 : f32
    %125 = vector.broadcast %cst_62 : f32 to vector<5x192xf32>
    %126 = arith.mulf %122, %125 : vector<5x192xf32>
    %cst_63 = arith.constant 0.000000e+00 : f32
    %127 = vector.broadcast %cst_63 : f32 to vector<5x192xf32>
    %128 = arith.cmpf oge, %126, %127 : vector<5x192xf32>
    %cst_64 = arith.constant 1.000000e+00 : f32
    %cst_65 = arith.constant -1.000000e+00 : f32
    %129 = vector.broadcast %cst_64 : f32 to vector<5x192xf32>
    %130 = vector.broadcast %cst_65 : f32 to vector<5x192xf32>
    %131 = arith.select %128, %129, %130 : vector<5x192xi1>, vector<5x192xf32>
    %132 = arith.mulf %126, %131 : vector<5x192xf32>
    %cst_66 = arith.constant 0.327591091 : f32
    %133 = vector.broadcast %cst_66 : f32 to vector<5x192xf32>
    %134 = arith.mulf %133, %132 : vector<5x192xf32>
    %cst_67 = arith.constant 1.000000e+00 : f32
    %135 = vector.broadcast %cst_67 : f32 to vector<5x192xf32>
    %136 = arith.addf %135, %134 : vector<5x192xf32>
    %cst_68 = arith.constant 1.000000e+00 : f32
    %137 = vector.broadcast %cst_68 : f32 to vector<5x192xf32>
    %138 = arith.divf %137, %136 : vector<5x192xf32>
    %cst_69 = arith.constant 1.06140542 : f32
    %139 = vector.broadcast %cst_69 : f32 to vector<5x192xf32>
    %140 = arith.mulf %138, %139 : vector<5x192xf32>
    %cst_70 = arith.constant -1.45315206 : f32
    %141 = vector.broadcast %cst_70 : f32 to vector<5x192xf32>
    %142 = arith.addf %141, %140 : vector<5x192xf32>
    %143 = arith.mulf %138, %142 : vector<5x192xf32>
    %cst_71 = arith.constant 1.42141378 : f32
    %144 = vector.broadcast %cst_71 : f32 to vector<5x192xf32>
    %145 = arith.addf %144, %143 : vector<5x192xf32>
    %146 = arith.mulf %138, %145 : vector<5x192xf32>
    %cst_72 = arith.constant -0.284496725 : f32
    %147 = vector.broadcast %cst_72 : f32 to vector<5x192xf32>
    %148 = arith.addf %147, %146 : vector<5x192xf32>
    %149 = arith.mulf %138, %148 : vector<5x192xf32>
    %cst_73 = arith.constant 0.254829586 : f32
    %150 = vector.broadcast %cst_73 : f32 to vector<5x192xf32>
    %151 = arith.addf %150, %149 : vector<5x192xf32>
    %152 = arith.mulf %138, %151 : vector<5x192xf32>
    %cst_74 = arith.constant 0.000000e+00 : f32
    %153 = vector.broadcast %cst_74 : f32 to vector<5x192xf32>
    %154 = arith.subf %153, %132 : vector<5x192xf32>
    %155 = arith.mulf %154, %132 : vector<5x192xf32>
    %156 = math.exp %155 : vector<5x192xf32>
    %157 = arith.mulf %152, %156 : vector<5x192xf32>
    %cst_75 = arith.constant 1.000000e+00 : f32
    %158 = vector.broadcast %cst_75 : f32 to vector<5x192xf32>
    %159 = arith.subf %158, %157 : vector<5x192xf32>
    %160 = arith.mulf %131, %159 : vector<5x192xf32>
    %cst_76 = arith.constant 1.000000e+00 : f32
    %161 = vector.broadcast %cst_76 : f32 to vector<5x192xf32>
    %162 = arith.addf %161, %160 : vector<5x192xf32>
    %163 = arith.mulf %124, %162 : vector<5x192xf32>
    %164 = arith.index_cast %arg1 : i32 to index
    %c0_77 = arith.constant 0 : index
    %c0_78 = arith.constant 0 : index
    %165 = vector.load %arg26[%164, %c0_77, %c0_78] : memref<2x192x48xf32, #tpu.memory_space<vmem>>, vector<1x192x48xf32>
    %166 = vector.shape_cast %165 : vector<1x192x48xf32> to vector<192x48xf32>
    %cst_79 = arith.constant dense<0.000000e+00> : vector<5x48xf32>
    %167 = tpu.matmul %163, %166, %cst_79 {dimension_numbers = #tpu.dot_dimension_numbers<[1], [0], [0], [1], [0, 0, 1, 1], [], []>} : vector<5x192xf32>, vector<192x48xf32>, vector<5x48xf32> -> vector<5x48xf32>
    %168 = arith.index_cast %arg1 : i32 to index
    %c0_80 = arith.constant 0 : index
    %c0_81 = arith.constant 0 : index
    %169 = vector.load %arg27[%168, %c0_80, %c0_81] : memref<2x1x48xf32, #tpu.memory_space<vmem>>, vector<1x1x48xf32>
    %170 = vector.shape_cast %169 : vector<1x1x48xf32> to vector<1x48xf32>
    %171 = vector.broadcast %170 : vector<1x48xf32> to vector<5x48xf32>
    %172 = arith.addf %167, %171 : vector<5x48xf32>
    %173 = arith.addf %87, %172 : vector<5x48xf32>
    %c0_82 = arith.constant 0 : index
    %c0_83 = arith.constant 0 : index
    %174 = vector.load %arg31[%c0_82, %c0_83] : memref<5x48xf32, #tpu.memory_space<vmem>>, vector<5x48xf32>
    tpu.vector_store %arg31[%c0_82, %c0_83], %173 {strides = array<i32>} : memref<5x48xf32, #tpu.memory_space<vmem>>, vector<5x48xf32>,
    %c0_84 = arith.constant 0 : index
    %c0_85 = arith.constant 0 : index
    %c0_86 = arith.constant 0 : index
    %c0_87 = arith.constant 0 : index
    %175 = vector.load %arg29[%c0_84, %c0_85, %c0_86, %c0_87] : memref<1x1x5x48xf32, #tpu.memory_space<vmem>>, vector<1x1x5x48xf32>
    %176 = vector.shape_cast %175 : vector<1x1x5x48xf32> to vector<5x48xf32>
    %177 = vector.shape_cast %173 : vector<5x48xf32> to vector<1x1x5x48xf32>
    tpu.vector_store %arg29[%c0_84, %c0_85, %c0_86, %c0_87], %177 {strides = array<i32>} : memref<1x1x5x48xf32, #tpu.memory_space<vmem>>, vector<1x1x5x48xf32>,
    return
  }
  func.func @transform_0(%arg0: i32, %arg1: i32) -> (i32, i32, i32) {
    %c0_i32 = arith.constant 0 : i32
    %c0_i32_0 = arith.constant 0 : i32
    %c0_i32_1 = arith.constant 0 : i32
    return %arg0, %c0_i32, %c0_i32_0 : i32, i32, i32
  }
  func.func @transform_1(%arg0: i32, %arg1: i32) -> (i32, i32) {
    %c0_i32 = arith.constant 0 : i32
    %c0_i32_0 = arith.constant 0 : i32
    %c0_i32_1 = arith.constant 0 : i32
    return %c0_i32, %c0_i32_0 : i32, i32
  }
  func.func @transform_2(%arg0: i32, %arg1: i32) -> (i32, i32) {
    %c0_i32 = arith.constant 0 : i32
    %c0_i32_0 = arith.constant 0 : i32
    %c0_i32_1 = arith.constant 0 : i32
    return %c0_i32, %c0_i32_0 : i32, i32
  }
  func.func @transform_3(%arg0: i32, %arg1: i32) -> (i32, i32) {
    %c0_i32 = arith.constant 0 : i32
    %c0_i32_0 = arith.constant 0 : i32
    %c0_i32_1 = arith.constant 0 : i32
    return %c0_i32, %c0_i32_0 : i32, i32
  }
  func.func @transform_4(%arg0: i32, %arg1: i32) -> (i32, i32) {
    %c0_i32 = arith.constant 0 : i32
    %c0_i32_0 = arith.constant 0 : i32
    %c0_i32_1 = arith.constant 0 : i32
    return %c0_i32, %c0_i32_0 : i32, i32
  }
  func.func @transform_5(%arg0: i32, %arg1: i32) -> (i32, i32) {
    %c0_i32 = arith.constant 0 : i32
    %c0_i32_0 = arith.constant 0 : i32
    %c0_i32_1 = arith.constant 0 : i32
    return %c0_i32, %c0_i32_0 : i32, i32
  }
  func.func @transform_6(%arg0: i32, %arg1: i32) -> (i32, i32) {
    %c0_i32 = arith.constant 0 : i32
    %c0_i32_0 = arith.constant 0 : i32
    %c0_i32_1 = arith.constant 0 : i32
    return %c0_i32, %c0_i32_0 : i32, i32
  }
  func.func @transform_7(%arg0: i32, %arg1: i32) -> (i32, i32) {
    %c0_i32 = arith.constant 0 : i32
    %c0_i32_0 = arith.constant 0 : i32
    %c0_i32_1 = arith.constant 0 : i32
    return %c0_i32, %c0_i32_0 : i32, i32
  }
  func.func @transform_8(%arg0: i32, %arg1: i32) -> (i32, i32) {
    %c0_i32 = arith.constant 0 : i32
    %c0_i32_0 = arith.constant 0 : i32
    %c0_i32_1 = arith.constant 0 : i32
    return %c0_i32, %c0_i32_0 : i32, i32
  }
  func.func @transform_9(%arg0: i32, %arg1: i32) -> (i32, i32) {
    %c0_i32 = arith.constant 0 : i32
    %c0_i32_0 = arith.constant 0 : i32
    %c0_i32_1 = arith.constant 0 : i32
    return %c0_i32, %c0_i32_0 : i32, i32
  }
  func.func @transform_10(%arg0: i32, %arg1: i32) -> (i32, i32, i32) {
    %c0_i32 = arith.constant 0 : i32
    %c0_i32_0 = arith.constant 0 : i32
    %c0_i32_1 = arith.constant 0 : i32
    %c0_i32_2 = arith.constant 0 : i32
    return %c0_i32, %c0_i32_0, %c0_i32_1 : i32, i32, i32
  }
  func.func @transform_11(%arg0: i32, %arg1: i32) -> (i32, i32, i32) {
    %c0_i32 = arith.constant 0 : i32
    %c0_i32_0 = arith.constant 0 : i32
    %c0_i32_1 = arith.constant 0 : i32
    %c0_i32_2 = arith.constant 0 : i32
    return %c0_i32, %c0_i32_0, %c0_i32_1 : i32, i32, i32
  }
  func.func @transform_12(%arg0: i32, %arg1: i32) -> (i32, i32, i32) {
    %c0_i32 = arith.constant 0 : i32
    %c0_i32_0 = arith.constant 0 : i32
    %c0_i32_1 = arith.constant 0 : i32
    %c0_i32_2 = arith.constant 0 : i32
    return %c0_i32, %c0_i32_0, %c0_i32_1 : i32, i32, i32
  }
  func.func @transform_13(%arg0: i32, %arg1: i32) -> (i32, i32, i32) {
    %c0_i32 = arith.constant 0 : i32
    %c0_i32_0 = arith.constant 0 : i32
    %c0_i32_1 = arith.constant 0 : i32
    %c0_i32_2 = arith.constant 0 : i32
    return %c0_i32, %c0_i32_0, %c0_i32_1 : i32, i32, i32
  }
  func.func @transform_14(%arg0: i32, %arg1: i32) -> (i32, i32, i32) {
    %c0_i32 = arith.constant 0 : i32
    %c0_i32_0 = arith.constant 0 : i32
    %c0_i32_1 = arith.constant 0 : i32
    %c0_i32_2 = arith.constant 0 : i32
    return %c0_i32, %c0_i32_0, %c0_i32_1 : i32, i32, i32
  }
  func.func @transform_15(%arg0: i32, %arg1: i32) -> (i32, i32, i32) {
    %c0_i32 = arith.constant 0 : i32
    %c0_i32_0 = arith.constant 0 : i32
    %c0_i32_1 = arith.constant 0 : i32
    %c0_i32_2 = arith.constant 0 : i32
    return %c0_i32, %c0_i32_0, %c0_i32_1 : i32, i32, i32
  }
  func.func @transform_16(%arg0: i32, %arg1: i32) -> (i32, i32, i32) {
    %c0_i32 = arith.constant 0 : i32
    %c0_i32_0 = arith.constant 0 : i32
    %c0_i32_1 = arith.constant 0 : i32
    %c0_i32_2 = arith.constant 0 : i32
    return %c0_i32, %c0_i32_0, %c0_i32_1 : i32, i32, i32
  }
  func.func @transform_17(%arg0: i32, %arg1: i32) -> (i32, i32, i32) {
    %c0_i32 = arith.constant 0 : i32
    %c0_i32_0 = arith.constant 0 : i32
    %c0_i32_1 = arith.constant 0 : i32
    %c0_i32_2 = arith.constant 0 : i32
    return %c0_i32, %c0_i32_0, %c0_i32_1 : i32, i32, i32
  }
  func.func @transform_18(%arg0: i32, %arg1: i32) -> (i32, i32, i32) {
    %c0_i32 = arith.constant 0 : i32
    %c0_i32_0 = arith.constant 0 : i32
    %c0_i32_1 = arith.constant 0 : i32
    %c0_i32_2 = arith.constant 0 : i32
    return %c0_i32, %c0_i32_0, %c0_i32_1 : i32, i32, i32
  }
  func.func @transform_19(%arg0: i32, %arg1: i32) -> (i32, i32, i32) {
    %c0_i32 = arith.constant 0 : i32
    %c0_i32_0 = arith.constant 0 : i32
    %c0_i32_1 = arith.constant 0 : i32
    %c0_i32_2 = arith.constant 0 : i32
    return %c0_i32, %c0_i32_0, %c0_i32_1 : i32, i32, i32
  }
  func.func @transform_20(%arg0: i32, %arg1: i32) -> (i32, i32, i32) {
    %c0_i32 = arith.constant 0 : i32
    %c0_i32_0 = arith.constant 0 : i32
    %c0_i32_1 = arith.constant 0 : i32
    %c0_i32_2 = arith.constant 0 : i32
    return %c0_i32, %c0_i32_0, %c0_i32_1 : i32, i32, i32
  }
  func.func @transform_21(%arg0: i32, %arg1: i32) -> (i32, i32, i32) {
    %c0_i32 = arith.constant 0 : i32
    %c0_i32_0 = arith.constant 0 : i32
    %c0_i32_1 = arith.constant 0 : i32
    %c0_i32_2 = arith.constant 0 : i32
    return %c0_i32, %c0_i32_0, %c0_i32_1 : i32, i32, i32
  }
  func.func @transform_22(%arg0: i32, %arg1: i32) -> (i32, i32, i32) {
    %c0_i32 = arith.constant 0 : i32
    %c0_i32_0 = arith.constant 0 : i32
    %c0_i32_1 = arith.constant 0 : i32
    %c0_i32_2 = arith.constant 0 : i32
    return %c0_i32, %c0_i32_0, %c0_i32_1 : i32, i32, i32
  }
  func.func @transform_23(%arg0: i32, %arg1: i32) -> (i32, i32, i32) {
    %c0_i32 = arith.constant 0 : i32
    %c0_i32_0 = arith.constant 0 : i32
    %c0_i32_1 = arith.constant 0 : i32
    %c0_i32_2 = arith.constant 0 : i32
    return %c0_i32, %c0_i32_0, %c0_i32_1 : i32, i32, i32
  }
  func.func @transform_24(%arg0: i32, %arg1: i32) -> (i32, i32, i32) {
    %c0_i32 = arith.constant 0 : i32
    %c0_i32_0 = arith.constant 0 : i32
    %c0_i32_1 = arith.constant 0 : i32
    %c0_i32_2 = arith.constant 0 : i32
    return %c0_i32, %c0_i32_0, %c0_i32_1 : i32, i32, i32
  }
  func.func @transform_25(%arg0: i32, %arg1: i32) -> (i32, i32, i32) {
    %c0_i32 = arith.constant 0 : i32
    %c0_i32_0 = arith.constant 0 : i32
    %c0_i32_1 = arith.constant 0 : i32
    %c0_i32_2 = arith.constant 0 : i32
    return %c0_i32, %c0_i32_0, %c0_i32_1 : i32, i32, i32
  }
  func.func @transform_26(%arg0: i32, %arg1: i32) -> (i32, i32, i32) {
    %c0_i32 = arith.constant 0 : i32
    %c0_i32_0 = arith.constant 0 : i32
    %c0_i32_1 = arith.constant 0 : i32
    return %arg0, %c0_i32, %c0_i32_0 : i32, i32, i32
  }
  func.func @transform_27(%arg0: i32, %arg1: i32) -> (i32, i32, i32, i32) {
    %c0_i32 = arith.constant 0 : i32
    %c0_i32_0 = arith.constant 0 : i32
    %c0_i32_1 = arith.constant 0 : i32
    return %arg1, %arg0, %c0_i32, %c0_i32_0 : i32, i32, i32, i32
  }
  func.func @transform_28(%arg0: i32, %arg1: i32) -> (i32, i32, i32, i32) {
    %c0_i32 = arith.constant 0 : i32
    %c0_i32_0 = arith.constant 0 : i32
    %c0_i32_1 = arith.constant 0 : i32
    return %arg1, %arg0, %c0_i32, %c0_i32_0 : i32, i32, i32, i32
  }
}

</mosaic_0001>

<llo_original>
// kernel: squeeze.4
$region0: #{squeeze.4}
  %s0 = inlined_call_operand.vmem [shape: f32[1,2,5,60], index: 0, kind: input, shape index: {}]
  %s1 = inlined_call_operand.vmem [shape: f32[2,5,12,5], index: 1, kind: output, shape index: {}]
  $region1: #{squeeze.4} parent=0
    #allocation0 [shape = 'u8[20480]{0}', space=vmem, size = 0x5000, scoped, tag = 'scoped mem for input reshape']
    %s3 = sshllo.u32 0, 2
    %s4 = smul.addr 2, 4
    %s5 = scalar_lea.vmem %s0, %s4
    %v6 = vld [vmem:[%s5] sm:%s3]
    %s7 = scalar_lea.vmem [#allocation0], 32
    %8 = vst [vmem:[%s7] sm:%s3] %v6
    %s9 = smul.addr 2, 3
    %s10 = scalar_lea.vmem %s0, %s9
    %v11 = vld [vmem:[%s10] sm:%s3]
    %s12 = scalar_lea.vmem [#allocation0], 24
    %13 = vst [vmem:[%s12] sm:%s3] %v11
    %s14 = smul.addr 2, 2
    %s15 = scalar_lea.vmem %s0, %s14
    %v16 = vld [vmem:[%s15] sm:%s3]
    %s17 = scalar_lea.vmem [#allocation0], 16
    %18 = vst [vmem:[%s17] sm:%s3] %v16
    %s19 = scalar_lea.vmem %s0, 2
    %v20 = vld [vmem:[%s19] sm:%s3]
    %s21 = scalar_lea.vmem [#allocation0], 8
    %22 = vst [vmem:[%s21] sm:%s3] %v20
    %v23 = vld [vmem:[%s0] sm:%s3]
    %24 = vst [vmem:[#allocation0] sm:%s3] %v23
    %v25 = vld [vmem:[#allocation0] sm:$0x3]
    %vm26 = vcmask 39936
    %27 = vst.msk [vmem:[%s1] ss:$16 sm:$0x3] %vm26, %v25
    %s28 = scalar_lea.vmem [#allocation0], 8
    %v29 = vld [vmem:[%s28] sm:$0x3]
    %vm30 = vcmask 39936
    %s31 = scalar_lea.vmem %s1, 32
    %32 = vst.msk [vmem:[%s31] ss:$16 sm:$0x3] %vm30, %v29
    %s33 = scalar_lea.vmem [#allocation0], 16
    %v34 = vld [vmem:[%s33] sm:$0x3]
    %vm35 = vcmask 39936
    %s36 = scalar_lea.vmem %s1, 64
    %37 = vst.msk [vmem:[%s36] ss:$16 sm:$0x3] %vm35, %v34
    %s38 = scalar_lea.vmem [#allocation0], 24
    %v39 = vld [vmem:[%s38] sm:$0x3]
    %vm40 = vcmask 39936
    %s41 = scalar_lea.vmem %s1, 96
    %42 = vst.msk [vmem:[%s41] ss:$16 sm:$0x3] %vm40, %v39
    %s43 = scalar_lea.vmem [#allocation0], 32
    %v44 = vld [vmem:[%s43] sm:$0x3]
    %vm45 = vcmask 39936
    %s46 = scalar_lea.vmem %s1, 128
    %47 = vst.msk [vmem:[%s46] ss:$16 sm:$0x3] %vm45, %v44
    %v48 = vld.sshfl [vmem:[#allocation0] sm:$0xff pattern:$0x99999810]
    %s49 = scalar_lea.vmem [#allocation0], 16
    %v50 = vld.sshfl [vmem:[%s49] sm:$0xff pattern:$0x98100000]
    %vm51 = vcmask 1047556
    %v52 = vsel %vm51, %v50, %v48
    %53 = vrot.lane.b32.xlu0 %v52, 123
    %v54 = vpop.permute.xlu0 %53
    %vm55 = vcmask 39936
    %s56 = scalar_lea.vmem %s1, 1
    %57 = vst.msk [vmem:[%s56] ss:$16 sm:$0x3] %vm55, %v54
    %s58 = scalar_lea.vmem %s1, 1
    %59 = vst.msk [vmem:[%s58] ss:$16 sm:$0xc] %vm55, %v54
    %s60 = scalar_lea.vmem %s1, 1
    %61 = vst.msk [vmem:[%s60] ss:$16 sm:$0x30] %vm55, %v54
    %s62 = scalar_lea.vmem %s1, 1
    %63 = vst.msk [vmem:[%s62] ss:$16 sm:$0xc0] %vm55, %v54
    %s64 = scalar_lea.vmem [#allocation0], 32
    %v65 = vld [vmem:[%s64] sm:$0x3]
    %66 = vrot.lane.b32.xlu0 %v65, 123
    %v67 = vpop.permute.xlu0 %66
    %vm68 = vcmask 39936
    %s69 = scalar_lea.vmem %s1, 129
    %70 = vst.msk [vmem:[%s69] ss:$16 sm:$0x3] %vm68, %v67
    %v71 = vld.sshfl [vmem:[#allocation0] sm:$0xff pattern:$0x99999810]
    %s72 = scalar_lea.vmem [#allocation0], 16
    %v73 = vld.sshfl [vmem:[%s72] sm:$0xff pattern:$0x98100000]
    %vm74 = vcmask 1047556
    %v75 = vsel %vm74, %v73, %v71
    %76 = vrot.lane.b32.xlu0 %v75, 118
    %v77 = vpop.permute.xlu0 %76
    %vm78 = vcmask 39936
    %s79 = scalar_lea.vmem %s1, 2
    %80 = vst.msk [vmem:[%s79] ss:$16 sm:$0x3] %vm78, %v77
    %s81 = scalar_lea.vmem %s1, 2
    %82 = vst.msk [vmem:[%s81] ss:$16 sm:$0xc] %vm78, %v77
    %s83 = scalar_lea.vmem %s1, 2
    %84 = vst.msk [vmem:[%s83] ss:$16 sm:$0x30] %vm78, %v77
    %s85 = scalar_lea.vmem %s1, 2
    %86 = vst.msk [vmem:[%s85] ss:$16 sm:$0xc0] %vm78, %v77
    %s87 = scalar_lea.vmem [#allocation0], 32
    %v88 = vld [vmem:[%s87] sm:$0x3]
    %89 = vrot.lane.b32.xlu0 %v88, 118
    %v90 = vpop.permute.xlu0 %89
    %vm91 = vcmask 39936
    %s92 = scalar_lea.vmem %s1, 130
    %93 = vst.msk [vmem:[%s92] ss:$16 sm:$0x3] %vm91, %v90
    %v94 = vld.sshfl [vmem:[#allocation0] sm:$0xff pattern:$0x99999810]
    %s95 = scalar_lea.vmem [#allocation0], 16
    %v96 = vld.sshfl [vmem:[%s95] sm:$0xff pattern:$0x98100000]
    %vm97 = vcmask 1047556
    %v98 = vsel %vm97, %v96, %v94
    %99 = vrot.lane.b32.xlu0 %v98, 113
    %v100 = vpop.permute.xlu0 %99
    %vm101 = vcmask 39936
    %s102 = scalar_lea.vmem %s1, 3
    %103 = vst.msk [vmem:[%s102] ss:$16 sm:$0x3] %vm101, %v100
    %s104 = scalar_lea.vmem %s1, 3
    %105 = vst.msk [vmem:[%s104] ss:$16 sm:$0xc] %vm101, %v100
    %s106 = scalar_lea.vmem %s1, 3
    %107 = vst.msk [vmem:[%s106] ss:$16 sm:$0x30] %vm101, %v100
    %s108 = scalar_lea.vmem %s1, 3
    %109 = vst.msk [vmem:[%s108] ss:$16 sm:$0xc0] %vm101, %v100
    %s110 = scalar_lea.vmem [#allocation0], 32
    %v111 = vld [vmem:[%s110] sm:$0x3]
    %112 = vrot.lane.b32.xlu0 %v111, 113
    %v113 = vpop.permute.xlu0 %112
    %vm114 = vcmask 39936
    %s115 = scalar_lea.vmem %s1, 131
    %116 = vst.msk [vmem:[%s115] ss:$16 sm:$0x3] %vm114, %v113
    %v117 = vld.sshfl [vmem:[#allocation0] sm:$0xff pattern:$0x99999810]
    %s118 = scalar_lea.vmem [#allocation0], 16
    %v119 = vld.sshfl [vmem:[%s118] sm:$0xff pattern:$0x98100000]
    %vm120 = vcmask 1047556
    %v121 = vsel %vm120, %v119, %v117
    %122 = vrot.lane.b32.xlu0 %v121, 108
    %v123 = vpop.permute.xlu0 %122
    %vm124 = vcmask 39936
    %s125 = scalar_lea.vmem %s1, 4
    %126 = vst.msk [vmem:[%s125] ss:$16 sm:$0x3] %vm124, %v123
    %s127 = scalar_lea.vmem %s1, 4
    %128 = vst.msk [vmem:[%s127] ss:$16 sm:$0xc] %vm124, %v123
    %s129 = scalar_lea.vmem %s1, 4
    %130 = vst.msk [vmem:[%s129] ss:$16 sm:$0x30] %vm124, %v123
    %s131 = scalar_lea.vmem %s1, 4
    %132 = vst.msk [vmem:[%s131] ss:$16 sm:$0xc0] %vm124, %v123
    %s133 = scalar_lea.vmem [#allocation0], 32
    %v134 = vld [vmem:[%s133] sm:$0x3]
    %135 = vrot.lane.b32.xlu0 %v134, 108
    %v136 = vpop.permute.xlu0 %135
    %vm137 = vcmask 39936
    %s138 = scalar_lea.vmem %s1, 132
    %139 = vst.msk [vmem:[%s138] ss:$16 sm:$0x3] %vm137, %v136
    %v140 = vld.sshfl [vmem:[#allocation0] sm:$0xff pattern:$0x99999810]
    %s141 = scalar_lea.vmem [#allocation0], 16
    %v142 = vld.sshfl [vmem:[%s141] sm:$0xff pattern:$0x98100000]
    %vm143 = vcmask 1047556
    %v144 = vsel %vm143, %v142, %v140
    %145 = vrot.lane.b32.xlu0 %v144, 103
    %v146 = vpop.permute.xlu0 %145
    %vm147 = vcmask 39936
    %s148 = scalar_lea.vmem %s1, 5
    %149 = vst.msk [vmem:[%s148] ss:$16 sm:$0x3] %vm147, %v146
    %s150 = scalar_lea.vmem %s1, 5
    %151 = vst.msk [vmem:[%s150] ss:$16 sm:$0xc] %vm147, %v146
    %s152 = scalar_lea.vmem %s1, 5
    %153 = vst.msk [vmem:[%s152] ss:$16 sm:$0x30] %vm147, %v146
    %s154 = scalar_lea.vmem %s1, 5
    %155 = vst.msk [vmem:[%s154] ss:$16 sm:$0xc0] %vm147, %v146
    %s156 = scalar_lea.vmem [#allocation0], 32
    %v157 = vld [vmem:[%s156] sm:$0x3]
    %158 = vrot.lane.b32.xlu0 %v157, 103
    %v159 = vpop.permute.xlu0 %158
    %vm160 = vcmask 39936
    %s161 = scalar_lea.vmem %s1, 133
    %162 = vst.msk [vmem:[%s161] ss:$16 sm:$0x3] %vm160, %v159
    %v163 = vld.sshfl [vmem:[#allocation0] sm:$0xff pattern:$0x99999810]
    %s164 = scalar_lea.vmem [#allocation0], 16
    %v165 = vld.sshfl [vmem:[%s164] sm:$0xff pattern:$0x98100000]
    %vm166 = vcmask 1047556
    %v167 = vsel %vm166, %v165, %v163
    %168 = vrot.lane.b32.xlu0 %v167, 98
    %v169 = vpop.permute.xlu0 %168
    %vm170 = vcmask 39936
    %s171 = scalar_lea.vmem %s1, 6
    %172 = vst.msk [vmem:[%s171] ss:$16 sm:$0x3] %vm170, %v169
    %s173 = scalar_lea.vmem %s1, 6
    %174 = vst.msk [vmem:[%s173] ss:$16 sm:$0xc] %vm170, %v169
    %s175 = scalar_lea.vmem %s1, 6
    %176 = vst.msk [vmem:[%s175] ss:$16 sm:$0x30] %vm170, %v169
    %s177 = scalar_lea.vmem %s1, 6
    %178 = vst.msk [vmem:[%s177] ss:$16 sm:$0xc0] %vm170, %v169
    %s179 = scalar_lea.vmem [#allocation0], 32
    %v180 = vld [vmem:[%s179] sm:$0x3]
    %181 = vrot.lane.b32.xlu0 %v180, 98
    %v182 = vpop.permute.xlu0 %181
    %vm183 = vcmask 39936
    %s184 = scalar_lea.vmem %s1, 134
    %185 = vst.msk [vmem:[%s184] ss:$16 sm:$0x3] %vm183, %v182
    %v186 = vld.sshfl [vmem:[#allocation0] sm:$0xff pattern:$0x99999810]
    %s187 = scalar_lea.vmem [#allocation0], 16
    %v188 = vld.sshfl [vmem:[%s187] sm:$0xff pattern:$0x98100000]
    %vm189 = vcmask 1047556
    %v190 = vsel %vm189, %v188, %v186
    %191 = vrot.lane.b32.xlu0 %v190, 93
    %v192 = vpop.permute.xlu0 %191
    %vm193 = vcmask 39936
    %s194 = scalar_lea.vmem %s1, 7
    %195 = vst.msk [vmem:[%s194] ss:$16 sm:$0x3] %vm193, %v192
    %s196 = scalar_lea.vmem %s1, 7
    %197 = vst.msk [vmem:[%s196] ss:$16 sm:$0xc] %vm193, %v192
    %s198 = scalar_lea.vmem %s1, 7
    %199 = vst.msk [vmem:[%s198] ss:$16 sm:$0x30] %vm193, %v192
    %s200 = scalar_lea.vmem %s1, 7
    %201 = vst.msk [vmem:[%s200] ss:$16 sm:$0xc0] %vm193, %v192
    %s202 = scalar_lea.vmem [#allocation0], 32
    %v203 = vld [vmem:[%s202] sm:$0x3]
    %204 = vrot.lane.b32.xlu0 %v203, 93
    %v205 = vpop.permute.xlu0 %204
    %vm206 = vcmask 39936
    %s207 = scalar_lea.vmem %s1, 135
    %208 = vst.msk [vmem:[%s207] ss:$16 sm:$0x3] %vm206, %v205
    %v209 = vld.sshfl [vmem:[#allocation0] sm:$0xff pattern:$0x99999810]
    %s210 = scalar_lea.vmem [#allocation0], 16
    %v211 = vld.sshfl [vmem:[%s210] sm:$0xff pattern:$0x98100000]
    %vm212 = vcmask 1047556
    %v213 = vsel %vm212, %v211, %v209
    %214 = vrot.lane.b32.xlu0 %v213, 88
    %v215 = vpop.permute.xlu0 %214
    %vm216 = vcmask 39936
    %s217 = scalar_lea.vmem %s1, 8
    %218 = vst.msk [vmem:[%s217] ss:$16 sm:$0x3] %vm216, %v215
    %s219 = scalar_lea.vmem %s1, 8
    %220 = vst.msk [vmem:[%s219] ss:$16 sm:$0xc] %vm216, %v215
    %s221 = scalar_lea.vmem %s1, 8
    %222 = vst.msk [vmem:[%s221] ss:$16 sm:$0x30] %vm216, %v215
    %s223 = scalar_lea.vmem %s1, 8
    %224 = vst.msk [vmem:[%s223] ss:$16 sm:$0xc0] %vm216, %v215
    %s225 = scalar_lea.vmem [#allocation0], 32
    %v226 = vld [vmem:[%s225] sm:$0x3]
    %227 = vrot.lane.b32.xlu0 %v226, 88
    %v228 = vpop.permute.xlu0 %227
    %vm229 = vcmask 39936
    %s230 = scalar_lea.vmem %s1, 136
    %231 = vst.msk [vmem:[%s230] ss:$16 sm:$0x3] %vm229, %v228
    %v232 = vld.sshfl [vmem:[#allocation0] sm:$0xff pattern:$0x99999810]
    %s233 = scalar_lea.vmem [#allocation0], 16
    %v234 = vld.sshfl [vmem:[%s233] sm:$0xff pattern:$0x98100000]
    %vm235 = vcmask 1047556
    %v236 = vsel %vm235, %v234, %v232
    %237 = vrot.lane.b32.xlu0 %v236, 83
    %v238 = vpop.permute.xlu0 %237
    %vm239 = vcmask 39936
    %s240 = scalar_lea.vmem %s1, 9
    %241 = vst.msk [vmem:[%s240] ss:$16 sm:$0x3] %vm239, %v238
    %s242 = scalar_lea.vmem %s1, 9
    %243 = vst.msk [vmem:[%s242] ss:$16 sm:$0xc] %vm239, %v238
    %s244 = scalar_lea.vmem %s1, 9
    %245 = vst.msk [vmem:[%s244] ss:$16 sm:$0x30] %vm239, %v238
    %s246 = scalar_lea.vmem %s1, 9
    %247 = vst.msk [vmem:[%s246] ss:$16 sm:$0xc0] %vm239, %v238
    %s248 = scalar_lea.vmem [#allocation0], 32
    %v249 = vld [vmem:[%s248] sm:$0x3]
    %250 = vrot.lane.b32.xlu0 %v249, 83
    %v251 = vpop.permute.xlu0 %250
    %vm252 = vcmask 39936
    %s253 = scalar_lea.vmem %s1, 137
    %254 = vst.msk [vmem:[%s253] ss:$16 sm:$0x3] %vm252, %v251
    %v255 = vld.sshfl [vmem:[#allocation0] sm:$0xff pattern:$0x99999810]
    %s256 = scalar_lea.vmem [#allocation0], 16
    %v257 = vld.sshfl [vmem:[%s256] sm:$0xff pattern:$0x98100000]
    %vm258 = vcmask 1047556
    %v259 = vsel %vm258, %v257, %v255
    %260 = vrot.lane.b32.xlu0 %v259, 78
    %v261 = vpop.permute.xlu0 %260
    %vm262 = vcmask 39936
    %s263 = scalar_lea.vmem %s1, 10
    %264 = vst.msk [vmem:[%s263] ss:$16 sm:$0x3] %vm262, %v261
    %s265 = scalar_lea.vmem %s1, 10
    %266 = vst.msk [vmem:[%s265] ss:$16 sm:$0xc] %vm262, %v261
    %s267 = scalar_lea.vmem %s1, 10
    %268 = vst.msk [vmem:[%s267] ss:$16 sm:$0x30] %vm262, %v261
    %s269 = scalar_lea.vmem %s1, 10
    %270 = vst.msk [vmem:[%s269] ss:$16 sm:$0xc0] %vm262, %v261
    %s271 = scalar_lea.vmem [#allocation0], 32
    %v272 = vld [vmem:[%s271] sm:$0x3]
    %273 = vrot.lane.b32.xlu0 %v272, 78
    %v274 = vpop.permute.xlu0 %273
    %vm275 = vcmask 39936
    %s276 = scalar_lea.vmem %s1, 138
    %277 = vst.msk [vmem:[%s276] ss:$16 sm:$0x3] %vm275, %v274
    %v278 = vld.sshfl [vmem:[#allocation0] sm:$0xff pattern:$0x99999810]
    %s279 = scalar_lea.vmem [#allocation0], 16
    %v280 = vld.sshfl [vmem:[%s279] sm:$0xff pattern:$0x98100000]
    %vm281 = vcmask 1047556
    %v282 = vsel %vm281, %v280, %v278
    %283 = vrot.lane.b32.xlu0 %v282, 73
    %v284 = vpop.permute.xlu0 %283
    %vm285 = vcmask 39936
    %s286 = scalar_lea.vmem %s1, 11
    %287 = vst.msk [vmem:[%s286] ss:$16 sm:$0x3] %vm285, %v284
    %s288 = scalar_lea.vmem %s1, 11
    %289 = vst.msk [vmem:[%s288] ss:$16 sm:$0xc] %vm285, %v284
    %s290 = scalar_lea.vmem %s1, 11
    %291 = vst.msk [vmem:[%s290] ss:$16 sm:$0x30] %vm285, %v284
    %s292 = scalar_lea.vmem %s1, 11
    %293 = vst.msk [vmem:[%s292] ss:$16 sm:$0xc0] %vm285, %v284
    %s294 = scalar_lea.vmem [#allocation0], 32
    %v295 = vld [vmem:[%s294] sm:$0x3]
    %296 = vrot.lane.b32.xlu0 %v295, 73
    %v297 = vpop.permute.xlu0 %296
    %vm298 = vcmask 39936
    %s299 = scalar_lea.vmem %s1, 139
    %300 = vst.msk [vmem:[%s299] ss:$16 sm:$0x3] %vm298, %v297

// kernel: vision_tower_forward.1
$region0: #{vision_tower_forward.1}
  #allocation0 [shape = 'u32[]', space=smem, size = 0x4, offset = 0x4, fixed_abs, tag = 'smem constant byte address 0x4 - core index']
  #allocation1 [shape = 'u32[144,128]{1,0:T(1,128)}', space=vmem, size = 0x12000, scoped, tag = 'internal scratch']
  #allocation2 [shape = 'f32[5,48]{1,0:T(8,128)}', space=vmem, size = 0x1000, scoped, tag = 'scratch operand']
  %s0 = inlined_call_operand.vmem [shape: f32[2,4,192], index: 0, kind: input, shape index: {}]
  %s1 = inlined_call_operand.vmem [shape: f32[192,48], index: 1, kind: input, shape index: {}]
  %s2 = inlined_call_operand.vmem [shape: f32[1,48], index: 2, kind: input, shape index: {}]
  %s3 = inlined_call_operand.vmem [shape: f32[1,48], index: 3, kind: input, shape index: {}]
  %s4 = inlined_call_operand.vmem [shape: f32[5,48], index: 4, kind: input, shape index: {}]
  %s5 = inlined_call_operand.vmem [shape: f32[1,48], index: 5, kind: input, shape index: {}]
  %s6 = inlined_call_operand.vmem [shape: f32[1,48], index: 6, kind: input, shape index: {}]
  %s7 = inlined_call_operand.vmem [shape: f32[60,5], index: 7, kind: input, shape index: {}]
  %s8 = inlined_call_operand.vmem [shape: f32[60,48], index: 8, kind: input, shape index: {}]
  %s9 = inlined_call_operand.vmem [shape: f32[60,60], index: 9, kind: input, shape index: {}]
  %s10 = inlined_call_operand.vmem [shape: f32[2,1,48], index: 10, kind: input, shape index: {}]
  %s11 = inlined_call_operand.vmem [shape: f32[2,1,48], index: 11, kind: input, shape index: {}]
  %s12 = inlined_call_operand.vmem [shape: f32[2,48,48], index: 12, kind: input, shape index: {}]
  %s13 = inlined_call_operand.vmem [shape: f32[2,1,48], index: 13, kind: input, shape index: {}]
  %s14 = inlined_call_operand.vmem [shape: f32[2,48,48], index: 14, kind: input, shape index: {}]
  %s15 = inlined_call_operand.vmem [shape: f32[2,1,48], index: 15, kind: input, shape index: {}]
  %s16 = inlined_call_operand.vmem [shape: f32[2,48,48], index: 16, kind: input, shape index: {}]
  %s17 = inlined_call_operand.vmem [shape: f32[2,1,48], index: 17, kind: input, shape index: {}]
  %s18 = inlined_call_operand.vmem [shape: f32[2,48,48], index: 18, kind: input, shape index: {}]
  %s19 = inlined_call_operand.vmem [shape: f32[2,1,48], index: 19, kind: input, shape index: {}]
  %s20 = inlined_call_operand.vmem [shape: f32[2,1,48], index: 20, kind: input, shape index: {}]
  %s21 = inlined_call_operand.vmem [shape: f32[2,1,48], index: 21, kind: input, shape index: {}]
  %s22 = inlined_call_operand.vmem [shape: f32[2,48,192], index: 22, kind: input, shape index: {}]
  %s23 = inlined_call_operand.vmem [shape: f32[2,1,192], index: 23, kind: input, shape index: {}]
  %s24 = inlined_call_operand.vmem [shape: f32[2,192,48], index: 24, kind: input, shape index: {}]
  %s25 = inlined_call_operand.vmem [shape: f32[2,1,48], index: 25, kind: input, shape index: {}]
  %s26 = inlined_call_operand.vmem [shape: f32[2,5,48], index: 26, kind: output, shape index: {0}]
  %s27 = inlined_call_operand.vmem [shape: f32[2,2,5,48], index: 27, kind: output, shape index: {1}]
  %s28 = inlined_call_operand.vmem [shape: f32[2,2,5,60], index: 28, kind: output, shape index: {2}]
  %29 = xla_tuple %s26, %s27, %s28
  %s30 = sld [smem:[#allocation0]]
  $region157: #{vision_tower_forward.1} parent=0
    _
  %s32 = ssub.s32 1, %s30
  %s33 = scalar_select 0, %s32, %s30
  loop: start=0, step=1, limit=6
  $region2: #{vision_tower_forward.1} parent=0 // loop_pre_header
    _
  $region3: #{vision_tower_forward.1} parent=0 // loop_header
    %s35 = sphi 0, %s39
    %p36 = scmp.ge.s32.totalorder %s35, 6
    %s42 = sphi 0, %s54
    %s43 = sphi 0, %s50
    %s44 = sphi 0, %s42
    %s45 = sphi 0, %s43
    %s46 = sphi 0, %s44
    %s47 = sphi 0, %s45
    %s57 = sphi 0, %s59
    %s60 = sphi 0, %s57
    %s61 = sphi 0, %s60
    %s77 = sphi 0, %s61
    %s81 = sphi 0, %s81
    %s83 = sphi 0, %s81
    %s84 = sphi 0, %s83
    %s98 = sphi 0, %s84
    %s102 = sphi 0, %s102
    %s104 = sphi 0, %s102
    %s105 = sphi 0, %s104
    %s119 = sphi 0, %s105
    %s123 = sphi 0, %s123
    %s125 = sphi 0, %s123
    %s126 = sphi 0, %s125
    %s140 = sphi 0, %s126
    %s144 = sphi 0, %s144
    %s146 = sphi 0, %s144
    %s147 = sphi 0, %s146
    %s161 = sphi 0, %s147
    %s165 = sphi 0, %s165
    %s167 = sphi 0, %s165
    %s168 = sphi 0, %s167
    %s182 = sphi 0, %s168
    %s186 = sphi 0, %s186
    %s188 = sphi 0, %s186
    %s189 = sphi 0, %s188
    %s203 = sphi 0, %s189
    %s207 = sphi 0, %s207
    %s209 = sphi 0, %s207
    %s210 = sphi 0, %s209
    %s224 = sphi 0, %s210
    %s228 = sphi 0, %s228
    %s230 = sphi 0, %s228
    %s231 = sphi 0, %s230
    %s245 = sphi 0, %s231
    %s249 = sphi 0, %s249
    %s251 = sphi 0, %s249
    %s252 = sphi 0, %s251
    %s266 = sphi 0, %s252
    %s270 = sphi 0, %s270
    %s272 = sphi 0, %s270
    %s273 = sphi 0, %s272
    %s287 = sphi 0, %s273
    %s291 = sphi 0, %s291
    %s293 = sphi 0, %s291
    %s294 = sphi 0, %s293
    %s308 = sphi 0, %s294
    %s312 = sphi 0, %s312
    %s314 = sphi 0, %s312
    %s315 = sphi 0, %s314
    %s329 = sphi 0, %s315
    %s333 = sphi 0, %s333
    %s335 = sphi 0, %s333
    %s336 = sphi 0, %s335
    %s350 = sphi 0, %s336
    %s354 = sphi 0, %s354
    %s356 = sphi 0, %s354
    %s357 = sphi 0, %s356
    %s371 = sphi 0, %s357
    %s375 = sphi 0, %s375
    %s377 = sphi 0, %s375
    %s378 = sphi 0, %s377
    %s392 = sphi 0, %s378
    %s396 = sphi 0, %s396
    %s398 = sphi 0, %s396
    %s399 = sphi 0, %s398
    %s413 = sphi 0, %s399
    %s417 = sphi 0, %s417
    %s419 = sphi 0, %s417
    %s420 = sphi 0, %s419
    %s434 = sphi 0, %s420
    %s438 = sphi 0, %s438
    %s440 = sphi 0, %s438
    %s441 = sphi 0, %s440
    %s455 = sphi 0, %s441
    %s459 = sphi 0, %s459
    %s461 = sphi 0, %s459
    %s462 = sphi 0, %s461
    %s476 = sphi 0, %s462
    %s480 = sphi 0, %s480
    %s482 = sphi 0, %s480
    %s483 = sphi 0, %s482
    %s497 = sphi 0, %s483
    %s501 = sphi 0, %s501
    %s503 = sphi 0, %s501
    %s504 = sphi 0, %s503
    %s518 = sphi 0, %s504
    %s522 = sphi 0, %s522
    %s524 = sphi 0, %s522
    %s525 = sphi 0, %s524
    %s539 = sphi 0, %s525
    %s543 = sphi 0, %s543
    %s545 = sphi 0, %s543
    %s546 = sphi 0, %s545
    %s560 = sphi 0, %s546
    %s564 = sphi 0, %s564
    %s566 = sphi 0, %s564
    %s567 = sphi 0, %s566
    %s581 = sphi 0, %s567
    %s585 = sphi 0, %s585
    %s587 = sphi 0, %s585
    %s588 = sphi 0, %s587
    %s602 = sphi 0, %s588
    %s608 = sphi 0, %s610
    %s611 = sphi 0, %s608
    %s612 = sphi 0, %s611
    %s628 = sphi 0, %s612
    %s636 = sphi 0, %s638
    %s639 = sphi 0, %s636
    %s640 = sphi 0, %s639
    %s656 = sphi 0, %s640
    %s664 = sphi 0, %s666
    %s667 = sphi 0, %s664
    %s668 = sphi 0, %s667
    %s684 = sphi 0, %s668
  $region4: #{vision_tower_forward.1} parent=0 // loop_header_branch
    %38 = sbr.rel (%p36) target = $region8
  $region5: #{vision_tower_forward.1} parent=0 // loop_body
    %s40 = ssub.s32 %s35, 1
    %s41 = ssub.s32 %s35, 2
    %s48 = sadd.s32 1, %s43
    %p49 = scmp.ge.s32.totalorder %s48, 2
    %s50 = scalar_select %p49, 0, %s48
    %s51 = sadd.s32 1, %s42
    %s52 = scalar_select %p49, %s51, %s42
    %p53 = scmp.ge.s32.totalorder %s52, 2
    %s54 = scalar_select %p53, 0, %s52
    %s55 = ssub.s32 %s42, %s54
    %p56 = scmp.eq.s32.totalorder %s55, 0
    %s58 = sadd.s32 %s57, 1
    %s59 = scalar_select %p56, %s57, %s58
    %p62 = pneg %p56
    %p63 = scmp.eq.s32.totalorder %s35, 3
    %p64 = por %p62, %p63
    %p65 = scmp.ne.s32.totalorder %s57, %s60
    %p66 = scmp.eq.s32.totalorder %s35, 0
    %p67 = por %p65, %p66
    %p68 = scmp.ne.s32.totalorder %s57, %s60
    %p69 = scmp.eq.s32.totalorder %s40, 3
    %p70 = por %p68, %p69
    %p71 = scmp.ne.s32.totalorder %s60, %s61
    %p72 = scmp.eq.s32.totalorder %s40, 0
    %p73 = por %p71, %p72
    %p74 = scmp.ne.s32.totalorder %s60, %s61
    %p75 = scmp.eq.s32.totalorder %s41, 3
    %p76 = por %p74, %p75
    %p78 = scmp.ne.s32.totalorder %s61, %s77
    %p79 = scmp.eq.s32.totalorder %s41, 0
    %p80 = por %p78, %p79
    %s82 = sadd.s32 %s81, 1
    %p85 = scmp.eq.s32.totalorder %s35, 3
    %p86 = scmp.ne.s32.totalorder %s81, %s83
    %p87 = scmp.eq.s32.totalorder %s35, 0
    %p88 = por %p86, %p87
    %p89 = scmp.ne.s32.totalorder %s81, %s83
    %p90 = scmp.eq.s32.totalorder %s40, 3
    %p91 = por %p89, %p90
    %p92 = scmp.ne.s32.totalorder %s83, %s84
    %p93 = scmp.eq.s32.totalorder %s40, 0
    %p94 = por %p92, %p93
    %p95 = scmp.ne.s32.totalorder %s83, %s84
    %p96 = scmp.eq.s32.totalorder %s41, 3
    %p97 = por %p95, %p96
    %p99 = scmp.ne.s32.totalorder %s84, %s98
    %p100 = scmp.eq.s32.totalorder %s41, 0
    %p101 = por %p99, %p100
    %s103 = sadd.s32 %s102, 1
    %p106 = scmp.eq.s32.totalorder %s35, 3
    %p107 = scmp.ne.s32.totalorder %s102, %s104
    %p108 = scmp.eq.s32.totalorder %s35, 0
    %p109 = por %p107, %p108
    %p110 = scmp.ne.s32.totalorder %s102, %s104
    %p111 = scmp.eq.s32.totalorder %s40, 3
    %p112 = por %p110, %p111
    %p113 = scmp.ne.s32.totalorder %s104, %s105
    %p114 = scmp.eq.s32.totalorder %s40, 0
    %p115 = por %p113, %p114
    %p116 = scmp.ne.s32.totalorder %s104, %s105
    %p117 = scmp.eq.s32.totalorder %s41, 3
    %p118 = por %p116, %p117
    %p120 = scmp.ne.s32.totalorder %s105, %s119
    %p121 = scmp.eq.s32.totalorder %s41, 0
    %p122 = por %p120, %p121
    %s124 = sadd.s32 %s123, 1
    %p127 = scmp.eq.s32.totalorder %s35, 3
    %p128 = scmp.ne.s32.totalorder %s123, %s125
    %p129 = scmp.eq.s32.totalorder %s35, 0
    %p130 = por %p128, %p129
    %p131 = scmp.ne.s32.totalorder %s123, %s125
    %p132 = scmp.eq.s32.totalorder %s40, 3
    %p133 = por %p131, %p132
    %p134 = scmp.ne.s32.totalorder %s125, %s126
    %p135 = scmp.eq.s32.totalorder %s40, 0
    %p136 = por %p134, %p135
    %p137 = scmp.ne.s32.totalorder %s125, %s126
    %p138 = scmp.eq.s32.totalorder %s41, 3
    %p139 = por %p137, %p138
    %p141 = scmp.ne.s32.totalorder %s126, %s140
    %p142 = scmp.eq.s32.totalorder %s41, 0
    %p143 = por %p141, %p142
    %s145 = sadd.s32 %s144, 1
    %p148 = scmp.eq.s32.totalorder %s35, 3
    %p149 = scmp.ne.s32.totalorder %s144, %s146
    %p150 = scmp.eq.s32.totalorder %s35, 0
    %p151 = por %p149, %p150
    %p152 = scmp.ne.s32.totalorder %s144, %s146
    %p153 = scmp.eq.s32.totalorder %s40, 3
    %p154 = por %p152, %p153
    %p155 = scmp.ne.s32.totalorder %s146, %s147
    %p156 = scmp.eq.s32.totalorder %s40, 0
    %p157 = por %p155, %p156
    %p158 = scmp.ne.s32.totalorder %s146, %s147
    %p159 = scmp.eq.s32.totalorder %s41, 3
    %p160 = por %p158, %p159
    %p162 = scmp.ne.s32.totalorder %s147, %s161
    %p163 = scmp.eq.s32.totalorder %s41, 0
    %p164 = por %p162, %p163
    %s166 = sadd.s32 %s165, 1
    %p169 = scmp.eq.s32.totalorder %s35, 3
    %p170 = scmp.ne.s32.totalorder %s165, %s167
    %p171 = scmp.eq.s32.totalorder %s35, 0
    %p172 = por %p170, %p171
    %p173 = scmp.ne.s32.totalorder %s165, %s167
    %p174 = scmp.eq.s32.totalorder %s40, 3
    %p175 = por %p173, %p174
    %p176 = scmp.ne.s32.totalorder %s167, %s168
    %p177 = scmp.eq.s32.totalorder %s40, 0
    %p178 = por %p176, %p177
    %p179 = scmp.ne.s32.totalorder %s167, %s168
    %p180 = scmp.eq.s32.totalorder %s41, 3
    %p181 = por %p179, %p180
    %p183 = scmp.ne.s32.totalorder %s168, %s182
    %p184 = scmp.eq.s32.totalorder %s41, 0
    %p185 = por %p183, %p184
    %s187 = sadd.s32 %s186, 1
    %p190 = scmp.eq.s32.totalorder %s35, 3
    %p191 = scmp.ne.s32.totalorder %s186, %s188
    %p192 = scmp.eq.s32.totalorder %s35, 0
    %p193 = por %p191, %p192
    %p194 = scmp.ne.s32.totalorder %s186, %s188
    %p195 = scmp.eq.s32.totalorder %s40, 3
    %p196 = por %p194, %p195
    %p197 = scmp.ne.s32.totalorder %s188, %s189
    %p198 = scmp.eq.s32.totalorder %s40, 0
    %p199 = por %p197, %p198
    %p200 = scmp.ne.s32.totalorder %s188, %s189
    %p201 = scmp.eq.s32.totalorder %s41, 3
    %p202 = por %p200, %p201
    %p204 = scmp.ne.s32.totalorder %s189, %s203
    %p205 = scmp.eq.s32.totalorder %s41, 0
    %p206 = por %p204, %p205
    %s208 = sadd.s32 %s207, 1
    %p211 = scmp.eq.s32.totalorder %s35, 3
    %p212 = scmp.ne.s32.totalorder %s207, %s209
    %p213 = scmp.eq.s32.totalorder %s35, 0
    %p214 = por %p212, %p213
    %p215 = scmp.ne.s32.totalorder %s207, %s209
    %p216 = scmp.eq.s32.totalorder %s40, 3
    %p217 = por %p215, %p216
    %p218 = scmp.ne.s32.totalorder %s209, %s210
    %p219 = scmp.eq.s32.totalorder %s40, 0
    %p220 = por %p218, %p219
    %p221 = scmp.ne.s32.totalorder %s209, %s210
    %p222 = scmp.eq.s32.totalorder %s41, 3
    %p223 = por %p221, %p222
    %p225 = scmp.ne.s32.totalorder %s210, %s224
    %p226 = scmp.eq.s32.totalorder %s41, 0
    %p227 = por %p225, %p226
    %s229 = sadd.s32 %s228, 1
    %p232 = scmp.eq.s32.totalorder %s35, 3
    %p233 = scmp.ne.s32.totalorder %s228, %s230
    %p234 = scmp.eq.s32.totalorder %s35, 0
    %p235 = por %p233, %p234
    %p236 = scmp.ne.s32.totalorder %s228, %s230
    %p237 = scmp.eq.s32.totalorder %s40, 3
    %p238 = por %p236, %p237
    %p239 = scmp.ne.s32.totalorder %s230, %s231
    %p240 = scmp.eq.s32.totalorder %s40, 0
    %p241 = por %p239, %p240
    %p242 = scmp.ne.s32.totalorder %s230, %s231
    %p243 = scmp.eq.s32.totalorder %s41, 3
    %p244 = por %p242, %p243
    %p246 = scmp.ne.s32.totalorder %s231, %s245
    %p247 = scmp.eq.s32.totalorder %s41, 0
    %p248 = por %p246, %p247
    %s250 = sadd.s32 %s249, 1
    %p253 = scmp.eq.s32.totalorder %s35, 3
    %p254 = scmp.ne.s32.totalorder %s249, %s251
    %p255 = scmp.eq.s32.totalorder %s35, 0
    %p256 = por %p254, %p255
    %p257 = scmp.ne.s32.totalorder %s249, %s251
    %p258 = scmp.eq.s32.totalorder %s40, 3
    %p259 = por %p257, %p258
    %p260 = scmp.ne.s32.totalorder %s251, %s252
    %p261 = scmp.eq.s32.totalorder %s40, 0
    %p262 = por %p260, %p261
    %p263 = scmp.ne.s32.totalorder %s251, %s252
    %p264 = scmp.eq.s32.totalorder %s41, 3
    %p265 = por %p263, %p264
    %p267 = scmp.ne.s32.totalorder %s252, %s266
    %p268 = scmp.eq.s32.totalorder %s41, 0
    %p269 = por %p267, %p268
    %s271 = sadd.s32 %s270, 1
    %p274 = scmp.eq.s32.totalorder %s35, 3
    %p275 = scmp.ne.s32.totalorder %s270, %s272
    %p276 = scmp.eq.s32.totalorder %s35, 0
    %p277 = por %p275, %p276
    %p278 = scmp.ne.s32.totalorder %s270, %s272
    %p279 = scmp.eq.s32.totalorder %s40, 3
    %p280 = por %p278, %p279
    %p281 = scmp.ne.s32.totalorder %s272, %s273
    %p282 = scmp.eq.s32.totalorder %s40, 0
    %p283 = por %p281, %p282
    %p284 = scmp.ne.s32.totalorder %s272, %s273
    %p285 = scmp.eq.s32.totalorder %s41, 3
    %p286 = por %p284, %p285
    %p288 = scmp.ne.s32.totalorder %s273, %s287
    %p289 = scmp.eq.s32.totalorder %s41, 0
    %p290 = por %p288, %p289
    %s292 = sadd.s32 %s291, 1
    %p295 = scmp.eq.s32.totalorder %s35, 3
    %p296 = scmp.ne.s32.totalorder %s291, %s293
    %p297 = scmp.eq.s32.totalorder %s35, 0
    %p298 = por %p296, %p297
    %p299 = scmp.ne.s32.totalorder %s291, %s293
    %p300 = scmp.eq.s32.totalorder %s40, 3
    %p301 = por %p299, %p300
    %p302 = scmp.ne.s32.totalorder %s293, %s294
    %p303 = scmp.eq.s32.totalorder %s40, 0
    %p304 = por %p302, %p303
    %p305 = scmp.ne.s32.totalorder %s293, %s294
    %p306 = scmp.eq.s32.totalorder %s41, 3
    %p307 = por %p305, %p306
    %p309 = scmp.ne.s32.totalorder %s294, %s308
    %p310 = scmp.eq.s32.totalorder %s41, 0
    %p311 = por %p309, %p310
    %s313 = sadd.s32 %s312, 1
    %p316 = scmp.eq.s32.totalorder %s35, 3
    %p317 = scmp.ne.s32.totalorder %s312, %s314
    %p318 = scmp.eq.s32.totalorder %s35, 0
    %p319 = por %p317, %p318
    %p320 = scmp.ne.s32.totalorder %s312, %s314
    %p321 = scmp.eq.s32.totalorder %s40, 3
    %p322 = por %p320, %p321
    %p323 = scmp.ne.s32.totalorder %s314, %s315
    %p324 = scmp.eq.s32.totalorder %s40, 0
    %p325 = por %p323, %p324
    %p326 = scmp.ne.s32.totalorder %s314, %s315
    %p327 = scmp.eq.s32.totalorder %s41, 3
    %p328 = por %p326, %p327
    %p330 = scmp.ne.s32.totalorder %s315, %s329
    %p331 = scmp.eq.s32.totalorder %s41, 0
    %p332 = por %p330, %p331
    %s334 = sadd.s32 %s333, 1
    %p337 = scmp.eq.s32.totalorder %s35, 3
    %p338 = scmp.ne.s32.totalorder %s333, %s335
    %p339 = scmp.eq.s32.totalorder %s35, 0
    %p340 = por %p338, %p339
    %p341 = scmp.ne.s32.totalorder %s333, %s335
    %p342 = scmp.eq.s32.totalorder %s40, 3
    %p343 = por %p341, %p342
    %p344 = scmp.ne.s32.totalorder %s335, %s336
    %p345 = scmp.eq.s32.totalorder %s40, 0
    %p346 = por %p344, %p345
    %p347 = scmp.ne.s32.totalorder %s335, %s336
    %p348 = scmp.eq.s32.totalorder %s41, 3
    %p349 = por %p347, %p348
    %p351 = scmp.ne.s32.totalorder %s336, %s350
    %p352 = scmp.eq.s32.totalorder %s41, 0
    %p353 = por %p351, %p352
    %s355 = sadd.s32 %s354, 1
    %p358 = scmp.eq.s32.totalorder %s35, 3
    %p359 = scmp.ne.s32.totalorder %s354, %s356
    %p360 = scmp.eq.s32.totalorder %s35, 0
    %p361 = por %p359, %p360
    %p362 = scmp.ne.s32.totalorder %s354, %s356
    %p363 = scmp.eq.s32.totalorder %s40, 3
    %p364 = por %p362, %p363
    %p365 = scmp.ne.s32.totalorder %s356, %s357
    %p366 = scmp.eq.s32.totalorder %s40, 0
    %p367 = por %p365, %p366
    %p368 = scmp.ne.s32.totalorder %s356, %s357
    %p369 = scmp.eq.s32.totalorder %s41, 3
    %p370 = por %p368, %p369
    %p372 = scmp.ne.s32.totalorder %s357, %s371
    %p373 = scmp.eq.s32.totalorder %s41, 0
    %p374 = por %p372, %p373
    %s376 = sadd.s32 %s375, 1
    %p379 = scmp.eq.s32.totalorder %s35, 3
    %p380 = scmp.ne.s32.totalorder %s375, %s377
    %p381 = scmp.eq.s32.totalorder %s35, 0
    %p382 = por %p380, %p381
    %p383 = scmp.ne.s32.totalorder %s375, %s377
    %p384 = scmp.eq.s32.totalorder %s40, 3
    %p385 = por %p383, %p384
    %p386 = scmp.ne.s32.totalorder %s377, %s378
    %p387 = scmp.eq.s32.totalorder %s40, 0
    %p388 = por %p386, %p387
    %p389 = scmp.ne.s32.totalorder %s377, %s378
    %p390 = scmp.eq.s32.totalorder %s41, 3
    %p391 = por %p389, %p390
    %p393 = scmp.ne.s32.totalorder %s378, %s392
    %p394 = scmp.eq.s32.totalorder %s41, 0
    %p395 = por %p393, %p394
    %s397 = sadd.s32 %s396, 1
    %p400 = scmp.eq.s32.totalorder %s35, 3
    %p401 = scmp.ne.s32.totalorder %s396, %s398
    %p402 = scmp.eq.s32.totalorder %s35, 0
    %p403 = por %p401, %p402
    %p404 = scmp.ne.s32.totalorder %s396, %s398
    %p405 = scmp.eq.s32.totalorder %s40, 3
    %p406 = por %p404, %p405
    %p407 = scmp.ne.s32.totalorder %s398, %s399
    %p408 = scmp.eq.s32.totalorder %s40, 0
    %p409 = por %p407, %p408
    %p410 = scmp.ne.s32.totalorder %s398, %s399
    %p411 = scmp.eq.s32.totalorder %s41, 3
    %p412 = por %p410, %p411
    %p414 = scmp.ne.s32.totalorder %s399, %s413
    %p415 = scmp.eq.s32.totalorder %s41, 0
    %p416 = por %p414, %p415
    %s418 = sadd.s32 %s417, 1
    %p421 = scmp.eq.s32.totalorder %s35, 3
    %p422 = scmp.ne.s32.totalorder %s417, %s419
    %p423 = scmp.eq.s32.totalorder %s35, 0
    %p424 = por %p422, %p423
    %p425 = scmp.ne.s32.totalorder %s417, %s419
    %p426 = scmp.eq.s32.totalorder %s40, 3
    %p427 = por %p425, %p426
    %p428 = scmp.ne.s32.totalorder %s419, %s420
    %p429 = scmp.eq.s32.totalorder %s40, 0
    %p430 = por %p428, %p429
    %p431 = scmp.ne.s32.totalorder %s419, %s420
    %p432 = scmp.eq.s32.totalorder %s41, 3
    %p433 = por %p431, %p432
    %p435 = scmp.ne.s32.totalorder %s420, %s434
    %p436 = scmp.eq.s32.totalorder %s41, 0
    %p437 = por %p435, %p436
    %s439 = sadd.s32 %s438, 1
    %p442 = scmp.eq.s32.totalorder %s35, 3
    %p443 = scmp.ne.s32.totalorder %s438, %s440
    %p444 = scmp.eq.s32.totalorder %s35, 0
    %p445 = por %p443, %p444
    %p446 = scmp.ne.s32.totalorder %s438, %s440
    %p447 = scmp.eq.s32.totalorder %s40, 3
    %p448 = por %p446, %p447
    %p449 = scmp.ne.s32.totalorder %s440, %s441
    %p450 = scmp.eq.s32.totalorder %s40, 0
    %p451 = por %p449, %p450
    %p452 = scmp.ne.s32.totalorder %s440, %s441
    %p453 = scmp.eq.s32.totalorder %s41, 3
    %p454 = por %p452, %p453
    %p456 = scmp.ne.s32.totalorder %s441, %s455
    %p457 = scmp.eq.s32.totalorder %s41, 0
    %p458 = por %p456, %p457
    %s460 = sadd.s32 %s459, 1
    %p463 = scmp.eq.s32.totalorder %s35, 3
    %p464 = scmp.ne.s32.totalorder %s459, %s461
    %p465 = scmp.eq.s32.totalorder %s35, 0
    %p466 = por %p464, %p465
    %p467 = scmp.ne.s32.totalorder %s459, %s461
    %p468 = scmp.eq.s32.totalorder %s40, 3
    %p469 = por %p467, %p468
    %p470 = scmp.ne.s32.totalorder %s461, %s462
    %p471 = scmp.eq.s32.totalorder %s40, 0
    %p472 = por %p470, %p471
    %p473 = scmp.ne.s32.totalorder %s461, %s462
    %p474 = scmp.eq.s32.totalorder %s41, 3
    %p475 = por %p473, %p474
    %p477 = scmp.ne.s32.totalorder %s462, %s476
    %p478 = scmp.eq.s32.totalorder %s41, 0
    %p479 = por %p477, %p478
    %s481 = sadd.s32 %s480, 1
    %p484 = scmp.eq.s32.totalorder %s35, 3
    %p485 = scmp.ne.s32.totalorder %s480, %s482
    %p486 = scmp.eq.s32.totalorder %s35, 0
    %p487 = por %p485, %p486
    %p488 = scmp.ne.s32.totalorder %s480, %s482
    %p489 = scmp.eq.s32.totalorder %s40, 3
    %p490 = por %p488, %p489
    %p491 = scmp.ne.s32.totalorder %s482, %s483
    %p492 = scmp.eq.s32.totalorder %s40, 0
    %p493 = por %p491, %p492
    %p494 = scmp.ne.s32.totalorder %s482, %s483
    %p495 = scmp.eq.s32.totalorder %s41, 3
    %p496 = por %p494, %p495
    %p498 = scmp.ne.s32.totalorder %s483, %s497
    %p499 = scmp.eq.s32.totalorder %s41, 0
    %p500 = por %p498, %p499
    %s502 = sadd.s32 %s501, 1
    %p505 = scmp.eq.s32.totalorder %s35, 3
    %p506 = scmp.ne.s32.totalorder %s501, %s503
    %p507 = scmp.eq.s32.totalorder %s35, 0
    %p508 = por %p506, %p507
    %p509 = scmp.ne.s32.totalorder %s501, %s503
    %p510 = scmp.eq.s32.totalorder %s40, 3
    %p511 = por %p509, %p510
    %p512 = scmp.ne.s32.totalorder %s503, %s504
    %p513 = scmp.eq.s32.totalorder %s40, 0
    %p514 = por %p512, %p513
    %p515 = scmp.ne.s32.totalorder %s503, %s504
    %p516 = scmp.eq.s32.totalorder %s41, 3
    %p517 = por %p515, %p516
    %p519 = scmp.ne.s32.totalorder %s504, %s518
    %p520 = scmp.eq.s32.totalorder %s41, 0
    %p521 = por %p519, %p520
    %s523 = sadd.s32 %s522, 1
    %p526 = scmp.eq.s32.totalorder %s35, 3
    %p527 = scmp.ne.s32.totalorder %s522, %s524
    %p528 = scmp.eq.s32.totalorder %s35, 0
    %p529 = por %p527, %p528
    %p530 = scmp.ne.s32.totalorder %s522, %s524
    %p531 = scmp.eq.s32.totalorder %s40, 3
    %p532 = por %p530, %p531
    %p533 = scmp.ne.s32.totalorder %s524, %s525
    %p534 = scmp.eq.s32.totalorder %s40, 0
    %p535 = por %p533, %p534
    %p536 = scmp.ne.s32.totalorder %s524, %s525
    %p537 = scmp.eq.s32.totalorder %s41, 3
    %p538 = por %p536, %p537
    %p540 = scmp.ne.s32.totalorder %s525, %s539
    %p541 = scmp.eq.s32.totalorder %s41, 0
    %p542 = por %p540, %p541
    %s544 = sadd.s32 %s543, 1
    %p547 = scmp.eq.s32.totalorder %s35, 3
    %p548 = scmp.ne.s32.totalorder %s543, %s545
    %p549 = scmp.eq.s32.totalorder %s35, 0
    %p550 = por %p548, %p549
    %p551 = scmp.ne.s32.totalorder %s543, %s545
    %p552 = scmp.eq.s32.totalorder %s40, 3
    %p553 = por %p551, %p552
    %p554 = scmp.ne.s32.totalorder %s545, %s546
    %p555 = scmp.eq.s32.totalorder %s40, 0
    %p556 = por %p554, %p555
    %p557 = scmp.ne.s32.totalorder %s545, %s546
    %p558 = scmp.eq.s32.totalorder %s41, 3
    %p559 = por %p557, %p558
    %p561 = scmp.ne.s32.totalorder %s546, %s560
    %p562 = scmp.eq.s32.totalorder %s41, 0
    %p563 = por %p561, %p562
    %s565 = sadd.s32 %s564, 1
    %p568 = scmp.eq.s32.totalorder %s35, 3
    %p569 = scmp.ne.s32.totalorder %s564, %s566
    %p570 = scmp.eq.s32.totalorder %s35, 0
    %p571 = por %p569, %p570
    %p572 = scmp.ne.s32.totalorder %s564, %s566
    %p573 = scmp.eq.s32.totalorder %s40, 3
    %p574 = por %p572, %p573
    %p575 = scmp.ne.s32.totalorder %s566, %s567
    %p576 = scmp.eq.s32.totalorder %s40, 0
    %p577 = por %p575, %p576
    %p578 = scmp.ne.s32.totalorder %s566, %s567
    %p579 = scmp.eq.s32.totalorder %s41, 3
    %p580 = por %p578, %p579
    %p582 = scmp.ne.s32.totalorder %s567, %s581
    %p583 = scmp.eq.s32.totalorder %s41, 0
    %p584 = por %p582, %p583
    %s586 = sadd.s32 %s585, 1
    %p589 = scmp.eq.s32.totalorder %s35, 3
    %p590 = scmp.ne.s32.totalorder %s585, %s587
    %p591 = scmp.eq.s32.totalorder %s35, 0
    %p592 = por %p590, %p591
    %p593 = scmp.ne.s32.totalorder %s585, %s587
    %p594 = scmp.eq.s32.totalorder %s40, 3
    %p595 = por %p593, %p594
    %p596 = scmp.ne.s32.totalorder %s587, %s588
    %p597 = scmp.eq.s32.totalorder %s40, 0
    %p598 = por %p596, %p597
    %p599 = scmp.ne.s32.totalorder %s587, %s588
    %p600 = scmp.eq.s32.totalorder %s41, 3
    %p601 = por %p599, %p600
    %p603 = scmp.ne.s32.totalorder %s588, %s602
    %p604 = scmp.eq.s32.totalorder %s41, 0
    %p605 = por %p603, %p604
    %s606 = ssub.s32 %s42, %s54
    %p607 = scmp.eq.s32.totalorder %s606, 0
    %s609 = sadd.s32 %s608, 1
    %s610 = scalar_select %p607, %s608, %s609
    %p613 = pneg %p607
    %p614 = scmp.eq.s32.totalorder %s35, 3
    %p615 = por %p613, %p614
    %p616 = scmp.ne.s32.totalorder %s608, %s611
    %p617 = scmp.eq.s32.totalorder %s35, 0
    %p618 = por %p616, %p617
    %p619 = scmp.ne.s32.totalorder %s608, %s611
    %p620 = scmp.eq.s32.totalorder %s40, 3
    %p621 = por %p619, %p620
    %p622 = scmp.ne.s32.totalorder %s611, %s612
    %p623 = scmp.eq.s32.totalorder %s40, 0
    %p624 = por %p622, %p623
    %p625 = scmp.ne.s32.totalorder %s611, %s612
    %p626 = scmp.eq.s32.totalorder %s41, 3
    %p627 = por %p625, %p626
    %p629 = scmp.ne.s32.totalorder %s612, %s628
    %p630 = scmp.eq.s32.totalorder %s41, 0
    %p631 = por %p629, %p630
    %s632 = ssub.s32 %s43, %s50
    %s633 = ssub.s32 %s42, %s54
    %s634 = sor.u32 %s632, %s633
    %p635 = scmp.eq.s32.totalorder %s634, 0
    %s637 = sadd.s32 %s636, 1
    %s638 = scalar_select %p635, %s636, %s637
    %p641 = pneg %p635
    %p642 = scmp.eq.s32.totalorder %s35, 3
    %p643 = por %p641, %p642
    %p644 = scmp.ne.s32.totalorder %s636, %s639
    %p645 = scmp.eq.s32.totalorder %s35, 0
    %p646 = por %p644, %p645
    %p647 = scmp.ne.s32.totalorder %s636, %s639
    %p648 = scmp.eq.s32.totalorder %s40, 3
    %p649 = por %p647, %p648
    %p650 = scmp.ne.s32.totalorder %s639, %s640
    %p651 = scmp.eq.s32.totalorder %s40, 0
    %p652 = por %p650, %p651
    %p653 = scmp.ne.s32.totalorder %s639, %s640
    %p654 = scmp.eq.s32.totalorder %s41, 3
    %p655 = por %p653, %p654
    %p657 = scmp.ne.s32.totalorder %s640, %s656
    %p658 = scmp.eq.s32.totalorder %s41, 0
    %p659 = por %p657, %p658
    %s660 = ssub.s32 %s43, %s50
    %s661 = ssub.s32 %s42, %s54
    %s662 = sor.u32 %s660, %s661
    %p663 = scmp.eq.s32.totalorder %s662, 0
    %s665 = sadd.s32 %s664, 1
    %s666 = scalar_select %p663, %s664, %s665
    %p669 = pneg %p663
    %p670 = scmp.eq.s32.totalorder %s35, 3
    %p671 = por %p669, %p670
    %p672 = scmp.ne.s32.totalorder %s664, %s667
    %p673 = scmp.eq.s32.totalorder %s35, 0
    %p674 = por %p672, %p673
    %p675 = scmp.ne.s32.totalorder %s664, %s667
    %p676 = scmp.eq.s32.totalorder %s40, 3
    %p677 = por %p675, %p676
    %p678 = scmp.ne.s32.totalorder %s667, %s668
    %p679 = scmp.eq.s32.totalorder %s40, 0
    %p680 = por %p678, %p679
    %p681 = scmp.ne.s32.totalorder %s667, %s668
    %p682 = scmp.eq.s32.totalorder %s41, 3
    %p683 = por %p681, %p682
    %p685 = scmp.ne.s32.totalorder %s668, %s684
    %p686 = scmp.eq.s32.totalorder %s41, 0
    %p687 = por %p685, %p686
    %p688 = scmp.le.s32.totalorder 1, %s35
    %p689 = scmp.lt.s32.totalorder %s35, 5
    %p690 = pnand %p688, %p689
    %p691 = pneg %p690
    // Predicated region
    $region9: #{vision_tower_forward.1} parent=5 // pred_check
      _
    $region10: #{vision_tower_forward.1} parent=5 // pred_check_branch
      %693 = sbr.rel (%p690) target = $region12
    $region11: #{vision_tower_forward.1} parent=5 // pred_region
      %s694 = ssub.s32 %s35, 1
      // Predicated region
      $region13: #{vision_tower_forward.1} parent=11 // pred_check
        %p695 = pneg %p94
      $region14: #{vision_tower_forward.1} parent=11 // pred_check_branch
        %697 = sbr.rel (%p695) target = $region16
      $region15: #{vision_tower_forward.1} parent=11 // pred_region
        _
      $region16: #{vision_tower_forward.1} parent=11 // pred_fallthru
        _
      // Predicated region
      $region17: #{vision_tower_forward.1} parent=11 // pred_check
        %p698 = pneg %p115
      $region18: #{vision_tower_forward.1} parent=11 // pred_check_branch
        %700 = sbr.rel (%p698) target = $region20
      $region19: #{vision_tower_forward.1} parent=11 // pred_region
        _
      $region20: #{vision_tower_forward.1} parent=11 // pred_fallthru
        _
      // Predicated region
      $region21: #{vision_tower_forward.1} parent=11 // pred_check
        %p701 = pneg %p136
      $region22: #{vision_tower_forward.1} parent=11 // pred_check_branch
        %703 = sbr.rel (%p701) target = $region24
      $region23: #{vision_tower_forward.1} parent=11 // pred_region
        _
      $region24: #{vision_tower_forward.1} parent=11 // pred_fallthru
        _
      // Predicated region
      $region25: #{vision_tower_forward.1} parent=11 // pred_check
        %p704 = pneg %p157
      $region26: #{vision_tower_forward.1} parent=11 // pred_check_branch
        %706 = sbr.rel (%p704) target = $region28
      $region27: #{vision_tower_forward.1} parent=11 // pred_region
        _
      $region28: #{vision_tower_forward.1} parent=11 // pred_fallthru
        _
      // Predicated region
      $region29: #{vision_tower_forward.1} parent=11 // pred_check
        %p707 = pneg %p178
      $region30: #{vision_tower_forward.1} parent=11 // pred_check_branch
        %709 = sbr.rel (%p707) target = $region32
      $region31: #{vision_tower_forward.1} parent=11 // pred_region
        _
      $region32: #{vision_tower_forward.1} parent=11 // pred_fallthru
        _
      // Predicated region
      $region33: #{vision_tower_forward.1} parent=11 // pred_check
        %p710 = pneg %p199
      $region34: #{vision_tower_forward.1} parent=11 // pred_check_branch
        %712 = sbr.rel (%p710) target = $region36
      $region35: #{vision_tower_forward.1} parent=11 // pred_region
        _
      $region36: #{vision_tower_forward.1} parent=11 // pred_fallthru
        _
      // Predicated region
      $region37: #{vision_tower_forward.1} parent=11 // pred_check
        %p713 = pneg %p220
      $region38: #{vision_tower_forward.1} parent=11 // pred_check_branch
        %715 = sbr.rel (%p713) target = $region40
      $region39: #{vision_tower_forward.1} parent=11 // pred_region
        _
      $region40: #{vision_tower_forward.1} parent=11 // pred_fallthru
        _
      // Predicated region
      $region41: #{vision_tower_forward.1} parent=11 // pred_check
        %p716 = pneg %p241
      $region42: #{vision_tower_forward.1} parent=11 // pred_check_branch
        %718 = sbr.rel (%p716) target = $region44
      $region43: #{vision_tower_forward.1} parent=11 // pred_region
        _
      $region44: #{vision_tower_forward.1} parent=11 // pred_fallthru
        _
      // Predicated region
      $region45: #{vision_tower_forward.1} parent=11 // pred_check
        %p719 = pneg %p262
      $region46: #{vision_tower_forward.1} parent=11 // pred_check_branch
        %721 = sbr.rel (%p719) target = $region48
      $region47: #{vision_tower_forward.1} parent=11 // pred_region
        _
      $region48: #{vision_tower_forward.1} parent=11 // pred_fallthru
        _
      // Predicated region
      $region49: #{vision_tower_forward.1} parent=11 // pred_check
        %p722 = pneg %p283
      $region50: #{vision_tower_forward.1} parent=11 // pred_check_branch
        %724 = sbr.rel (%p722) target = $region52
      $region51: #{vision_tower_forward.1} parent=11 // pred_region
        _
      $region52: #{vision_tower_forward.1} parent=11 // pred_fallthru
        _
      // Predicated region
      $region53: #{vision_tower_forward.1} parent=11 // pred_check
        %p725 = pneg %p304
      $region54: #{vision_tower_forward.1} parent=11 // pred_check_branch
        %727 = sbr.rel (%p725) target = $region56
      $region55: #{vision_tower_forward.1} parent=11 // pred_region
        _
      $region56: #{vision_tower_forward.1} parent=11 // pred_fallthru
        _
      // Predicated region
      $region57: #{vision_tower_forward.1} parent=11 // pred_check
        %p728 = pneg %p325
      $region58: #{vision_tower_forward.1} parent=11 // pred_check_branch
        %730 = sbr.rel (%p728) target = $region60
      $region59: #{vision_tower_forward.1} parent=11 // pred_region
        _
      $region60: #{vision_tower_forward.1} parent=11 // pred_fallthru
        _
      // Predicated region
      $region61: #{vision_tower_forward.1} parent=11 // pred_check
        %p731 = pneg %p346
      $region62: #{vision_tower_forward.1} parent=11 // pred_check_branch
        %733 = sbr.rel (%p731) target = $region64
      $region63: #{vision_tower_forward.1} parent=11 // pred_region
        _
      $region64: #{vision_tower_forward.1} parent=11 // pred_fallthru
        _
      // Predicated region
      $region65: #{vision_tower_forward.1} parent=11 // pred_check
        %p734 = pneg %p367
      $region66: #{vision_tower_forward.1} parent=11 // pred_check_branch
        %736 = sbr.rel (%p734) target = $region68
      $region67: #{vision_tower_forward.1} parent=11 // pred_region
        _
      $region68: #{vision_tower_forward.1} parent=11 // pred_fallthru
        _
      // Predicated region
      $region69: #{vision_tower_forward.1} parent=11 // pred_check
        %p737 = pneg %p388
      $region70: #{vision_tower_forward.1} parent=11 // pred_check_branch
        %739 = sbr.rel (%p737) target = $region72
      $region71: #{vision_tower_forward.1} parent=11 // pred_region
        _
      $region72: #{vision_tower_forward.1} parent=11 // pred_fallthru
        _
      // Predicated region
      $region73: #{vision_tower_forward.1} parent=11 // pred_check
        %p740 = pneg %p409
      $region74: #{vision_tower_forward.1} parent=11 // pred_check_branch
        %742 = sbr.rel (%p740) target = $region76
      $region75: #{vision_tower_forward.1} parent=11 // pred_region
        _
      $region76: #{vision_tower_forward.1} parent=11 // pred_fallthru
        _
      // Predicated region
      $region77: #{vision_tower_forward.1} parent=11 // pred_check
        %p743 = pneg %p430
      $region78: #{vision_tower_forward.1} parent=11 // pred_check_branch
        %745 = sbr.rel (%p743) target = $region80
      $region79: #{vision_tower_forward.1} parent=11 // pred_region
        _
      $region80: #{vision_tower_forward.1} parent=11 // pred_fallthru
        _
      // Predicated region
      $region81: #{vision_tower_forward.1} parent=11 // pred_check
        %p746 = pneg %p451
      $region82: #{vision_tower_forward.1} parent=11 // pred_check_branch
        %748 = sbr.rel (%p746) target = $region84
      $region83: #{vision_tower_forward.1} parent=11 // pred_region
        _
      $region84: #{vision_tower_forward.1} parent=11 // pred_fallthru
        _
      // Predicated region
      $region85: #{vision_tower_forward.1} parent=11 // pred_check
        %p749 = pneg %p472
      $region86: #{vision_tower_forward.1} parent=11 // pred_check_branch
        %751 = sbr.rel (%p749) target = $region88
      $region87: #{vision_tower_forward.1} parent=11 // pred_region
        _
      $region88: #{vision_tower_forward.1} parent=11 // pred_fallthru
        _
      // Predicated region
      $region89: #{vision_tower_forward.1} parent=11 // pred_check
        %p752 = pneg %p493
      $region90: #{vision_tower_forward.1} parent=11 // pred_check_branch
        %754 = sbr.rel (%p752) target = $region92
      $region91: #{vision_tower_forward.1} parent=11 // pred_region
        _
      $region92: #{vision_tower_forward.1} parent=11 // pred_fallthru
        _
      // Predicated region
      $region93: #{vision_tower_forward.1} parent=11 // pred_check
        %p755 = pneg %p514
      $region94: #{vision_tower_forward.1} parent=11 // pred_check_branch
        %757 = sbr.rel (%p755) target = $region96
      $region95: #{vision_tower_forward.1} parent=11 // pred_region
        _
      $region96: #{vision_tower_forward.1} parent=11 // pred_fallthru
        _
      // Predicated region
      $region97: #{vision_tower_forward.1} parent=11 // pred_check
        %p758 = pneg %p535
      $region98: #{vision_tower_forward.1} parent=11 // pred_check_branch
        %760 = sbr.rel (%p758) target = $region100
      $region99: #{vision_tower_forward.1} parent=11 // pred_region
        _
      $region100: #{vision_tower_forward.1} parent=11 // pred_fallthru
        _
      // Predicated region
      $region101: #{vision_tower_forward.1} parent=11 // pred_check
        %p761 = pneg %p556
      $region102: #{vision_tower_forward.1} parent=11 // pred_check_branch
        %763 = sbr.rel (%p761) target = $region104
      $region103: #{vision_tower_forward.1} parent=11 // pred_region
        _
      $region104: #{vision_tower_forward.1} parent=11 // pred_fallthru
        _
      // Predicated region
      $region105: #{vision_tower_forward.1} parent=11 // pred_check
        %p764 = pneg %p577
      $region106: #{vision_tower_forward.1} parent=11 // pred_check_branch
        %766 = sbr.rel (%p764) target = $region108
      $region107: #{vision_tower_forward.1} parent=11 // pred_region
        _
      $region108: #{vision_tower_forward.1} parent=11 // pred_fallthru
        _
      // Predicated region
      $region109: #{vision_tower_forward.1} parent=11 // pred_check
        %p767 = pneg %p598
      $region110: #{vision_tower_forward.1} parent=11 // pred_check_branch
        %769 = sbr.rel (%p767) target = $region112
      $region111: #{vision_tower_forward.1} parent=11 // pred_region
        _
      $region112: #{vision_tower_forward.1} parent=11 // pred_fallthru
        _
    $region12: #{vision_tower_forward.1} parent=5 // pred_fallthru
      _
    %p770 = scmp.lt.s32.totalorder %s35, 4
    // Predicated region
    $region113: #{vision_tower_forward.1} parent=5 // pred_check
      %p771 = pneg %p770
    $region114: #{vision_tower_forward.1} parent=5 // pred_check_branch
      %773 = sbr.rel (%p771) target = $region116
    $region115: #{vision_tower_forward.1} parent=5 // pred_region
      // Predicated region
      $region117: #{vision_tower_forward.1} parent=115 // pred_check
        %p774 = pneg %p67
      $region118: #{vision_tower_forward.1} parent=115 // pred_check_branch
        %776 = sbr.rel (%p774) target = $region120
      $region119: #{vision_tower_forward.1} parent=115 // pred_region
        %p777 = scmp.lt.s32.totalorder %s42, 1
        %s778 = scalar_select %p777, %s42, 1
        %s779 = smul.addr %s778, 2
        %s780 = smul.addr %s779, 4
        %s781 = scalar_lea.vmem %s0, %s780
      $region120: #{vision_tower_forward.1} parent=115 // pred_fallthru
        _
    $region116: #{vision_tower_forward.1} parent=5 // pred_fallthru
      _
    %p782 = scmp.le.s32.totalorder 1, %s35
    %p783 = scmp.lt.s32.totalorder %s35, 5
    %p784 = pnand %p782, %p783
    %p785 = pneg %p784
    // Predicated region
    $region121: #{vision_tower_forward.1} parent=5 // pred_check
      _
    $region122: #{vision_tower_forward.1} parent=5 // pred_check_branch
      %787 = sbr.rel (%p784) target = $region124
    $region123: #{vision_tower_forward.1} parent=5 // pred_region
      %s788 = ssub.s32 %s35, 1
      %p789 = scmp.lt.s32.totalorder %s44, 1
      %s790 = scalar_select %p789, %s44, 1
      %s791 = smul.addr %s790, 2
      %s792 = smul.addr %s791, 4
      %s793 = scalar_lea.vmem %s0, %s792
      %p794 = pneg %p73
      %p795 = pneg %p70
      %p796 = pneg %p94
      %p797 = pneg %p91
      %p798 = pneg %p115
      %p799 = pneg %p112
      %p800 = pneg %p136
      %p801 = pneg %p133
      %p802 = pneg %p157
      %p803 = pneg %p154
      %p804 = pneg %p178
      %p805 = pneg %p175
      %p806 = pneg %p199
      %p807 = pneg %p196
      %p808 = pneg %p220
      %p809 = pneg %p217
      %p810 = pneg %p241
      %p811 = pneg %p238
      %p812 = pneg %p262
      %p813 = pneg %p259
      %p814 = pneg %p283
      %p815 = pneg %p280
      %p816 = pneg %p304
      %p817 = pneg %p301
      %p818 = pneg %p325
      %p819 = pneg %p322
      %p820 = pneg %p346
      %p821 = pneg %p343
      %p822 = pneg %p367
      %p823 = pneg %p364
      %p824 = pneg %p388
      %p825 = pneg %p385
      %p826 = pneg %p409
      %p827 = pneg %p406
      %p828 = pneg %p430
      %p829 = pneg %p427
      %p830 = pneg %p451
      %p831 = pneg %p448
      %p832 = pneg %p472
      %p833 = pneg %p469
      %p834 = pneg %p493
      %p835 = pneg %p490
      %p836 = pneg %p514
      %p837 = pneg %p511
      %p838 = pneg %p535
      %p839 = pneg %p532
      %p840 = pneg %p556
      %p841 = pneg %p553
      %p842 = pneg %p577
      %p843 = pneg %p574
      %p844 = pneg %p598
      %p845 = pneg %p595
      %p846 = pneg %p624
      %p847 = pneg %p621
      %p848 = scmp.lt.s32.totalorder %s44, 1
      %s849 = scalar_select %p848, %s44, 1
      %s850 = smul.addr %s849, 8
      %s851 = scalar_lea.vmem %s26, %s850
      %p852 = pneg %p652
      %p853 = pneg %p649
      %p854 = scmp.lt.s32.totalorder %s45, 1
      %s855 = scalar_select %p854, %s45, 1
      %p856 = scmp.lt.s32.totalorder %s44, 1
      %s857 = scalar_select %p856, %s44, 1
      %s858 = smul.addr %s855, 2
      %s859 = sadd.s32 %s857, %s858
      %s860 = smul.addr %s859, 8
      %s861 = scalar_lea.vmem %s27, %s860
      %p862 = pneg %p680
      %p863 = pneg %p677
      %p864 = scmp.lt.s32.totalorder %s45, 1
      %s865 = scalar_select %p864, %s45, 1
      %p866 = scmp.lt.s32.totalorder %s44, 1
      %s867 = scalar_select %p866, %s44, 1
      %s868 = smul.addr %s865, 2
      %s869 = sadd.s32 %s867, %s868
      %s870 = smul.addr %s869, 8
      %s871 = scalar_lea.vmem %s28, %s870
      %p872 = scmp.lt.s32.totalorder %s44, 1
      %s873 = scalar_select %p872, %s44, 1
      %s874 = smul.addr %s873, 2
      %s875 = smul.addr %s874, 4
      %s876 = scalar_lea.vmem %s0, %s875
      %p877 = scmp.lt.s32.totalorder %s44, 1
      %s878 = scalar_select %p877, %s44, 1
      %s879 = smul.addr %s878, 8
      %s880 = scalar_lea.vmem %s26, %s879
      %p881 = scmp.lt.s32.totalorder %s45, 1
      %s882 = scalar_select %p881, %s45, 1
      %p883 = scmp.lt.s32.totalorder %s44, 1
      %s884 = scalar_select %p883, %s44, 1
      %s885 = smul.addr %s882, 2
      %s886 = sadd.s32 %s884, %s885
      %s887 = smul.addr %s886, 8
      %s888 = scalar_lea.vmem %s27, %s887
      %p889 = scmp.lt.s32.totalorder %s45, 1
      %s890 = scalar_select %p889, %s45, 1
      %p891 = scmp.lt.s32.totalorder %s44, 1
      %s892 = scalar_select %p891, %s44, 1
      %s893 = smul.addr %s890, 2
      %s894 = sadd.s32 %s892, %s893
      %s895 = smul.addr %s894, 8
      %s896 = scalar_lea.vmem %s28, %s895
      %p897 = scmp.eq.s32.totalorder %s45, 0
      // Predicated region
      $region125: #{vision_tower_forward.1} parent=123 // pred_check
        %p898 = pneg %p897
      $region126: #{vision_tower_forward.1} parent=123 // pred_check_branch
        %900 = sbr.rel (%p898) target = $region128
      $region127: #{vision_tower_forward.1} parent=123 // pred_region
        %v901 = vld [vmem:[%s876] sm:$0xff]
        %v902 = vld [vmem:[%s1] sm:$0xff]
        %v903 = vld [vmem:[%s1 + $0x8] sm:$0xff]
        %v904 = vld [vmem:[%s1 + $0x10] sm:$0xff]
        %v905 = vld [vmem:[%s1 + $0x18] sm:$0xff]
        %v906 = vld [vmem:[%s1 + $0x20] sm:$0xff]
        %v907 = vld [vmem:[%s1 + $0x28] sm:$0xff]
        %v908 = vld [vmem:[%s1 + $0x30] sm:$0xff]
        %v909 = vld [vmem:[%s1 + $0x38] sm:$0xff]
        %v910 = vld [vmem:[%s1 + $0x40] sm:$0xff]
        %v911 = vld [vmem:[%s1 + $0x48] sm:$0xff]
        %v912 = vld [vmem:[%s1 + $0x50] sm:$0xff]
        %v913 = vld [vmem:[%s1 + $0x58] sm:$0xff]
        %v914 = vld [vmem:[%s1 + $0x60] sm:$0xff]
        %v915 = vld [vmem:[%s1 + $0x68] sm:$0xff]
        %v916 = vld [vmem:[%s1 + $0x70] sm:$0xff]
        %v917 = vld [vmem:[%s1 + $0x78] sm:$0xff]
        %v918 = vld [vmem:[%s1 + $0x80] sm:$0xff]
        %v919 = vld [vmem:[%s1 + $0x88] sm:$0xff]
        %v920 = vld [vmem:[%s1 + $0x90] sm:$0xff]
        %v921 = vld [vmem:[%s1 + $0x98] sm:$0xff]
        %v922 = vld [vmem:[%s1 + $0xa0] sm:$0xff]
        %v923 = vld [vmem:[%s1 + $0xa8] sm:$0xff]
        %v924 = vld [vmem:[%s1 + $0xb0] sm:$0xff]
        %v925 = vld [vmem:[%s1 + $0xb8] sm:$0xff]
        %v926 = vld [vmem:[%s2] sm:$0x1]
        %v928 = vlaneseq
        %v929 = vshrl.u32 %v928, 7
        %v930 = vsub.s32 0, %v929
        %v931 = vrot.slane %v926, %v930
        %v934 = vcombine.high %v901, %v901
        %vm935 = vcmask 523264
        %v936 = vsel %vm935, %v934, 0
        %938 = vmatprep.subr.mxu0 0.0
        %939 = vmatpush1.msra.mxu0 %v902
        %940 = vmatprep.subr.mxu0 0.0
        %941 = vmatpush1.msra.mxu0 %v903
        %942 = vmatprep.subr.mxu0 0.0
        %943 = vmatpush1.msra.mxu0 %v904
        %944 = vmatprep.subr.mxu0 0.0
        %945 = vmatpush1.msra.mxu0 %v905
        %946 = vmatprep.subr.mxu0 0.0
        %947 = vmatpush1.msra.mxu0 %v906
        %948 = vmatprep.subr.mxu0 0.0
        %949 = vmatpush1.msra.mxu0 %v907
        %950 = vmatprep.subr.mxu0 0.0
        %951 = vmatpush1.msra.mxu0 %v908
        %952 = vmatprep.subr.mxu0 0.0
        %953 = vmatpush1.msra.mxu0 %v909
        %954 = vmatprep.subr.mxu0 0.0
        %955 = vmatpush1.msra.mxu0 %v910
        %956 = vmatprep.subr.mxu0 0.0
        %957 = vmatpush1.msra.mxu0 %v911
        %958 = vmatprep.subr.mxu0 0.0
        %959 = vmatpush1.msra.mxu0 %v912
        %960 = vmatprep.subr.mxu0 0.0
        %961 = vmatpush1.msra.mxu0 %v913
        %962 = vmatprep.subr.mxu0 0.0
        %963 = vmatpush1.msra.mxu0 %v914
        %964 = vmatprep.subr.mxu0 0.0
        %965 = vmatpush1.msra.mxu0 %v915
        %966 = vmatprep.subr.mxu0 0.0
        %967 = vmatpush1.msra.mxu0 %v916
        %968 = vmatprep.subr.mxu0 0.0
        %969 = vmatpush1.msra.mxu0 %v917
        %970 = vmatprep.subr.mxu0 0.0
        %971 = vmatpush1.msra.mxu0 %v918
        %972 = vmatprep.subr.mxu0 0.0
        %973 = vmatpush1.msra.mxu0 %v919
        %974 = vmatprep.subr.mxu0 0.0
        %975 = vmatpush1.msra.mxu0 %v920
        %976 = vmatprep.subr.mxu0 0.0
        %977 = vmatpush1.msra.mxu0 %v921
        %978 = vmatprep.subr.mxu0 0.0
        %979 = vmatpush1.msra.mxu0 %v922
        %980 = vmatprep.subr.mxu0 0.0
        %981 = vmatpush1.msra.mxu0 %v923
        %982 = vmatprep.subr.mxu0 0.0
        %983 = vmatpush1.msra.mxu0 %v924
        %984 = vmatprep.subr.mxu0 0.0
        %985 = vmatpush1.msra.mxu0 %v925
        %986 = vmatprep.subr.mxu0 0.0
        %987 = vmatpush1.msra.mxu0 0.0
        %988 = vmatprep.subr.mxu0 0.0
        %989 = vmatpush1.msra.mxu0 0.0
        %990 = vmatprep.subr.mxu0 0.0
        %991 = vmatpush1.msra.mxu0 0.0
        %992 = vmatprep.subr.mxu0 0.0
        %993 = vmatpush1.msra.mxu0 0.0
        %994 = vmatprep.subr.mxu0 0.0
        %995 = vmatpush1.msra.mxu0 0.0
        %996 = vmatprep.subr.mxu0 0.0
        %997 = vmatpush1.msra.mxu0 0.0
        %998 = vmatprep.subr.mxu0 0.0
        %999 = vmatpush1.msra.mxu0 0.0
        %1000 = vmatprep.subr.mxu0 0.0
        %1001 = vmatpush1.msra.mxu0 0.0
        %1002 = vmatprep.mubr.f32.mxu0 %v936
        %1003 = vmatmul.mubr.f32.gmra.mrb[0].mxu0 %v901
        %v1004 = vpop.f32.mrb[0].mxu0
        %v1005 = vadd.f32 %v931, %v1004
        %v1006 = vpop.f32.mrb[0].mxu0
        %1007 = vdwg.mxu0
        %v1008 = vld [vmem:[%s3] sm:$0x1]
        %vm1009 = vcmask 385024
        %1010 = vst.msk [vmem:[#allocation2] sm:$0x1] %vm1009, %v1008
        %vm1011 = vcmask 388096
        %1012 = vst.msk [vmem:[#allocation2 + $0x1] sm:$0xf] %vm1011, %v1005
        %v1013 = vld [vmem:[#allocation2] sm:$0x1f]
        %v1014 = vld [vmem:[%s4] sm:$0x1f]
        %v1015 = vadd.f32 %v1013, %v1014
        %v1016 = vld [vmem:[%s5] sm:$0x1]
        %v1017 = vld [vmem:[%s6] sm:$0x1]
        %vm1018 = vcmask 389120
        %v1019 = vsel %vm1018, %v1015, 0.0
        %1020 = vadd.xlane.f32.xlu0 %v1019
        %v1021 = vpop.xlane.xlu0 %1020
        %v1022 = vrcp.pop 48.0
        %v1023 = vmul.f32 %v1021, %v1022
        %v1024 = vsub.f32 %v1015, %v1023
        %v1025 = vmul.f32 %v1024, %v1024
        %v1026 = vsel %vm1018, %v1025, 0.0
        %1027 = vadd.xlane.f32.xlu0 %v1026
        %v1028 = vpop.xlane.xlu0 %1027
        %v1029 = vmul.f32 %v1028, %v1022
        %v1030 = vadd.f32 %v1029, 1e-06
        %v1031 = vrsqrt.pop %v1030
        %v1032 = vmul.f32 %v1024, %v1031
        %v1034 = vlaneseq
        %v1035 = vshrl.u32 %v1034, 7
        %v1036 = vsub.s32 0, %v1035
        %v1037 = vrot.slane %v1016, %v1036
        %v1039 = vmul.f32 %v1032, %v1037
        %v1041 = vlaneseq
        %v1042 = vshrl.u32 %v1041, 7
        %v1043 = vsub.s32 0, %v1042
        %v1044 = vrot.slane %v1017, %v1043
        %v1046 = vadd.f32 %v1039, %v1044
        %1047 = vst.msk [vmem:[#allocation2] sm:$0x1f] %vm1018, %v1046
        %1048 = vst.msk [vmem:[%s880] sm:$0x1f] %vm1018, %v1046
      $region128: #{vision_tower_forward.1} parent=123 // pred_fallthru
        _
      %v1049 = vld [vmem:[#allocation2] sm:$0x1f]
      %s1050 = scalar_lea.vmem %s10, %s45
      %v1051 = vld [vmem:[%s1050] sm:$0x1]
      %s1052 = scalar_lea.vmem %s11, %s45
      %v1053 = vld [vmem:[%s1052] sm:$0x1]
      %vm1054 = vcmask 389120
      %v1055 = vsel %vm1054, %v1049, 0.0
      %1056 = vadd.xlane.f32.xlu0 %v1055
      %v1057 = vpop.xlane.xlu0 %1056
      %v1058 = vrcp.pop 48.0
      %v1059 = vmul.f32 %v1057, %v1058
      %v1060 = vsub.f32 %v1049, %v1059
      %v1061 = vmul.f32 %v1060, %v1060
      %v1062 = vsel %vm1054, %v1061, 0.0
      %1063 = vadd.xlane.f32.xlu0 %v1062
      %v1064 = vpop.xlane.xlu0 %1063
      %v1065 = vmul.f32 %v1064, %v1058
      %v1066 = vadd.f32 %v1065, 1e-06
      %v1067 = vrsqrt.pop %v1066
      %v1068 = vmul.f32 %v1060, %v1067
      %v1070 = vlaneseq
      %v1071 = vshrl.u32 %v1070, 7
      %v1072 = vsub.s32 0, %v1071
      %v1073 = vrot.slane %v1051, %v1072
      %v1075 = vmul.f32 %v1068, %v1073
      %v1077 = vlaneseq
      %v1078 = vshrl.u32 %v1077, 7
      %v1079 = vsub.s32 0, %v1078
      %v1080 = vrot.slane %v1053, %v1079
      %v1082 = vadd.f32 %v1075, %v1080
      %s1083 = smul.u32 %s45, 48
      %s1084 = scalar_lea.vmem %s12, %s1083
      %v1085 = vld [vmem:[%s1084] sm:$0xff]
      %v1086 = vld [vmem:[%s1084 + $0x8] sm:$0xff]
      %v1087 = vld [vmem:[%s1084 + $0x10] sm:$0xff]
      %v1088 = vld [vmem:[%s1084 + $0x18] sm:$0xff]
      %v1089 = vld [vmem:[%s1084 + $0x20] sm:$0xff]
      %v1090 = vld [vmem:[%s1084 + $0x28] sm:$0xff]
      %s1091 = scalar_lea.vmem %s13, %s45
      %v1092 = vld [vmem:[%s1091] sm:$0x1]
      %v1094 = vlaneseq
      %v1095 = vshrl.u32 %v1094, 7
      %v1096 = vsub.s32 0, %v1095
      %v1097 = vrot.slane %v1092, %v1096
      %vm1099 = vcmask 392192
      %v1101 = vsel %vm1099, %v1082, 0
      %1103 = vmatprep.subr.mxu0 0.0
      %1104 = vmatpush1.msra.mxu0 %v1085
      %1105 = vmatprep.subr.mxu0 0.0
      %1106 = vmatpush1.msra.mxu0 %v1086
      %1107 = vmatprep.subr.mxu0 0.0
      %1108 = vmatpush1.msra.mxu0 %v1087
      %1109 = vmatprep.subr.mxu0 0.0
      %1110 = vmatpush1.msra.mxu0 %v1088
      %1111 = vmatprep.subr.mxu0 0.0
      %1112 = vmatpush1.msra.mxu0 %v1089
      %1113 = vmatprep.subr.mxu0 0.0
      %1114 = vmatpush1.msra.mxu0 %v1090
      %1115 = vmatprep.subr.mxu0 0.0
      %1116 = vmatpush1.msra.mxu0 0.0
      %1117 = vmatprep.subr.mxu0 0.0
      %1118 = vmatpush1.msra.mxu0 0.0
      %1119 = vmatprep.subr.mxu0 0.0
      %1120 = vmatpush1.msra.mxu0 0.0
      %1121 = vmatprep.subr.mxu0 0.0
      %1122 = vmatpush1.msra.mxu0 0.0
      %1123 = vmatprep.subr.mxu0 0.0
      %1124 = vmatpush1.msra.mxu0 0.0
      %1125 = vmatprep.subr.mxu0 0.0
      %1126 = vmatpush1.msra.mxu0 0.0
      %1127 = vmatprep.subr.mxu0 0.0
      %1128 = vmatpush1.msra.mxu0 0.0
      %1129 = vmatprep.subr.mxu0 0.0
      %1130 = vmatpush1.msra.mxu0 0.0
      %1131 = vmatprep.subr.mxu0 0.0
      %1132 = vmatpush1.msra.mxu0 0.0
      %1133 = vmatprep.subr.mxu0 0.0
      %1134 = vmatpush1.msra.mxu0 0.0
      %1135 = vmatprep.subr.mxu0 0.0
      %1136 = vmatpush1.msra.mxu0 0.0
      %1137 = vmatprep.subr.mxu0 0.0
      %1138 = vmatpush1.msra.mxu0 0.0
      %1139 = vmatprep.subr.mxu0 0.0
      %1140 = vmatpush1.msra.mxu0 0.0
      %1141 = vmatprep.subr.mxu0 0.0
      %1142 = vmatpush1.msra.mxu0 0.0
      %1143 = vmatprep.subr.mxu0 0.0
      %1144 = vmatpush1.msra.mxu0 0.0
      %1145 = vmatprep.subr.mxu0 0.0
      %1146 = vmatpush1.msra.mxu0 0.0
      %1147 = vmatprep.subr.mxu0 0.0
      %1148 = vmatpush1.msra.mxu0 0.0
      %1149 = vmatprep.subr.mxu0 0.0
      %1150 = vmatpush1.msra.mxu0 0.0
      %1151 = vmatprep.subr.mxu0 0.0
      %1152 = vmatpush1.msra.mxu0 0.0
      %1153 = vmatprep.subr.mxu0 0.0
      %1154 = vmatpush1.msra.mxu0 0.0
      %1155 = vmatprep.subr.mxu0 0.0
      %1156 = vmatpush1.msra.mxu0 0.0
      %1157 = vmatprep.subr.mxu0 0.0
      %1158 = vmatpush1.msra.mxu0 0.0
      %1159 = vmatprep.subr.mxu0 0.0
      %1160 = vmatpush1.msra.mxu0 0.0
      %1161 = vmatprep.subr.mxu0 0.0
      %1162 = vmatpush1.msra.mxu0 0.0
      %1163 = vmatprep.subr.mxu0 0.0
      %1164 = vmatpush1.msra.mxu0 0.0
      %1165 = vmatprep.subr.mxu0 0.0
      %1166 = vmatpush1.msra.mxu0 0.0
      %1167 = vmatprep.mubr.f32.mxu0 0.0
      %1168 = vmatmul.mubr.f32.gmra.mrb[0].mxu0 %v1101
      %v1169 = vpop.f32.mrb[0].mxu0
      %v1170 = vadd.f32 %v1097, %v1169
      %v1171 = vpop.f32.mrb[0].mxu0
      %1172 = vdwg.mxu0
      %v1173 = vmul.f32 %v1170, 0.5
      %s1174 = scalar_lea.vmem %s14, %s1083
      %v1175 = vld [vmem:[%s1174] sm:$0xff]
      %v1176 = vld [vmem:[%s1174 + $0x8] sm:$0xff]
      %v1177 = vld [vmem:[%s1174 + $0x10] sm:$0xff]
      %v1178 = vld [vmem:[%s1174 + $0x18] sm:$0xff]
      %v1179 = vld [vmem:[%s1174 + $0x20] sm:$0xff]
      %v1180 = vld [vmem:[%s1174 + $0x28] sm:$0xff]
      %s1181 = scalar_lea.vmem %s15, %s45
      %v1182 = vld [vmem:[%s1181] sm:$0x1]
      %v1184 = vlaneseq
      %v1185 = vshrl.u32 %v1184, 7
      %v1186 = vsub.s32 0, %v1185
      %v1187 = vrot.slane %v1182, %v1186
      %1189 = vmatprep.subr.mxu0 0.0
      %1190 = vmatpush1.msra.mxu0 %v1175
      %1191 = vmatprep.subr.mxu0 0.0
      %1192 = vmatpush1.msra.mxu0 %v1176
      %1193 = vmatprep.subr.mxu0 0.0
      %1194 = vmatpush1.msra.mxu0 %v1177
      %1195 = vmatprep.subr.mxu0 0.0
      %1196 = vmatpush1.msra.mxu0 %v1178
      %1197 = vmatprep.subr.mxu0 0.0
      %1198 = vmatpush1.msra.mxu0 %v1179
      %1199 = vmatprep.subr.mxu0 0.0
      %1200 = vmatpush1.msra.mxu0 %v1180
      %1201 = vmatprep.subr.mxu0 0.0
      %1202 = vmatpush1.msra.mxu0 0.0
      %1203 = vmatprep.subr.mxu0 0.0
      %1204 = vmatpush1.msra.mxu0 0.0
      %1205 = vmatprep.subr.mxu0 0.0
      %1206 = vmatpush1.msra.mxu0 0.0
      %1207 = vmatprep.subr.mxu0 0.0
      %1208 = vmatpush1.msra.mxu0 0.0
      %1209 = vmatprep.subr.mxu0 0.0
      %1210 = vmatpush1.msra.mxu0 0.0
      %1211 = vmatprep.subr.mxu0 0.0
      %1212 = vmatpush1.msra.mxu0 0.0
      %1213 = vmatprep.subr.mxu0 0.0
      %1214 = vmatpush1.msra.mxu0 0.0
      %1215 = vmatprep.subr.mxu0 0.0
      %1216 = vmatpush1.msra.mxu0 0.0
      %1217 = vmatprep.subr.mxu0 0.0
      %1218 = vmatpush1.msra.mxu0 0.0
      %1219 = vmatprep.subr.mxu0 0.0
      %1220 = vmatpush1.msra.mxu0 0.0
      %1221 = vmatprep.subr.mxu0 0.0
      %1222 = vmatpush1.msra.mxu0 0.0
      %1223 = vmatprep.subr.mxu0 0.0
      %1224 = vmatpush1.msra.mxu0 0.0
      %1225 = vmatprep.subr.mxu0 0.0
      %1226 = vmatpush1.msra.mxu0 0.0
      %1227 = vmatprep.subr.mxu0 0.0
      %1228 = vmatpush1.msra.mxu0 0.0
      %1229 = vmatprep.subr.mxu0 0.0
      %1230 = vmatpush1.msra.mxu0 0.0
      %1231 = vmatprep.subr.mxu0 0.0
      %1232 = vmatpush1.msra.mxu0 0.0
      %1233 = vmatprep.subr.mxu0 0.0
      %1234 = vmatpush1.msra.mxu0 0.0
      %1235 = vmatprep.subr.mxu0 0.0
      %1236 = vmatpush1.msra.mxu0 0.0
      %1237 = vmatprep.subr.mxu0 0.0
      %1238 = vmatpush1.msra.mxu0 0.0
      %1239 = vmatprep.subr.mxu0 0.0
      %1240 = vmatpush1.msra.mxu0 0.0
      %1241 = vmatprep.subr.mxu0 0.0
      %1242 = vmatpush1.msra.mxu0 0.0
      %1243 = vmatprep.subr.mxu0 0.0
      %1244 = vmatpush1.msra.mxu0 0.0
      %1245 = vmatprep.subr.mxu0 0.0
      %1246 = vmatpush1.msra.mxu0 0.0
      %1247 = vmatprep.subr.mxu0 0.0
      %1248 = vmatpush1.msra.mxu0 0.0
      %1249 = vmatprep.subr.mxu0 0.0
      %1250 = vmatpush1.msra.mxu0 0.0
      %1251 = vmatprep.subr.mxu0 0.0
      %1252 = vmatpush1.msra.mxu0 0.0
      %1253 = vmatprep.mubr.f32.mxu0 0.0
      %1254 = vmatmul.mubr.f32.gmra.mrb[0].mxu0 %v1101
      %v1255 = vpop.f32.mrb[0].mxu0
      %v1256 = vadd.f32 %v1187, %v1255
      %v1257 = vpop.f32.mrb[0].mxu0
      %1258 = vdwg.mxu0
      %s1259 = scalar_lea.vmem %s16, %s1083
      %v1260 = vld [vmem:[%s1259] sm:$0xff]
      %v1261 = vld [vmem:[%s1259 + $0x8] sm:$0xff]
      %v1262 = vld [vmem:[%s1259 + $0x10] sm:$0xff]
      %v1263 = vld [vmem:[%s1259 + $0x18] sm:$0xff]
      %v1264 = vld [vmem:[%s1259 + $0x20] sm:$0xff]
      %v1265 = vld [vmem:[%s1259 + $0x28] sm:$0xff]
      %s1266 = scalar_lea.vmem %s17, %s45
      %v1267 = vld [vmem:[%s1266] sm:$0x1]
      %v1269 = vlaneseq
      %v1270 = vshrl.u32 %v1269, 7
      %v1271 = vsub.s32 0, %v1270
      %v1272 = vrot.slane %v1267, %v1271
      %1274 = vmatprep.subr.mxu0 0.0
      %1275 = vmatpush1.msra.mxu0 %v1260
      %1276 = vmatprep.subr.mxu0 0.0
      %1277 = vmatpush1.msra.mxu0 %v1261
      %1278 = vmatprep.subr.mxu0 0.0
      %1279 = vmatpush1.msra.mxu0 %v1262
      %1280 = vmatprep.subr.mxu0 0.0
      %1281 = vmatpush1.msra.mxu0 %v1263
      %1282 = vmatprep.subr.mxu0 0.0
      %1283 = vmatpush1.msra.mxu0 %v1264
      %1284 = vmatprep.subr.mxu0 0.0
      %1285 = vmatpush1.msra.mxu0 %v1265
      %1286 = vmatprep.subr.mxu0 0.0
      %1287 = vmatpush1.msra.mxu0 0.0
      %1288 = vmatprep.subr.mxu0 0.0
      %1289 = vmatpush1.msra.mxu0 0.0
      %1290 = vmatprep.subr.mxu0 0.0
      %1291 = vmatpush1.msra.mxu0 0.0
      %1292 = vmatprep.subr.mxu0 0.0
      %1293 = vmatpush1.msra.mxu0 0.0
      %1294 = vmatprep.subr.mxu0 0.0
      %1295 = vmatpush1.msra.mxu0 0.0
      %1296 = vmatprep.subr.mxu0 0.0
      %1297 = vmatpush1.msra.mxu0 0.0
      %1298 = vmatprep.subr.mxu0 0.0
      %1299 = vmatpush1.msra.mxu0 0.0
      %1300 = vmatprep.subr.mxu0 0.0
      %1301 = vmatpush1.msra.mxu0 0.0
      %1302 = vmatprep.subr.mxu0 0.0
      %1303 = vmatpush1.msra.mxu0 0.0
      %1304 = vmatprep.subr.mxu0 0.0
      %1305 = vmatpush1.msra.mxu0 0.0
      %1306 = vmatprep.subr.mxu0 0.0
      %1307 = vmatpush1.msra.mxu0 0.0
      %1308 = vmatprep.subr.mxu0 0.0
      %1309 = vmatpush1.msra.mxu0 0.0
      %1310 = vmatprep.subr.mxu0 0.0
      %1311 = vmatpush1.msra.mxu0 0.0
      %1312 = vmatprep.subr.mxu0 0.0
      %1313 = vmatpush1.msra.mxu0 0.0
      %1314 = vmatprep.subr.mxu0 0.0
      %1315 = vmatpush1.msra.mxu0 0.0
      %1316 = vmatprep.subr.mxu0 0.0
      %1317 = vmatpush1.msra.mxu0 0.0
      %1318 = vmatprep.subr.mxu0 0.0
      %1319 = vmatpush1.msra.mxu0 0.0
      %1320 = vmatprep.subr.mxu0 0.0
      %1321 = vmatpush1.msra.mxu0 0.0
      %1322 = vmatprep.subr.mxu0 0.0
      %1323 = vmatpush1.msra.mxu0 0.0
      %1324 = vmatprep.subr.mxu0 0.0
      %1325 = vmatpush1.msra.mxu0 0.0
      %1326 = vmatprep.subr.mxu0 0.0
      %1327 = vmatpush1.msra.mxu0 0.0
      %1328 = vmatprep.subr.mxu0 0.0
      %1329 = vmatpush1.msra.mxu0 0.0
      %1330 = vmatprep.subr.mxu0 0.0
      %1331 = vmatpush1.msra.mxu0 0.0
      %1332 = vmatprep.subr.mxu0 0.0
      %1333 = vmatpush1.msra.mxu0 0.0
      %1334 = vmatprep.subr.mxu0 0.0
      %1335 = vmatpush1.msra.mxu0 0.0
      %1336 = vmatprep.subr.mxu0 0.0
      %1337 = vmatpush1.msra.mxu0 0.0
      %1338 = vmatprep.mubr.f32.mxu0 0.0
      %1339 = vmatmul.mubr.f32.gmra.mrb[0].mxu0 %v1101
      %v1340 = vpop.f32.mrb[0].mxu0
      %v1341 = vadd.f32 %v1272, %v1340
      %v1342 = vpop.f32.mrb[0].mxu0
      %1343 = vdwg.mxu0
      %v1344 = vld [vmem:[%s7] sm:$0xff]
      %v1345 = vld [vmem:[%s7 + $0x8] sm:$0xff]
      %v1346 = vld [vmem:[%s7 + $0x10] sm:$0xff]
      %v1347 = vld [vmem:[%s7 + $0x18] sm:$0xff]
      %v1348 = vld [vmem:[%s7 + $0x20] sm:$0xff]
      %v1349 = vld [vmem:[%s7 + $0x28] sm:$0xff]
      %v1350 = vld [vmem:[%s7 + $0x30] sm:$0xff]
      %v1351 = vld [vmem:[%s7 + $0x38] sm:$0xf]
      %v1352 = vld [vmem:[%s8] sm:$0xff]
      %v1353 = vld [vmem:[%s8 + $0x8] sm:$0xff]
      %v1354 = vld [vmem:[%s8 + $0x10] sm:$0xff]
      %v1355 = vld [vmem:[%s8 + $0x18] sm:$0xff]
      %v1356 = vld [vmem:[%s8 + $0x20] sm:$0xff]
      %v1357 = vld [vmem:[%s8 + $0x28] sm:$0xff]
      %v1358 = vld [vmem:[%s8 + $0x30] sm:$0xff]
      %v1359 = vld [vmem:[%s8 + $0x38] sm:$0xf]
      %vm1360 = vcmask 39936
      %v1362 = vsel %vm1360, %v1344, 0
      %v1365 = vsel %vm1360, %v1345, 0
      %v1368 = vsel %vm1360, %v1346, 0
      %v1371 = vsel %vm1360, %v1347, 0
      %v1374 = vsel %vm1360, %v1348, 0
      %v1377 = vsel %vm1360, %v1349, 0
      %v1380 = vsel %vm1360, %v1350, 0
      %v1383 = vsel %vm1360, %v1351, 0
      %vm1385 = vcmask 1044480
      %v1387 = vsel %vm1385, %v1256, 0
      %1389 = vmatprep.subr.mxu0 0.0
      %1390 = vmatpush1.msra.mxu0 %v1387
      %1391 = vmatprep.subr.mxu0 0.0
      %1392 = vmatpush1.msra.mxu0 0.0
      %1393 = vmatprep.subr.mxu0 0.0
      %1394 = vmatpush1.msra.mxu0 0.0
      %1395 = vmatprep.subr.mxu0 0.0
      %1396 = vmatpush1.msra.mxu0 0.0
      %1397 = vmatprep.subr.mxu0 0.0
      %1398 = vmatpush1.msra.mxu0 0.0
      %1399 = vmatprep.subr.mxu0 0.0
      %1400 = vmatpush1.msra.mxu0 0.0
      %1401 = vmatprep.subr.mxu0 0.0
      %1402 = vmatpush1.msra.mxu0 0.0
      %1403 = vmatprep.subr.mxu0 0.0
      %1404 = vmatpush1.msra.mxu0 0.0
      %1405 = vmatprep.subr.mxu0 0.0
      %1406 = vmatpush1.msra.mxu0 0.0
      %1407 = vmatprep.subr.mxu0 0.0
      %1408 = vmatpush1.msra.mxu0 0.0
      %1409 = vmatprep.subr.mxu0 0.0
      %1410 = vmatpush1.msra.mxu0 0.0
      %1411 = vmatprep.subr.mxu0 0.0
      %1412 = vmatpush1.msra.mxu0 0.0
      %1413 = vmatprep.subr.mxu0 0.0
      %1414 = vmatpush1.msra.mxu0 0.0
      %1415 = vmatprep.subr.mxu0 0.0
      %1416 = vmatpush1.msra.mxu0 0.0
      %1417 = vmatprep.subr.mxu0 0.0
      %1418 = vmatpush1.msra.mxu0 0.0
      %1419 = vmatprep.subr.mxu0 0.0
      %1420 = vmatpush1.msra.mxu0 0.0
      %1421 = vmatprep.subr.mxu0 0.0
      %1422 = vmatpush1.msra.mxu0 0.0
      %1423 = vmatprep.subr.mxu0 0.0
      %1424 = vmatpush1.msra.mxu0 0.0
      %1425 = vmatprep.subr.mxu0 0.0
      %1426 = vmatpush1.msra.mxu0 0.0
      %1427 = vmatprep.subr.mxu0 0.0
      %1428 = vmatpush1.msra.mxu0 0.0
      %1429 = vmatprep.subr.mxu0 0.0
      %1430 = vmatpush1.msra.mxu0 0.0
      %1431 = vmatprep.subr.mxu0 0.0
      %1432 = vmatpush1.msra.mxu0 0.0
      %1433 = vmatprep.subr.mxu0 0.0
      %1434 = vmatpush1.msra.mxu0 0.0
      %1435 = vmatprep.subr.mxu0 0.0
      %1436 = vmatpush1.msra.mxu0 0.0
      %1437 = vmatprep.subr.mxu0 0.0
      %1438 = vmatpush1.msra.mxu0 0.0
      %1439 = vmatprep.subr.mxu0 0.0
      %1440 = vmatpush1.msra.mxu0 0.0
      %1441 = vmatprep.subr.mxu0 0.0
      %1442 = vmatpush1.msra.mxu0 0.0
      %1443 = vmatprep.subr.mxu0 0.0
      %1444 = vmatpush1.msra.mxu0 0.0
      %1445 = vmatprep.subr.mxu0 0.0
      %1446 = vmatpush1.msra.mxu0 0.0
      %1447 = vmatprep.subr.mxu0 0.0
      %1448 = vmatpush1.msra.mxu0 0.0
      %1449 = vmatprep.subr.mxu0 0.0
      %1450 = vmatpush1.msra.mxu0 0.0
      %1451 = vmatprep.subr.mxu0 0.0
      %1452 = vmatpush1.msra.mxu0 0.0
      %1453 = vmatprep.mubr.f32.mxu0 0.0
      %1454 = vmatmul.mubr.f32.gmra.mrb[0].mxu0 %v1362
      %v1455 = vpop.f32.mrb[0].mxu0
      %v1456 = vadd.f32 0.0, %v1455
      %v1457 = vpop.f32.mrb[0].mxu0
      %1458 = vmatprep.mubr.f32.mxu0 0.0
      %1459 = vmatmul.mubr.f32.gmra.mrb[0].mxu0 %v1365
      %v1460 = vpop.f32.mrb[0].mxu0
      %v1461 = vadd.f32 0.0, %v1460
      %v1462 = vpop.f32.mrb[0].mxu0
      %1463 = vmatprep.mubr.f32.mxu0 0.0
      %1464 = vmatmul.mubr.f32.gmra.mrb[0].mxu0 %v1368
      %v1465 = vpop.f32.mrb[0].mxu0
      %v1466 = vadd.f32 0.0, %v1465
      %v1467 = vpop.f32.mrb[0].mxu0
      %1468 = vmatprep.mubr.f32.mxu0 0.0
      %1469 = vmatmul.mubr.f32.gmra.mrb[0].mxu0 %v1371
      %v1470 = vpop.f32.mrb[0].mxu0
      %v1471 = vadd.f32 0.0, %v1470
      %v1472 = vpop.f32.mrb[0].mxu0
      %1473 = vmatprep.mubr.f32.mxu0 0.0
      %1474 = vmatmul.mubr.f32.gmra.mrb[0].mxu0 %v1374
      %v1475 = vpop.f32.mrb[0].mxu0
      %v1476 = vadd.f32 0.0, %v1475
      %v1477 = vpop.f32.mrb[0].mxu0
      %1478 = vmatprep.mubr.f32.mxu0 0.0
      %1479 = vmatmul.mubr.f32.gmra.mrb[0].mxu0 %v1377
      %v1480 = vpop.f32.mrb[0].mxu0
      %v1481 = vadd.f32 0.0, %v1480
      %v1482 = vpop.f32.mrb[0].mxu0
      %1483 = vmatprep.mubr.f32.mxu0 0.0
      %1484 = vmatmul.mubr.f32.gmra.mrb[0].mxu0 %v1380
      %v1485 = vpop.f32.mrb[0].mxu0
      %v1486 = vadd.f32 0.0, %v1485
      %v1487 = vpop.f32.mrb[0].mxu0
      %1488 = vmatprep.mubr.f32.mxu0 0.0
      %1489 = vmatmul.mubr.f32.gmra.mrb[0].mxu0 %v1383
      %v1490 = vpop.f32.mrb[0].mxu0
      %v1491 = vadd.f32 0.0, %v1490
      %v1492 = vpop.f32.mrb[0].mxu0
      %1493 = vdwg.mxu0
      %v1494 = vmul.f32 %v1456, %v1352
      %v1495 = vmul.f32 %v1461, %v1353
      %v1496 = vmul.f32 %v1466, %v1354
      %v1497 = vmul.f32 %v1471, %v1355
      %v1498 = vmul.f32 %v1476, %v1356
      %v1499 = vmul.f32 %v1481, %v1357
      %v1500 = vmul.f32 %v1486, %v1358
      %v1501 = vmul.f32 %v1491, %v1359
      %v1503 = vsel %vm1385, %v1341, 0
      %1505 = vmatprep.subr.mxu0 0.0
      %1506 = vmatpush1.msra.mxu0 %v1503
      %1507 = vmatprep.subr.mxu0 0.0
      %1508 = vmatpush1.msra.mxu0 0.0
      %1509 = vmatprep.subr.mxu0 0.0
      %1510 = vmatpush1.msra.mxu0 0.0
      %1511 = vmatprep.subr.mxu0 0.0
      %1512 = vmatpush1.msra.mxu0 0.0
      %1513 = vmatprep.subr.mxu0 0.0
      %1514 = vmatpush1.msra.mxu0 0.0
      %1515 = vmatprep.subr.mxu0 0.0
      %1516 = vmatpush1.msra.mxu0 0.0
      %1517 = vmatprep.subr.mxu0 0.0
      %1518 = vmatpush1.msra.mxu0 0.0
      %1519 = vmatprep.subr.mxu0 0.0
      %1520 = vmatpush1.msra.mxu0 0.0
      %1521 = vmatprep.subr.mxu0 0.0
      %1522 = vmatpush1.msra.mxu0 0.0
      %1523 = vmatprep.subr.mxu0 0.0
      %1524 = vmatpush1.msra.mxu0 0.0
      %1525 = vmatprep.subr.mxu0 0.0
      %1526 = vmatpush1.msra.mxu0 0.0
      %1527 = vmatprep.subr.mxu0 0.0
      %1528 = vmatpush1.msra.mxu0 0.0
      %1529 = vmatprep.subr.mxu0 0.0
      %1530 = vmatpush1.msra.mxu0 0.0
      %1531 = vmatprep.subr.mxu0 0.0
      %1532 = vmatpush1.msra.mxu0 0.0
      %1533 = vmatprep.subr.mxu0 0.0
      %1534 = vmatpush1.msra.mxu0 0.0
      %1535 = vmatprep.subr.mxu0 0.0
      %1536 = vmatpush1.msra.mxu0 0.0
      %1537 = vmatprep.subr.mxu0 0.0
      %1538 = vmatpush1.msra.mxu0 0.0
      %1539 = vmatprep.subr.mxu0 0.0
      %1540 = vmatpush1.msra.mxu0 0.0
      %1541 = vmatprep.subr.mxu0 0.0
      %1542 = vmatpush1.msra.mxu0 0.0
      %1543 = vmatprep.subr.mxu0 0.0
      %1544 = vmatpush1.msra.mxu0 0.0
      %1545 = vmatprep.subr.mxu0 0.0
      %1546 = vmatpush1.msra.mxu0 0.0
      %1547 = vmatprep.subr.mxu0 0.0
      %1548 = vmatpush1.msra.mxu0 0.0
      %1549 = vmatprep.subr.mxu0 0.0
      %1550 = vmatpush1.msra.mxu0 0.0
      %1551 = vmatprep.subr.mxu0 0.0
      %1552 = vmatpush1.msra.mxu0 0.0
      %1553 = vmatprep.subr.mxu0 0.0
      %1554 = vmatpush1.msra.mxu0 0.0
      %1555 = vmatprep.subr.mxu0 0.0
      %1556 = vmatpush1.msra.mxu0 0.0
      %1557 = vmatprep.subr.mxu0 0.0
      %1558 = vmatpush1.msra.mxu0 0.0
      %1559 = vmatprep.subr.mxu0 0.0
      %1560 = vmatpush1.msra.mxu0 0.0
      %1561 = vmatprep.subr.mxu0 0.0
      %1562 = vmatpush1.msra.mxu0 0.0
      %1563 = vmatprep.subr.mxu0 0.0
      %1564 = vmatpush1.msra.mxu0 0.0
      %1565 = vmatprep.subr.mxu0 0.0
      %1566 = vmatpush1.msra.mxu0 0.0
      %1567 = vmatprep.subr.mxu0 0.0
      %1568 = vmatpush1.msra.mxu0 0.0
      %1569 = vmatprep.mubr.f32.mxu0 0.0
      %1570 = vmatmul.mubr.f32.gmra.mrb[0].mxu0 %v1362
      %v1571 = vpop.f32.mrb[0].mxu0
      %v1572 = vadd.f32 0.0, %v1571
      %v1573 = vpop.f32.mrb[0].mxu0
      %1574 = vmatprep.mubr.f32.mxu0 0.0
      %1575 = vmatmul.mubr.f32.gmra.mrb[0].mxu0 %v1365
      %v1576 = vpop.f32.mrb[0].mxu0
      %v1577 = vadd.f32 0.0, %v1576
      %v1578 = vpop.f32.mrb[0].mxu0
      %1579 = vmatprep.mubr.f32.mxu0 0.0
      %1580 = vmatmul.mubr.f32.gmra.mrb[0].mxu0 %v1368
      %v1581 = vpop.f32.mrb[0].mxu0
      %v1582 = vadd.f32 0.0, %v1581
      %v1583 = vpop.f32.mrb[0].mxu0
      %1584 = vmatprep.mubr.f32.mxu0 0.0
      %1585 = vmatmul.mubr.f32.gmra.mrb[0].mxu0 %v1371
      %v1586 = vpop.f32.mrb[0].mxu0
      %v1587 = vadd.f32 0.0, %v1586
      %v1588 = vpop.f32.mrb[0].mxu0
      %1589 = vmatprep.mubr.f32.mxu0 0.0
      %1590 = vmatmul.mubr.f32.gmra.mrb[0].mxu0 %v1374
      %v1591 = vpop.f32.mrb[0].mxu0
      %v1592 = vadd.f32 0.0, %v1591
      %v1593 = vpop.f32.mrb[0].mxu0
      %1594 = vmatprep.mubr.f32.mxu0 0.0
      %1595 = vmatmul.mubr.f32.gmra.mrb[0].mxu0 %v1377
      %v1596 = vpop.f32.mrb[0].mxu0
      %v1597 = vadd.f32 0.0, %v1596
      %v1598 = vpop.f32.mrb[0].mxu0
      %1599 = vmatprep.mubr.f32.mxu0 0.0
      %1600 = vmatmul.mubr.f32.gmra.mrb[0].mxu0 %v1380
      %v1601 = vpop.f32.mrb[0].mxu0
      %v1602 = vadd.f32 0.0, %v1601
      %v1603 = vpop.f32.mrb[0].mxu0
      %1604 = vmatprep.mubr.f32.mxu0 0.0
      %1605 = vmatmul.mubr.f32.gmra.mrb[0].mxu0 %v1383
      %v1606 = vpop.f32.mrb[0].mxu0
      %v1607 = vadd.f32 0.0, %v1606
      %v1608 = vpop.f32.mrb[0].mxu0
      %1609 = vdwg.mxu0
      %v1610 = vmul.f32 %v1572, %v1352
      %v1611 = vmul.f32 %v1577, %v1353
      %v1612 = vmul.f32 %v1582, %v1354
      %v1613 = vmul.f32 %v1587, %v1355
      %v1614 = vmul.f32 %v1592, %v1356
      %v1615 = vmul.f32 %v1597, %v1357
      %v1616 = vmul.f32 %v1602, %v1358
      %v1617 = vmul.f32 %v1607, %v1359
      %v1619 = vsel %vm1099, %v1173, 0
      %v1622 = vsel %vm1099, %v1494, 0
      %v1625 = vsel %vm1099, %v1495, 0
      %v1628 = vsel %vm1099, %v1496, 0
      %v1631 = vsel %vm1099, %v1497, 0
      %v1634 = vsel %vm1099, %v1498, 0
      %v1637 = vsel %vm1099, %v1499, 0
      %v1640 = vsel %vm1099, %v1500, 0
      %v1643 = vsel %vm1099, %v1501, 0
      %1645 = vmatprep.subr.mxu0 0.0
      %1646 = vmatpush1.xpose.msra.mxu0 %v1622
      %1647 = vmatprep.subr.mxu0 0.0
      %1648 = vmatpush1.xpose.msra.mxu0 %v1625
      %1649 = vmatprep.subr.mxu0 0.0
      %1650 = vmatpush1.xpose.msra.mxu0 %v1628
      %1651 = vmatprep.subr.mxu0 0.0
      %1652 = vmatpush1.xpose.msra.mxu0 %v1631
      %1653 = vmatprep.subr.mxu0 0.0
      %1654 = vmatpush1.xpose.msra.mxu0 %v1634
      %1655 = vmatprep.subr.mxu0 0.0
      %1656 = vmatpush1.xpose.msra.mxu0 %v1637
      %1657 = vmatprep.subr.mxu0 0.0
      %1658 = vmatpush1.xpose.msra.mxu0 %v1640
      %1659 = vmatprep.subr.mxu0 0.0
      %1660 = vmatpush1.xpose.msra.mxu0 %v1643
      %1661 = vmatprep.subr.mxu0 0.0
      %1662 = vmatpush1.xpose.msra.mxu0 0.0
      %1663 = vmatprep.subr.mxu0 0.0
      %1664 = vmatpush1.xpose.msra.mxu0 0.0
      %1665 = vmatprep.subr.mxu0 0.0
      %1666 = vmatpush1.xpose.msra.mxu0 0.0
      %1667 = vmatprep.subr.mxu0 0.0
      %1668 = vmatpush1.xpose.msra.mxu0 0.0
      %1669 = vmatprep.subr.mxu0 0.0
      %1670 = vmatpush1.xpose.msra.mxu0 0.0
      %1671 = vmatprep.subr.mxu0 0.0
      %1672 = vmatpush1.xpose.msra.mxu0 0.0
      %1673 = vmatprep.subr.mxu0 0.0
      %1674 = vmatpush1.xpose.msra.mxu0 0.0
      %1675 = vmatprep.subr.mxu0 0.0
      %1676 = vmatpush1.xpose.msra.mxu0 0.0
      %1677 = vmatprep.subr.mxu0 0.0
      %1678 = vmatpush1.xpose.msra.mxu0 0.0
      %1679 = vmatprep.subr.mxu0 0.0
      %1680 = vmatpush1.xpose.msra.mxu0 0.0
      %1681 = vmatprep.subr.mxu0 0.0
      %1682 = vmatpush1.xpose.msra.mxu0 0.0
      %1683 = vmatprep.subr.mxu0 0.0
      %1684 = vmatpush1.xpose.msra.mxu0 0.0
      %1685 = vmatprep.subr.mxu0 0.0
      %1686 = vmatpush1.xpose.msra.mxu0 0.0
      %1687 = vmatprep.subr.mxu0 0.0
      %1688 = vmatpush1.xpose.msra.mxu0 0.0
      %1689 = vmatprep.subr.mxu0 0.0
      %1690 = vmatpush1.xpose.msra.mxu0 0.0
      %1691 = vmatprep.subr.mxu0 0.0
      %1692 = vmatpush1.xpose.msra.mxu0 0.0
      %1693 = vmatprep.subr.mxu0 0.0
      %1694 = vmatpush1.xpose.msra.mxu0 0.0
      %1695 = vmatprep.subr.mxu0 0.0
      %1696 = vmatpush1.xpose.msra.mxu0 0.0
      %1697 = vmatprep.subr.mxu0 0.0
      %1698 = vmatpush1.xpose.msra.mxu0 0.0
      %1699 = vmatprep.subr.mxu0 0.0
      %1700 = vmatpush1.xpose.msra.mxu0 0.0
      %1701 = vmatprep.subr.mxu0 0.0
      %1702 = vmatpush1.xpose.msra.mxu0 0.0
      %1703 = vmatprep.subr.mxu0 0.0
      %1704 = vmatpush1.xpose.msra.mxu0 0.0
      %1705 = vmatprep.subr.mxu0 0.0
      %1706 = vmatpush1.xpose.msra.mxu0 0.0
      %1707 = vmatprep.subr.mxu0 0.0
      %1708 = vmatpush1.xpose.msra.mxu0 0.0
      %1709 = vmatprep.mubr.f32.mxu0 0.0
      %1710 = vmatmul.mubr.f32.gmra.mrb[0].mxu0 %v1619
      %v1711 = vpop.f32.mrb[0].mxu0
      %v1712 = vadd.f32 0.0, %v1711
      %v1713 = vpop.f32.mrb[0].mxu0
      %1714 = vdwg.mxu0
      %vm1715 = vcmask 487424
      %v1716 = vsel %vm1715, %v1712, -inf
      %1717 = vmax.xlane.f32.xlu0 %v1716
      %v1718 = vpop.xlane.xlu0 %1717
      %v1719 = vsub.f32 %v1712, %v1718
      %v1720 = vmul.f32 %v1719, 1.442695
      %v1721 = vpow.pop %v1720
      %v1722 = vld [vmem:[%s9] sm:$0xff]
      %v1723 = vld [vmem:[%s9 + $0x8] sm:$0xff]
      %v1724 = vld [vmem:[%s9 + $0x10] sm:$0xff]
      %v1725 = vld [vmem:[%s9 + $0x18] sm:$0xff]
      %v1726 = vld [vmem:[%s9 + $0x20] sm:$0xff]
      %v1727 = vld [vmem:[%s9 + $0x28] sm:$0xff]
      %v1728 = vld [vmem:[%s9 + $0x30] sm:$0xff]
      %v1729 = vld [vmem:[%s9 + $0x38] sm:$0xf]
      %vm1730 = vcmask 490496
      %v1732 = vsel %vm1730, %v1721, 0
      %vm1734 = vcmask 1043456
      %v1736 = vsel %vm1734, %v1729, 0
      %1738 = vmatprep.subr.mxu0 0.0
      %1739 = vmatpush1.msra.mxu0 %v1722
      %1740 = vmatprep.subr.mxu0 0.0
      %1741 = vmatpush1.msra.mxu0 %v1723
      %1742 = vmatprep.subr.mxu0 0.0
      %1743 = vmatpush1.msra.mxu0 %v1724
      %1744 = vmatprep.subr.mxu0 0.0
      %1745 = vmatpush1.msra.mxu0 %v1725
      %1746 = vmatprep.subr.mxu0 0.0
      %1747 = vmatpush1.msra.mxu0 %v1726
      %1748 = vmatprep.subr.mxu0 0.0
      %1749 = vmatpush1.msra.mxu0 %v1727
      %1750 = vmatprep.subr.mxu0 0.0
      %1751 = vmatpush1.msra.mxu0 %v1728
      %1752 = vmatprep.subr.mxu0 0.0
      %1753 = vmatpush1.msra.mxu0 %v1736
      %1754 = vmatprep.subr.mxu0 0.0
      %1755 = vmatpush1.msra.mxu0 0.0
      %1756 = vmatprep.subr.mxu0 0.0
      %1757 = vmatpush1.msra.mxu0 0.0
      %1758 = vmatprep.subr.mxu0 0.0
      %1759 = vmatpush1.msra.mxu0 0.0
      %1760 = vmatprep.subr.mxu0 0.0
      %1761 = vmatpush1.msra.mxu0 0.0
      %1762 = vmatprep.subr.mxu0 0.0
      %1763 = vmatpush1.msra.mxu0 0.0
      %1764 = vmatprep.subr.mxu0 0.0
      %1765 = vmatpush1.msra.mxu0 0.0
      %1766 = vmatprep.subr.mxu0 0.0
      %1767 = vmatpush1.msra.mxu0 0.0
      %1768 = vmatprep.subr.mxu0 0.0
      %1769 = vmatpush1.msra.mxu0 0.0
      %1770 = vmatprep.subr.mxu0 0.0
      %1771 = vmatpush1.msra.mxu0 0.0
      %1772 = vmatprep.subr.mxu0 0.0
      %1773 = vmatpush1.msra.mxu0 0.0
      %1774 = vmatprep.subr.mxu0 0.0
      %1775 = vmatpush1.msra.mxu0 0.0
      %1776 = vmatprep.subr.mxu0 0.0
      %1777 = vmatpush1.msra.mxu0 0.0
      %1778 = vmatprep.subr.mxu0 0.0
      %1779 = vmatpush1.msra.mxu0 0.0
      %1780 = vmatprep.subr.mxu0 0.0
      %1781 = vmatpush1.msra.mxu0 0.0
      %1782 = vmatprep.subr.mxu0 0.0
      %1783 = vmatpush1.msra.mxu0 0.0
      %1784 = vmatprep.subr.mxu0 0.0
      %1785 = vmatpush1.msra.mxu0 0.0
      %1786 = vmatprep.subr.mxu0 0.0
      %1787 = vmatpush1.msra.mxu0 0.0
      %1788 = vmatprep.subr.mxu0 0.0
      %1789 = vmatpush1.msra.mxu0 0.0
      %1790 = vmatprep.subr.mxu0 0.0
      %1791 = vmatpush1.msra.mxu0 0.0
      %1792 = vmatprep.subr.mxu0 0.0
      %1793 = vmatpush1.msra.mxu0 0.0
      %1794 = vmatprep.subr.mxu0 0.0
      %1795 = vmatpush1.msra.mxu0 0.0
      %1796 = vmatprep.subr.mxu0 0.0
      %1797 = vmatpush1.msra.mxu0 0.0
      %1798 = vmatprep.subr.mxu0 0.0
      %1799 = vmatpush1.msra.mxu0 0.0
      %1800 = vmatprep.subr.mxu0 0.0
      %1801 = vmatpush1.msra.mxu0 0.0
      %1802 = vmatprep.mubr.f32.mxu0 0.0
      %1803 = vmatmul.mubr.f32.gmra.mrb[0].mxu0 %v1732
      %v1804 = vpop.f32.mrb[0].mxu0
      %v1805 = vadd.f32 0.0, %v1804
      %v1806 = vpop.f32.mrb[0].mxu0
      %1807 = vdwg.mxu0
      %v1808 = vrcp.pop %v1805
      %v1809 = vmul.f32 %v1721, %v1808
      %1810 = vst.msk [vmem:[%s896] sm:$0x1f] %vm1715, %v1809
      %v1812 = vsel %vm1730, %v1809, 0
      %v1815 = vsel %vm1734, %v1617, 0
      %1817 = vmatprep.subr.mxu0 0.0
      %1818 = vmatpush1.msra.mxu0 %v1610
      %1819 = vmatprep.subr.mxu0 0.0
      %1820 = vmatpush1.msra.mxu0 %v1611
      %1821 = vmatprep.subr.mxu0 0.0
      %1822 = vmatpush1.msra.mxu0 %v1612
      %1823 = vmatprep.subr.mxu0 0.0
      %1824 = vmatpush1.msra.mxu0 %v1613
      %1825 = vmatprep.subr.mxu0 0.0
      %1826 = vmatpush1.msra.mxu0 %v1614
      %1827 = vmatprep.subr.mxu0 0.0
      %1828 = vmatpush1.msra.mxu0 %v1615
      %1829 = vmatprep.subr.mxu0 0.0
      %1830 = vmatpush1.msra.mxu0 %v1616
      %1831 = vmatprep.subr.mxu0 0.0
      %1832 = vmatpush1.msra.mxu0 %v1815
      %1833 = vmatprep.subr.mxu0 0.0
      %1834 = vmatpush1.msra.mxu0 0.0
      %1835 = vmatprep.subr.mxu0 0.0
      %1836 = vmatpush1.msra.mxu0 0.0
      %1837 = vmatprep.subr.mxu0 0.0
      %1838 = vmatpush1.msra.mxu0 0.0
      %1839 = vmatprep.subr.mxu0 0.0
      %1840 = vmatpush1.msra.mxu0 0.0
      %1841 = vmatprep.subr.mxu0 0.0
      %1842 = vmatpush1.msra.mxu0 0.0
      %1843 = vmatprep.subr.mxu0 0.0
      %1844 = vmatpush1.msra.mxu0 0.0
      %1845 = vmatprep.subr.mxu0 0.0
      %1846 = vmatpush1.msra.mxu0 0.0
      %1847 = vmatprep.subr.mxu0 0.0
      %1848 = vmatpush1.msra.mxu0 0.0
      %1849 = vmatprep.subr.mxu0 0.0
      %1850 = vmatpush1.msra.mxu0 0.0
      %1851 = vmatprep.subr.mxu0 0.0
      %1852 = vmatpush1.msra.mxu0 0.0
      %1853 = vmatprep.subr.mxu0 0.0
      %1854 = vmatpush1.msra.mxu0 0.0
      %1855 = vmatprep.subr.mxu0 0.0
      %1856 = vmatpush1.msra.mxu0 0.0
      %1857 = vmatprep.subr.mxu0 0.0
      %1858 = vmatpush1.msra.mxu0 0.0
      %1859 = vmatprep.subr.mxu0 0.0
      %1860 = vmatpush1.msra.mxu0 0.0
      %1861 = vmatprep.subr.mxu0 0.0
      %1862 = vmatpush1.msra.mxu0 0.0
      %1863 = vmatprep.subr.mxu0 0.0
      %1864 = vmatpush1.msra.mxu0 0.0
      %1865 = vmatprep.subr.mxu0 0.0
      %1866 = vmatpush1.msra.mxu0 0.0
      %1867 = vmatprep.subr.mxu0 0.0
      %1868 = vmatpush1.msra.mxu0 0.0
      %1869 = vmatprep.subr.mxu0 0.0
      %1870 = vmatpush1.msra.mxu0 0.0
      %1871 = vmatprep.subr.mxu0 0.0
      %1872 = vmatpush1.msra.mxu0 0.0
      %1873 = vmatprep.subr.mxu0 0.0
      %1874 = vmatpush1.msra.mxu0 0.0
      %1875 = vmatprep.subr.mxu0 0.0
      %1876 = vmatpush1.msra.mxu0 0.0
      %1877 = vmatprep.subr.mxu0 0.0
      %1878 = vmatpush1.msra.mxu0 0.0
      %1879 = vmatprep.subr.mxu0 0.0
      %1880 = vmatpush1.msra.mxu0 0.0
      %1881 = vmatprep.mubr.f32.mxu0 0.0
      %1882 = vmatmul.mubr.f32.gmra.mrb[0].mxu0 %v1812
      %v1883 = vpop.f32.mrb[0].mxu0
      %v1884 = vadd.f32 0.0, %v1883
      %v1885 = vpop.f32.mrb[0].mxu0
      %1886 = vdwg.mxu0
      %s1887 = scalar_lea.vmem %s18, %s1083
      %v1888 = vld [vmem:[%s1887] sm:$0xff]
      %v1889 = vld [vmem:[%s1887 + $0x8] sm:$0xff]
      %v1890 = vld [vmem:[%s1887 + $0x10] sm:$0xff]
      %v1891 = vld [vmem:[%s1887 + $0x18] sm:$0xff]
      %v1892 = vld [vmem:[%s1887 + $0x20] sm:$0xff]
      %v1893 = vld [vmem:[%s1887 + $0x28] sm:$0xff]
      %v1895 = vsel %vm1099, %v1884, 0
      %1897 = vmatprep.subr.mxu0 0.0
      %1898 = vmatpush1.msra.mxu0 %v1888
      %1899 = vmatprep.subr.mxu0 0.0
      %1900 = vmatpush1.msra.mxu0 %v1889
      %1901 = vmatprep.subr.mxu0 0.0
      %1902 = vmatpush1.msra.mxu0 %v1890
      %1903 = vmatprep.subr.mxu0 0.0
      %1904 = vmatpush1.msra.mxu0 %v1891
      %1905 = vmatprep.subr.mxu0 0.0
      %1906 = vmatpush1.msra.mxu0 %v1892
      %1907 = vmatprep.subr.mxu0 0.0
      %1908 = vmatpush1.msra.mxu0 %v1893
      %1909 = vmatprep.subr.mxu0 0.0
      %1910 = vmatpush1.msra.mxu0 0.0
      %1911 = vmatprep.subr.mxu0 0.0
      %1912 = vmatpush1.msra.mxu0 0.0
      %1913 = vmatprep.subr.mxu0 0.0
      %1914 = vmatpush1.msra.mxu0 0.0
      %1915 = vmatprep.subr.mxu0 0.0
      %1916 = vmatpush1.msra.mxu0 0.0
      %1917 = vmatprep.subr.mxu0 0.0
      %1918 = vmatpush1.msra.mxu0 0.0
      %1919 = vmatprep.subr.mxu0 0.0
      %1920 = vmatpush1.msra.mxu0 0.0
      %1921 = vmatprep.subr.mxu0 0.0
      %1922 = vmatpush1.msra.mxu0 0.0
      %1923 = vmatprep.subr.mxu0 0.0
      %1924 = vmatpush1.msra.mxu0 0.0
      %1925 = vmatprep.subr.mxu0 0.0
      %1926 = vmatpush1.msra.mxu0 0.0
      %1927 = vmatprep.subr.mxu0 0.0
      %1928 = vmatpush1.msra.mxu0 0.0
      %1929 = vmatprep.subr.mxu0 0.0
      %1930 = vmatpush1.msra.mxu0 0.0
      %1931 = vmatprep.subr.mxu0 0.0
      %1932 = vmatpush1.msra.mxu0 0.0
      %1933 = vmatprep.subr.mxu0 0.0
      %1934 = vmatpush1.msra.mxu0 0.0
      %1935 = vmatprep.subr.mxu0 0.0
      %1936 = vmatpush1.msra.mxu0 0.0
      %1937 = vmatprep.subr.mxu0 0.0
      %1938 = vmatpush1.msra.mxu0 0.0
      %1939 = vmatprep.subr.mxu0 0.0
      %1940 = vmatpush1.msra.mxu0 0.0
      %1941 = vmatprep.subr.mxu0 0.0
      %1942 = vmatpush1.msra.mxu0 0.0
      %1943 = vmatprep.subr.mxu0 0.0
      %1944 = vmatpush1.msra.mxu0 0.0
      %1945 = vmatprep.subr.mxu0 0.0
      %1946 = vmatpush1.msra.mxu0 0.0
      %1947 = vmatprep.subr.mxu0 0.0
      %1948 = vmatpush1.msra.mxu0 0.0
      %1949 = vmatprep.subr.mxu0 0.0
      %1950 = vmatpush1.msra.mxu0 0.0
      %1951 = vmatprep.subr.mxu0 0.0
      %1952 = vmatpush1.msra.mxu0 0.0
      %1953 = vmatprep.subr.mxu0 0.0
      %1954 = vmatpush1.msra.mxu0 0.0
      %1955 = vmatprep.subr.mxu0 0.0
      %1956 = vmatpush1.msra.mxu0 0.0
      %1957 = vmatprep.subr.mxu0 0.0
      %1958 = vmatpush1.msra.mxu0 0.0
      %1959 = vmatprep.subr.mxu0 0.0
      %1960 = vmatpush1.msra.mxu0 0.0
      %1961 = vmatprep.mubr.f32.mxu0 0.0
      %1962 = vmatmul.mubr.f32.gmra.mrb[0].mxu0 %v1895
      %v1963 = vpop.f32.mrb[0].mxu0
      %v1964 = vadd.f32 0.0, %v1963
      %v1965 = vpop.f32.mrb[0].mxu0
      %1966 = vdwg.mxu0
      %v1967 = vadd.f32 %v1049, %v1964
      %s1968 = scalar_lea.vmem %s19, %s45
      %v1969 = vld [vmem:[%s1968] sm:$0x1]
      %v1971 = vlaneseq
      %v1972 = vshrl.u32 %v1971, 7
      %v1973 = vsub.s32 0, %v1972
      %v1974 = vrot.slane %v1969, %v1973
      %v1976 = vadd.f32 %v1967, %v1974
      %s1977 = scalar_lea.vmem %s20, %s45
      %v1978 = vld [vmem:[%s1977] sm:$0x1]
      %s1979 = scalar_lea.vmem %s21, %s45
      %v1980 = vld [vmem:[%s1979] sm:$0x1]
      %v1981 = vsel %vm1054, %v1976, 0.0
      %1982 = vadd.xlane.f32.xlu0 %v1981
      %v1983 = vpop.xlane.xlu0 %1982
      %v1984 = vmul.f32 %v1983, %v1058
      %v1985 = vsub.f32 %v1976, %v1984
      %v1986 = vmul.f32 %v1985, %v1985
      %v1987 = vsel %vm1054, %v1986, 0.0
      %1988 = vadd.xlane.f32.xlu0 %v1987
      %v1989 = vpop.xlane.xlu0 %1988
      %v1990 = vmul.f32 %v1989, %v1058
      %v1991 = vadd.f32 %v1990, 1e-06
      %v1992 = vrsqrt.pop %v1991
      %v1993 = vmul.f32 %v1985, %v1992
      %v1995 = vlaneseq
      %v1996 = vshrl.u32 %v1995, 7
      %v1997 = vsub.s32 0, %v1996
      %v1998 = vrot.slane %v1978, %v1997
      %v2000 = vmul.f32 %v1993, %v1998
      %v2002 = vlaneseq
      %v2003 = vshrl.u32 %v2002, 7
      %v2004 = vsub.s32 0, %v2003
      %v2005 = vrot.slane %v1980, %v2004
      %v2007 = vadd.f32 %v2000, %v2005
      %s2008 = smul.u32 %s45, 12
      %s2009 = smul.addr %s2008, 8
      %s2010 = scalar_lea.vmem %s22, %s2009
      %v2011 = vld [vmem:[%s2010] sm:$0xff]
      %v2012 = vld [vmem:[%s2010 + $0x8] sm:$0xff]
      %v2013 = vld [vmem:[%s2010 + $0x10] sm:$0xff]
      %v2014 = vld [vmem:[%s2010 + $0x18] sm:$0xff]
      %v2015 = vld [vmem:[%s2010 + $0x20] sm:$0xff]
      %v2016 = vld [vmem:[%s2010 + $0x28] sm:$0xff]
      %v2017 = vld [vmem:[%s2010 + $0x30] sm:$0xff]
      %v2018 = vld [vmem:[%s2010 + $0x38] sm:$0xff]
      %v2019 = vld [vmem:[%s2010 + $0x40] sm:$0xff]
      %v2020 = vld [vmem:[%s2010 + $0x48] sm:$0xff]
      %v2021 = vld [vmem:[%s2010 + $0x50] sm:$0xff]
      %v2022 = vld [vmem:[%s2010 + $0x58] sm:$0xff]
      %s2023 = smul.u32 %s45, 2
      %s2024 = scalar_lea.vmem %s23, %s2023
      %v2025 = vld [vmem:[%s2024] sm:$0x3]
      %v2027 = vlaneseq
      %v2028 = vshrl.u32 %v2027, 7
      %v2029 = vsub.s32 0, %v2028
      %v2030 = vrot.slane %v2025, %v2029
      %v2031 = vlaneseq
      %v2032 = vshrl.u32 %v2031, 7
      %v2033 = vsub.s32 1, %v2032
      %v2034 = vrot.slane %v2025, %v2033
      %v2038 = vsel %vm1099, %v2007, 0
      %2040 = vmatprep.subr.mxu0 %v2012
      %2041 = vmatpush1.msra.mxu0 %v2011
      %2042 = vmatprep.subr.mxu0 %v2014
      %2043 = vmatpush1.msra.mxu0 %v2013
      %2044 = vmatprep.subr.mxu0 %v2016
      %2045 = vmatpush1.msra.mxu0 %v2015
      %2046 = vmatprep.subr.mxu0 %v2018
      %2047 = vmatpush1.msra.mxu0 %v2017
      %2048 = vmatprep.subr.mxu0 %v2020
      %2049 = vmatpush1.msra.mxu0 %v2019
      %2050 = vmatprep.subr.mxu0 %v2022
      %2051 = vmatpush1.msra.mxu0 %v2021
      %2052 = vmatprep.subr.mxu0 0.0
      %2053 = vmatpush1.msra.mxu0 0.0
      %2054 = vmatprep.subr.mxu0 0.0
      %2055 = vmatpush1.msra.mxu0 0.0
      %2056 = vmatprep.subr.mxu0 0.0
      %2057 = vmatpush1.msra.mxu0 0.0
      %2058 = vmatprep.subr.mxu0 0.0
      %2059 = vmatpush1.msra.mxu0 0.0
      %2060 = vmatprep.subr.mxu0 0.0
      %2061 = vmatpush1.msra.mxu0 0.0
      %2062 = vmatprep.subr.mxu0 0.0
      %2063 = vmatpush1.msra.mxu0 0.0
      %2064 = vmatprep.subr.mxu0 0.0
      %2065 = vmatpush1.msra.mxu0 0.0
      %2066 = vmatprep.subr.mxu0 0.0
      %2067 = vmatpush1.msra.mxu0 0.0
      %2068 = vmatprep.subr.mxu0 0.0
      %2069 = vmatpush1.msra.mxu0 0.0
      %2070 = vmatprep.subr.mxu0 0.0
      %2071 = vmatpush1.msra.mxu0 0.0
      %2072 = vmatprep.subr.mxu0 0.0
      %2073 = vmatpush1.msra.mxu0 0.0
      %2074 = vmatprep.subr.mxu0 0.0
      %2075 = vmatpush1.msra.mxu0 0.0
      %2076 = vmatprep.subr.mxu0 0.0
      %2077 = vmatpush1.msra.mxu0 0.0
      %2078 = vmatprep.subr.mxu0 0.0
      %2079 = vmatpush1.msra.mxu0 0.0
      %2080 = vmatprep.subr.mxu0 0.0
      %2081 = vmatpush1.msra.mxu0 0.0
      %2082 = vmatprep.subr.mxu0 0.0
      %2083 = vmatpush1.msra.mxu0 0.0
      %2084 = vmatprep.subr.mxu0 0.0
      %2085 = vmatpush1.msra.mxu0 0.0
      %2086 = vmatprep.subr.mxu0 0.0
      %2087 = vmatpush1.msra.mxu0 0.0
      %2088 = vmatprep.subr.mxu0 0.0
      %2089 = vmatpush1.msra.mxu0 0.0
      %2090 = vmatprep.subr.mxu0 0.0
      %2091 = vmatpush1.msra.mxu0 0.0
      %2092 = vmatprep.subr.mxu0 0.0
      %2093 = vmatpush1.msra.mxu0 0.0
      %2094 = vmatprep.subr.mxu0 0.0
      %2095 = vmatpush1.msra.mxu0 0.0
      %2096 = vmatprep.subr.mxu0 0.0
      %2097 = vmatpush1.msra.mxu0 0.0
      %2098 = vmatprep.subr.mxu0 0.0
      %2099 = vmatpush1.msra.mxu0 0.0
      %2100 = vmatprep.subr.mxu0 0.0
      %2101 = vmatpush1.msra.mxu0 0.0
      %2102 = vmatprep.subr.mxu0 0.0
      %2103 = vmatpush1.msra.mxu0 0.0
      %2104 = vmatprep.mubr.f32.mxu0 0.0
      %2105 = vmatmul.mubr.f32.gmra.mrb[0].mxu0 %v2038
      %v2106 = vpop.f32.mrb[0].mxu0
      %v2107 = vadd.f32 %v2030, %v2106
      %v2108 = vpop.f32.mrb[0].mxu0
      %v2109 = vadd.f32 %v2034, %v2108
      %2110 = vdwg.mxu0
      %v2111 = vmul.f32 %v2107, 0.5
      %v2112 = vmul.f32 %v2109, 0.5
      %v2113 = vmul.f32 %v2107, 0.70710677
      %v2114 = vmul.f32 %v2109, 0.70710677
      %vm2115 = vcmp.ge.f32.partialorder %v2113, 0.0
      %vm2116 = vcmp.ge.f32.partialorder %v2114, 0.0
      %v2117 = vsel %vm2115, 1.0, -1.0
      %v2118 = vsel %vm2116, 1.0, -1.0
      %v2119 = vmul.f32 %v2113, %v2117
      %v2120 = vmul.f32 %v2114, %v2118
      %v2121 = vmul.f32 %v2119, 0.3275911
      %v2122 = vmul.f32 %v2120, 0.3275911
      %v2123 = vadd.f32 %v2121, 1.0
      %v2124 = vadd.f32 %v2122, 1.0
      %v2125 = vrcp.pop %v2123
      %v2126 = vmul.f32 1.0, %v2125
      %v2127 = vrcp.pop %v2124
      %v2128 = vmul.f32 1.0, %v2127
      %v2129 = vmul.f32 %v2126, 1.0614054
      %v2130 = vmul.f32 %v2128, 1.0614054
      %v2131 = vadd.f32 %v2129, -1.4531521
      %v2132 = vadd.f32 %v2130, -1.4531521
      %v2133 = vmul.f32 %v2126, %v2131
      %v2134 = vmul.f32 %v2128, %v2132
      %v2135 = vadd.f32 %v2133, 1.4214138
      %v2136 = vadd.f32 %v2134, 1.4214138
      %v2137 = vmul.f32 %v2126, %v2135
      %v2138 = vmul.f32 %v2128, %v2136
      %v2139 = vadd.f32 %v2137, -0.28449672
      %v2140 = vadd.f32 %v2138, -0.28449672
      %v2141 = vmul.f32 %v2126, %v2139
      %v2142 = vmul.f32 %v2128, %v2140
      %v2143 = vadd.f32 %v2141, 0.2548296
      %v2144 = vadd.f32 %v2142, 0.2548296
      %v2145 = vmul.f32 %v2126, %v2143
      %v2146 = vmul.f32 %v2128, %v2144
      %v2147 = vsub.f32 0.0, %v2119
      %v2148 = vsub.f32 0.0, %v2120
      %v2149 = vmul.f32 %v2147, %v2119
      %v2150 = vmul.f32 %v2148, %v2120
      %v2151 = vmul.f32 %v2149, 1.442695
      %v2152 = vpow.pop %v2151
      %v2153 = vmul.f32 %v2150, 1.442695
      %v2154 = vpow.pop %v2153
      %v2155 = vmul.f32 %v2145, %v2152
      %v2156 = vmul.f32 %v2146, %v2154
      %v2157 = vsub.f32 1.0, %v2155
      %v2158 = vsub.f32 1.0, %v2156
      %v2159 = vmul.f32 %v2117, %v2157
      %v2160 = vmul.f32 %v2118, %v2158
      %v2161 = vadd.f32 %v2159, 1.0
      %v2162 = vadd.f32 %v2160, 1.0
      %v2163 = vmul.f32 %v2111, %v2161
      %v2164 = vmul.f32 %v2112, %v2162
      %s2165 = smul.u32 %s45, 192
      %s2166 = scalar_lea.vmem %s24, %s2165
      %v2167 = vld [vmem:[%s2166] sm:$0xff]
      %v2168 = vld [vmem:[%s2166 + $0x8] sm:$0xff]
      %v2169 = vld [vmem:[%s2166 + $0x10] sm:$0xff]
      %v2170 = vld [vmem:[%s2166 + $0x18] sm:$0xff]
      %v2171 = vld [vmem:[%s2166 + $0x20] sm:$0xff]
      %v2172 = vld [vmem:[%s2166 + $0x28] sm:$0xff]
      %v2173 = vld [vmem:[%s2166 + $0x30] sm:$0xff]
      %v2174 = vld [vmem:[%s2166 + $0x38] sm:$0xff]
      %v2175 = vld [vmem:[%s2166 + $0x40] sm:$0xff]
      %v2176 = vld [vmem:[%s2166 + $0x48] sm:$0xff]
      %v2177 = vld [vmem:[%s2166 + $0x50] sm:$0xff]
      %v2178 = vld [vmem:[%s2166 + $0x58] sm:$0xff]
      %v2179 = vld [vmem:[%s2166 + $0x60] sm:$0xff]
      %v2180 = vld [vmem:[%s2166 + $0x68] sm:$0xff]
      %v2181 = vld [vmem:[%s2166 + $0x70] sm:$0xff]
      %v2182 = vld [vmem:[%s2166 + $0x78] sm:$0xff]
      %v2183 = vld [vmem:[%s2166 + $0x80] sm:$0xff]
      %v2184 = vld [vmem:[%s2166 + $0x88] sm:$0xff]
      %v2185 = vld [vmem:[%s2166 + $0x90] sm:$0xff]
      %v2186 = vld [vmem:[%s2166 + $0x98] sm:$0xff]
      %v2187 = vld [vmem:[%s2166 + $0xa0] sm:$0xff]
      %v2188 = vld [vmem:[%s2166 + $0xa8] sm:$0xff]
      %v2189 = vld [vmem:[%s2166 + $0xb0] sm:$0xff]
      %v2190 = vld [vmem:[%s2166 + $0xb8] sm:$0xff]
      %s2191 = scalar_lea.vmem %s25, %s45
      %v2192 = vld [vmem:[%s2191] sm:$0x1]
      %v2194 = vlaneseq
      %v2195 = vshrl.u32 %v2194, 7
      %v2196 = vsub.s32 0, %v2195
      %v2197 = vrot.slane %v2192, %v2196
      %vm2199 = vcmask 523264
      %v2201 = vsel %vm2199, %v2164, 0
      %2203 = vmatprep.subr.mxu0 0.0
      %2204 = vmatpush1.msra.mxu0 %v2167
      %2205 = vmatprep.subr.mxu0 0.0
      %2206 = vmatpush1.msra.mxu0 %v2168
      %2207 = vmatprep.subr.mxu0 0.0
      %2208 = vmatpush1.msra.mxu0 %v2169
      %2209 = vmatprep.subr.mxu0 0.0
      %2210 = vmatpush1.msra.mxu0 %v2170
      %2211 = vmatprep.subr.mxu0 0.0
      %2212 = vmatpush1.msra.mxu0 %v2171
      %2213 = vmatprep.subr.mxu0 0.0
      %2214 = vmatpush1.msra.mxu0 %v2172
      %2215 = vmatprep.subr.mxu0 0.0
      %2216 = vmatpush1.msra.mxu0 %v2173
      %2217 = vmatprep.subr.mxu0 0.0
      %2218 = vmatpush1.msra.mxu0 %v2174
      %2219 = vmatprep.subr.mxu0 0.0
      %2220 = vmatpush1.msra.mxu0 %v2175
      %2221 = vmatprep.subr.mxu0 0.0
      %2222 = vmatpush1.msra.mxu0 %v2176
      %2223 = vmatprep.subr.mxu0 0.0
      %2224 = vmatpush1.msra.mxu0 %v2177
      %2225 = vmatprep.subr.mxu0 0.0
      %2226 = vmatpush1.msra.mxu0 %v2178
      %2227 = vmatprep.subr.mxu0 0.0
      %2228 = vmatpush1.msra.mxu0 %v2179
      %2229 = vmatprep.subr.mxu0 0.0
      %2230 = vmatpush1.msra.mxu0 %v2180
      %2231 = vmatprep.subr.mxu0 0.0
      %2232 = vmatpush1.msra.mxu0 %v2181
      %2233 = vmatprep.subr.mxu0 0.0
      %2234 = vmatpush1.msra.mxu0 %v2182
      %2235 = vmatprep.subr.mxu0 0.0
      %2236 = vmatpush1.msra.mxu0 %v2183
      %2237 = vmatprep.subr.mxu0 0.0
      %2238 = vmatpush1.msra.mxu0 %v2184
      %2239 = vmatprep.subr.mxu0 0.0
      %2240 = vmatpush1.msra.mxu0 %v2185
      %2241 = vmatprep.subr.mxu0 0.0
      %2242 = vmatpush1.msra.mxu0 %v2186
      %2243 = vmatprep.subr.mxu0 0.0
      %2244 = vmatpush1.msra.mxu0 %v2187
      %2245 = vmatprep.subr.mxu0 0.0
      %2246 = vmatpush1.msra.mxu0 %v2188
      %2247 = vmatprep.subr.mxu0 0.0
      %2248 = vmatpush1.msra.mxu0 %v2189
      %2249 = vmatprep.subr.mxu0 0.0
      %2250 = vmatpush1.msra.mxu0 %v2190
      %2251 = vmatprep.subr.mxu0 0.0
      %2252 = vmatpush1.msra.mxu0 0.0
      %2253 = vmatprep.subr.mxu0 0.0
      %2254 = vmatpush1.msra.mxu0 0.0
      %2255 = vmatprep.subr.mxu0 0.0
      %2256 = vmatpush1.msra.mxu0 0.0
      %2257 = vmatprep.subr.mxu0 0.0
      %2258 = vmatpush1.msra.mxu0 0.0
      %2259 = vmatprep.subr.mxu0 0.0
      %2260 = vmatpush1.msra.mxu0 0.0
      %2261 = vmatprep.subr.mxu0 0.0
      %2262 = vmatpush1.msra.mxu0 0.0
      %2263 = vmatprep.subr.mxu0 0.0
      %2264 = vmatpush1.msra.mxu0 0.0
      %2265 = vmatprep.subr.mxu0 0.0
      %2266 = vmatpush1.msra.mxu0 0.0
      %2267 = vmatprep.mubr.f32.mxu0 %v2201
      %2268 = vmatmul.mubr.f32.gmra.mrb[0].mxu0 %v2163
      %v2269 = vpop.f32.mrb[0].mxu0
      %v2270 = vadd.f32 %v2197, %v2269
      %v2271 = vpop.f32.mrb[0].mxu0
      %2272 = vdwg.mxu0
      %v2273 = vadd.f32 %v1976, %v2270
      %2274 = vst.msk [vmem:[#allocation2] sm:$0x1f] %vm1054, %v2273
      %2275 = vst.msk [vmem:[%s888] sm:$0x1f] %vm1054, %v2273
      %p2276 = scmp.lt.s32.totalorder %s44, 1
      %s2277 = scalar_select %p2276, %s44, 1
      %s2278 = smul.addr %s2277, 8
      %s2279 = scalar_lea.vmem %s26, %s2278
      %p2280 = scmp.lt.s32.totalorder %s45, 1
      %s2281 = scalar_select %p2280, %s45, 1
      %p2282 = scmp.lt.s32.totalorder %s44, 1
      %s2283 = scalar_select %p2282, %s44, 1
      %s2284 = smul.addr %s2281, 2
      %s2285 = sadd.s32 %s2283, %s2284
      %s2286 = smul.addr %s2285, 8
      %s2287 = scalar_lea.vmem %s27, %s2286
      %p2288 = scmp.lt.s32.totalorder %s45, 1
      %s2289 = scalar_select %p2288, %s45, 1
      %p2290 = scmp.lt.s32.totalorder %s44, 1
      %s2291 = scalar_select %p2290, %s44, 1
      %s2292 = smul.addr %s2289, 2
      %s2293 = sadd.s32 %s2291, %s2292
      %s2294 = smul.addr %s2293, 8
      %s2295 = scalar_lea.vmem %s28, %s2294
      // Predicated region
      $region129: #{vision_tower_forward.1} parent=123 // pred_check
        %p2296 = pneg %p621
      $region130: #{vision_tower_forward.1} parent=123 // pred_check_branch
        %2298 = sbr.rel (%p2296) target = $region132
      $region131: #{vision_tower_forward.1} parent=123 // pred_region
        _
      $region132: #{vision_tower_forward.1} parent=123 // pred_fallthru
        _
      // Predicated region
      $region133: #{vision_tower_forward.1} parent=123 // pred_check
        %p2299 = pneg %p649
      $region134: #{vision_tower_forward.1} parent=123 // pred_check_branch
        %2301 = sbr.rel (%p2299) target = $region136
      $region135: #{vision_tower_forward.1} parent=123 // pred_region
        _
      $region136: #{vision_tower_forward.1} parent=123 // pred_fallthru
        _
      // Predicated region
      $region137: #{vision_tower_forward.1} parent=123 // pred_check
        %p2302 = pneg %p677
      $region138: #{vision_tower_forward.1} parent=123 // pred_check_branch
        %2304 = sbr.rel (%p2302) target = $region140
      $region139: #{vision_tower_forward.1} parent=123 // pred_region
        _
      $region140: #{vision_tower_forward.1} parent=123 // pred_fallthru
        _
    $region124: #{vision_tower_forward.1} parent=5 // pred_fallthru
      _
    %p2305 = scmp.le.s32.totalorder 2, %s35
    // Predicated region
    $region141: #{vision_tower_forward.1} parent=5 // pred_check
      %p2306 = pneg %p2305
    $region142: #{vision_tower_forward.1} parent=5 // pred_check_branch
      %2308 = sbr.rel (%p2306) target = $region144
    $region143: #{vision_tower_forward.1} parent=5 // pred_region
      %s2309 = ssub.s32 %s35, 2
      // Predicated region
      $region145: #{vision_tower_forward.1} parent=143 // pred_check
        %p2310 = pneg %p627
      $region146: #{vision_tower_forward.1} parent=143 // pred_check_branch
        %2312 = sbr.rel (%p2310) target = $region148
      $region147: #{vision_tower_forward.1} parent=143 // pred_region
        %p2313 = scmp.lt.s32.totalorder %s46, 1
        %s2314 = scalar_select %p2313, %s46, 1
        %s2315 = smul.addr %s2314, 8
        %s2316 = scalar_lea.vmem %s26, %s2315
      $region148: #{vision_tower_forward.1} parent=143 // pred_fallthru
        _
      // Predicated region
      $region149: #{vision_tower_forward.1} parent=143 // pred_check
        %p2317 = pneg %p655
      $region150: #{vision_tower_forward.1} parent=143 // pred_check_branch
        %2319 = sbr.rel (%p2317) target = $region152
      $region151: #{vision_tower_forward.1} parent=143 // pred_region
        %p2320 = scmp.lt.s32.totalorder %s47, 1
        %s2321 = scalar_select %p2320, %s47, 1
        %p2322 = scmp.lt.s32.totalorder %s46, 1
        %s2323 = scalar_select %p2322, %s46, 1
        %s2324 = smul.addr %s2321, 2
        %s2325 = sadd.s32 %s2323, %s2324
        %s2326 = smul.addr %s2325, 8
        %s2327 = scalar_lea.vmem %s27, %s2326
      $region152: #{vision_tower_forward.1} parent=143 // pred_fallthru
        _
      // Predicated region
      $region153: #{vision_tower_forward.1} parent=143 // pred_check
        %p2328 = pneg %p683
      $region154: #{vision_tower_forward.1} parent=143 // pred_check_branch
        %2330 = sbr.rel (%p2328) target = $region156
      $region155: #{vision_tower_forward.1} parent=143 // pred_region
        %p2331 = scmp.lt.s32.totalorder %s47, 1
        %s2332 = scalar_select %p2331, %s47, 1
        %p2333 = scmp.lt.s32.totalorder %s46, 1
        %s2334 = scalar_select %p2333, %s46, 1
        %s2335 = smul.addr %s2332, 2
        %s2336 = sadd.s32 %s2334, %s2335
        %s2337 = smul.addr %s2336, 8
        %s2338 = scalar_lea.vmem %s28, %s2337
      $region156: #{vision_tower_forward.1} parent=143 // pred_fallthru
        _
    $region144: #{vision_tower_forward.1} parent=5 // pred_fallthru
      _
  $region6: #{vision_tower_forward.1} parent=0 // loop_footer
    %s39 = sadd.s32 1, %s35
  $region7: #{vision_tower_forward.1} parent=0 // loop_footer_branch
    %34 = sbr.rel target = $region3
  $region8: #{vision_tower_forward.1} parent=0 // loop_exit
    _

</llo_original>
